<compile_context>
chip_gen: v7x
topology: tpu7x:2x2x1
jax: 0.10.0
libtpu: 0.0.40
codegen_flags: <defaults>
</compile_context>

<pallas_src>
import functools

import jax
import jax.numpy as jnp
from jax.experimental import pallas as pl
from jax.experimental.pallas import tpu as pltpu


# Tile sizes (small enough for 2x buffering well inside v7x's 64 MiB VMEM,
# 128/256-aligned for the v5e/v6e/v7x MXU).
_TM = 256   # node row tile
_TK = 256   # reduction tile over nodes (adjacency K axis)
_TN = 128   # feature (lane) tile


def _round_up(x, m):
    return ((x + m - 1) // m) * m


# ---------------------------------------------------------------------------
# Kernel 1: tiled propagation matmul   out = A_hat @ B + bias
# ---------------------------------------------------------------------------

def _propagate_kernel(a_ref, b_ref, bias_ref, o_ref, acc_ref):
    @pl.when(pl.program_id(2) == 0)
    def _():
        acc_ref[...] = jnp.zeros_like(acc_ref)

    acc_ref[...] += jnp.dot(a_ref[...], b_ref[...],
                            preferred_element_type=jnp.float32)

    @pl.when(pl.program_id(2) == pl.num_programs(2) - 1)
    def _():
        o_ref[...] = (acc_ref[...] + bias_ref[...]).astype(o_ref.dtype)


def propagate(adj, b, bias, out_dtype):
    """out = adj @ b + bias.  adj:(M,K) bf16, b:(K,F) bf16, bias:(1,F) f32."""
    m, k = adj.shape
    k2, f = b.shape
    assert k == k2 and m % _TM == 0 and k % _TK == 0 and f % _TN == 0
    grid = (m // _TM, f // _TN, k // _TK)
    return pl.pallas_call(
        _propagate_kernel,
        out_shape=jax.ShapeDtypeStruct((m, f), out_dtype),
        grid=grid,
        in_specs=[
            pl.BlockSpec((_TM, _TK), lambda i, j, kk: (i, kk)),
            pl.BlockSpec((_TK, _TN), lambda i, j, kk: (kk, j)),
            pl.BlockSpec((1, _TN), lambda i, j, kk: (0, j)),
        ],
        out_specs=pl.BlockSpec((_TM, _TN), lambda i, j, kk: (i, j)),
        scratch_shapes=[pltpu.VMEM((_TM, _TN), jnp.float32)],
        compiler_params=pltpu.CompilerParams(
            dimension_semantics=("parallel", "parallel", "arbitrary")),
    )(adj, b, bias)


# ---------------------------------------------------------------------------
# Kernel 2: layer-1 feature transform + bias, fused with BN moment reduction
#           Z1 = H1 @ W1 + b1 ; also accumulate sum(Z1), sum(Z1^2) over nodes
# ---------------------------------------------------------------------------

def _xw_bias_stats_kernel(h_ref, w_ref, b_ref, z_ref, sum_ref, ssq_ref,
                          *, n_valid, tm):
    i = pl.program_id(0)
    z = jnp.dot(h_ref[...], w_ref[...], preferred_element_type=jnp.float32)
    z = z + b_ref[...]
    z_ref[...] = z

    # Mask out padded rows so BatchNorm statistics only see the real N nodes.
    row = i * tm + jax.lax.broadcasted_iota(jnp.int32, z.shape, 0)
    mask = (row < n_valid).astype(jnp.float32)
    zm = z * mask

    @pl.when(i == 0)
    def _():
        sum_ref[...] = jnp.zeros_like(sum_ref)
        ssq_ref[...] = jnp.zeros_like(ssq_ref)

    sum_ref[...] += jnp.sum(zm, axis=0, keepdims=True)
    ssq_ref[...] += jnp.sum(zm * zm, axis=0, keepdims=True)


def xw_bias_stats(h, w, bias, n_valid):
    np_, fp = h.shape
    h2p = w.shape[1]
    assert np_ % _TM == 0
    kernel = functools.partial(_xw_bias_stats_kernel, n_valid=n_valid, tm=_TM)
    return pl.pallas_call(
        kernel,
        out_shape=(
            jax.ShapeDtypeStruct((np_, h2p), jnp.float32),
            jax.ShapeDtypeStruct((1, h2p), jnp.float32),
            jax.ShapeDtypeStruct((1, h2p), jnp.float32),
        ),
        grid=(np_ // _TM,),
        in_specs=[
            pl.BlockSpec((_TM, fp), lambda i: (i, 0)),
            pl.BlockSpec((fp, h2p), lambda i: (0, 0)),
            pl.BlockSpec((1, h2p), lambda i: (0, 0)),
        ],
        out_specs=(
            pl.BlockSpec((_TM, h2p), lambda i: (i, 0)),
            pl.BlockSpec((1, h2p), lambda i: (0, 0)),
            pl.BlockSpec((1, h2p), lambda i: (0, 0)),
        ),
        compiler_params=pltpu.CompilerParams(
            dimension_semantics=("arbitrary",)),
    )(h, w, bias)


# ---------------------------------------------------------------------------
# Kernel 3: BN normalise + PReLU fused with the layer-2 feature transform
#           P2 = PReLU(BN(Z1)) @ W2
# ---------------------------------------------------------------------------

def _bn_prelu_xw_kernel(z_ref, mean_ref, rstd_ref, gamma_ref, beta_ref,
                        alpha_ref, w_ref, o_ref):
    z = z_ref[...]
    y = (z - mean_ref[...]) * rstd_ref[...] * gamma_ref[...] + beta_ref[...]
    a = alpha_ref[0]                         # scalar PReLU weight (SMEM)
    y = jnp.where(y > 0, y, a * y)
    o_ref[...] = jnp.dot(y.astype(jnp.bfloat16), w_ref[...],
                         preferred_element_type=jnp.float32).astype(o_ref.dtype)


def bn_prelu_xw(z, mean, rstd, gamma, beta, alpha, w2):
    np_, h2p = z.shape
    hp = w2.shape[1]
    assert np_ % _TM == 0
    return pl.pallas_call(
        _bn_prelu_xw_kernel,
        out_shape=jax.ShapeDtypeStruct((np_, hp), jnp.bfloat16),
        grid=(np_ // _TM,),
        in_specs=[
            pl.BlockSpec((_TM, h2p), lambda i: (i, 0)),
            pl.BlockSpec((1, h2p), lambda i: (0, 0)),
            pl.BlockSpec((1, h2p), lambda i: (0, 0)),
            pl.BlockSpec((1, h2p), lambda i: (0, 0)),
            pl.BlockSpec((1, h2p), lambda i: (0, 0)),
            pl.BlockSpec(memory_space=pltpu.MemorySpace.SMEM),   # alpha scalar
            pl.BlockSpec((h2p, hp), lambda i: (0, 0)),
        ],
        out_specs=pl.BlockSpec((_TM, hp), lambda i: (i, 0)),
        compiler_params=pltpu.CompilerParams(
            dimension_semantics=("parallel",)),
    )(z, mean, rstd, gamma, beta, alpha, w2)


# ---------------------------------------------------------------------------
# Forward composition (jit-compiled glue; all hot paths are the kernels above)
# ---------------------------------------------------------------------------

@functools.partial(jax.jit, static_argnames=("n_valid",))
def _gconv_forward(adj, x, w1, b1, gamma, beta, alpha, w2, b2, *, n_valid):
    zero_bias = jnp.zeros((1, x.shape[1]), jnp.float32)
    # Layer 1 propagation with the NARROW feature dim:  H1 = A_hat @ X
    h1 = propagate(adj, x, zero_bias, jnp.bfloat16)
    # Layer 1 feature transform + bias, fused with BN moment accumulation.
    z1, s, ss = xw_bias_stats(h1, w1, b1, n_valid)
    mean = s / n_valid
    var = jnp.maximum(ss / n_valid - mean * mean, 0.0)   # biased var (PyTorch fwd)
    rstd = jax.lax.rsqrt(var + 1e-5)
    # BN + PReLU fused with the layer-2 feature transform.
    p2 = bn_prelu_xw(z1, mean, rstd, gamma, beta, alpha, w2)
    # Layer 2 propagation + bias:  out = A_hat @ P2 + b2
    return propagate(adj, p2, b2, jnp.float32)


# ---------------------------------------------------------------------------
# Plain-JAX glue: graph normalization + parameter init
# ---------------------------------------------------------------------------

def normalized_adjacency(edge_index, edge_weight, num_nodes, num_nodes_padded):
    """Dense D^-1/2 (A + I) D^-1/2 (torch_geometric GCNConv defaults), bf16."""
    row, col = edge_index[0], edge_index[1]
    if edge_weight is None:
        edge_weight = jnp.ones(row.shape[0], dtype=jnp.float32)
    adj = jnp.zeros((num_nodes, num_nodes), dtype=jnp.float32)
    adj = adj.at[row, col].add(edge_weight)
    adj = adj + jnp.eye(num_nodes, dtype=jnp.float32)       # self loops (fill=1)
    deg = jnp.sum(adj, axis=1)
    dinv = jnp.where(deg > 0, jax.lax.rsqrt(deg), 0.0)
    adj = dinv[:, None] * adj * dinv[None, :]
    pad = num_nodes_padded - num_nodes
    adj = jnp.pad(adj, ((0, pad), (0, pad)))
    return adj.astype(jnp.bfloat16)          # bf16 A_hat halves HBM traffic


def glorot(key, shape):
    fan_in, fan_out = shape
    limit = jnp.sqrt(6.0 / (fan_in + fan_out))
    return jax.random.uniform(key, shape, jnp.float32, -limit, limit)


class GConvPallas:
    """Mirror of the PyTorch GConv module (fresh init, training-mode forward)."""

    def __init__(self, input_dim, hidden_dim, key):
        k1, k2 = jax.random.split(key)
        h2 = 2 * hidden_dim
        self.input_dim, self.hidden_dim = input_dim, hidden_dim
        # Lane-dense padding of all feature dims to multiples of 128.
        self.fp = _round_up(input_dim, _TN)
        self.h2p = _round_up(h2, _TN)
        self.hp = _round_up(hidden_dim, _TN)

        w1 = glorot(k1, (input_dim, h2))                    # GCNConv glorot init
        w2 = glorot(k2, (h2, hidden_dim))
        # Zero-padded rows/cols contribute zeros, so valid-block numerics match.
        self.w1 = jnp.zeros((self.fp, self.h2p), jnp.bfloat16).at[
            :input_dim, :h2].set(w1.astype(jnp.bfloat16))
        self.w2 = jnp.zeros((self.h2p, self.hp), jnp.bfloat16).at[
            :h2, :hidden_dim].set(w2.astype(jnp.bfloat16))
        self.b1 = jnp.zeros((1, self.h2p), jnp.float32)     # GCNConv bias zeros
        self.b2 = jnp.zeros((1, self.hp), jnp.float32)
        self.gamma = jnp.ones((1, self.h2p), jnp.float32)   # BatchNorm1d weight
        self.beta = jnp.zeros((1, self.h2p), jnp.float32)   # BatchNorm1d bias
        self.alpha = jnp.full((1,), 0.25, jnp.float32)      # PReLU default
        # TODO(synk): BatchNorm running-stat updates (momentum=0.01) are a
        # training-time side effect not produced by this forward-only kernel.

    def __call__(self, x, edge_index, edge_weight=None):
        n = x.shape[0]
        n_pad = _round_up(n, _TM)
        adj = normalized_adjacency(edge_index, edge_weight, n, n_pad)
        x_pad = jnp.zeros((n_pad, self.fp), jnp.bfloat16)
        x_pad = x_pad.at[:n, :self.input_dim].set(x.astype(jnp.bfloat16))
        out = _gconv_forward(adj, x_pad, self.w1, self.b1, self.gamma,
                             self.beta, self.alpha, self.w2, self.b2,
                             n_valid=n)
        return out[:n, :self.hidden_dim]


# ---------------------------------------------------------------------------
# Demo
# ---------------------------------------------------------------------------

if __name__ == "__main__":
    key = jax.random.PRNGKey(0)
    k_x, k_params = jax.random.split(key)

    num_nodes = 512          # multiple grid steps on every axis
    input_dim = 16
    hidden_dim = 32

    x = jax.random.normal(k_x, (num_nodes, input_dim), jnp.float32)

    # Deterministic ring graph (bidirectional edges).
    src = jnp.arange(num_nodes, dtype=jnp.int32)
    dst = (src + 1) % num_nodes
    edge_index = jnp.stack(
        [jnp.concatenate([src, dst]), jnp.concatenate([dst, src])], axis=0
    )

    model = GConvPallas(input_dim, hidden_dim, k_params)
    out = model(x, edge_index)
    out = jax.block_until_ready(out)

    assert out.shape == (num_nodes, hidden_dim)
    assert bool(jnp.all(jnp.isfinite(out)))
    print("KERNEL_OK")
</pallas_src>

<mosaic_0001>
module attributes {stable_mosaic.version = 11 : i64} {
  func.func @_propagate_kernel(%arg0: i32, %arg1: i32, %arg2: i32, %arg3: memref<256x256xbf16, #tpu.memory_space<vmem>>, %arg4: memref<256x128xbf16, #tpu.memory_space<vmem>>, %arg5: memref<1x128xf32, #tpu.memory_space<vmem>>, %arg6: memref<256x128xbf16, #tpu.memory_space<vmem>>, %arg7: memref<256x128xf32, #tpu.memory_space<vmem>>) attributes {dimension_semantics = [#tpu.dimension_semantics<parallel>, #tpu.dimension_semantics<parallel>, #tpu.dimension_semantics<arbitrary>], iteration_bounds = array<i64: 2, 1, 2>, scalar_prefetch = 0 : i64, scratch_operands = 1 : i64, tpu.core_type = #tpu.core_type<tc>, window_params = [{transform_indices = @transform_0, window_bounds = array<i64: 256, 256>}, {transform_indices = @transform_1, window_bounds = array<i64: 256, 128>}, {transform_indices = @transform_2, window_bounds = array<i64: 1, 128>}, {transform_indices = @transform_3, window_bounds = array<i64: 256, 128>}]} {
    %c0_i32 = arith.constant 0 : i32
    %0 = arith.cmpi eq, %arg2, %c0_i32 : i32
    %1 = arith.extui %0 : i1 to i32
    %c0_i32_0 = arith.constant 0 : i32
    %2 = arith.cmpi ne, %1, %c0_i32_0 : i32
    scf.if %2 {
      %cst_9 = arith.constant 0.000000e+00 : f32
      %12 = vector.broadcast %cst_9 : f32 to vector<256x128xf32>
      %c0_10 = arith.constant 0 : index
      %c0_11 = arith.constant 0 : index
      %13 = vector.load %arg7[%c0_10, %c0_11] : memref<256x128xf32, #tpu.memory_space<vmem>>, vector<256x128xf32>
      tpu.vector_store %arg7[%c0_10, %c0_11], %12 {strides = array<i32>} : memref<256x128xf32, #tpu.memory_space<vmem>>, vector<256x128xf32>,
    } else {
    }
    %c0 = arith.constant 0 : index
    %c0_1 = arith.constant 0 : index
    %3 = vector.load %arg7[%c0, %c0_1] : memref<256x128xf32, #tpu.memory_space<vmem>>, vector<256x128xf32>
    %c0_2 = arith.constant 0 : index
    %c0_3 = arith.constant 0 : index
    %4 = vector.load %arg3[%c0_2, %c0_3] : memref<256x256xbf16, #tpu.memory_space<vmem>>, vector<256x256xbf16>
    %c0_4 = arith.constant 0 : index
    %c0_5 = arith.constant 0 : index
    %5 = vector.load %arg4[%c0_4, %c0_5] : memref<256x128xbf16, #tpu.memory_space<vmem>>, vector<256x128xbf16>
    %cst = arith.constant dense<0.000000e+00> : vector<256x128xf32>
    %6 = tpu.matmul %4, %5, %cst {dimension_numbers = #tpu.dot_dimension_numbers<[1], [0], [0], [1], [0, 0, 1, 1], [], []>} : vector<256x256xbf16>, vector<256x128xbf16>, vector<256x128xf32> -> vector<256x128xf32>
    %7 = arith.addf %3, %6 : vector<256x128xf32>
    %c0_6 = arith.constant 0 : index
    %c0_7 = arith.constant 0 : index
    %8 = vector.load %arg7[%c0_6, %c0_7] : memref<256x128xf32, #tpu.memory_space<vmem>>, vector<256x128xf32>
    tpu.vector_store %arg7[%c0_6, %c0_7], %7 {strides = array<i32>} : memref<256x128xf32, #tpu.memory_space<vmem>>, vector<256x128xf32>,
    %c1_i32 = arith.constant 1 : i32
    %9 = arith.cmpi eq, %arg2, %c1_i32 : i32
    %10 = arith.extui %9 : i1 to i32
    %c0_i32_8 = arith.constant 0 : i32
    %11 = arith.cmpi ne, %10, %c0_i32_8 : i32
    scf.if %11 {
      %c0_9 = arith.constant 0 : index
      %c0_10 = arith.constant 0 : index
      %12 = vector.load %arg7[%c0_9, %c0_10] : memref<256x128xf32, #tpu.memory_space<vmem>>, vector<256x128xf32>
      %c0_11 = arith.constant 0 : index
      %c0_12 = arith.constant 0 : index
      %13 = vector.load %arg5[%c0_11, %c0_12] : memref<1x128xf32, #tpu.memory_space<vmem>>, vector<1x128xf32>
      %14 = vector.broadcast %13 : vector<1x128xf32> to vector<256x128xf32>
      %15 = arith.addf %12, %14 : vector<256x128xf32>
      %16 = arith.truncf %15 : vector<256x128xf32> to vector<256x128xbf16>
      %c0_13 = arith.constant 0 : index
      %c0_14 = arith.constant 0 : index
      %17 = vector.load %arg6[%c0_13, %c0_14] : memref<256x128xbf16, #tpu.memory_space<vmem>>, vector<256x128xbf16>
      tpu.vector_store %arg6[%c0_13, %c0_14], %16 {strides = array<i32>} : memref<256x128xbf16, #tpu.memory_space<vmem>>, vector<256x128xbf16>,
    } else {
    }
    return
  }
  func.func @transform_0(%arg0: i32, %arg1: i32, %arg2: i32) -> (i32, i32) {
    %c0_i32 = arith.constant 0 : i32
    return %arg0, %arg2 : i32, i32
  }
  func.func @transform_1(%arg0: i32, %arg1: i32, %arg2: i32) -> (i32, i32) {
    %c0_i32 = arith.constant 0 : i32
    return %arg2, %arg1 : i32, i32
  }
  func.func @transform_2(%arg0: i32, %arg1: i32, %arg2: i32) -> (i32, i32) {
    %c0_i32 = arith.constant 0 : i32
    %c0_i32_0 = arith.constant 0 : i32
    return %c0_i32, %arg1 : i32, i32
  }
  func.func @transform_3(%arg0: i32, %arg1: i32, %arg2: i32) -> (i32, i32) {
    %c0_i32 = arith.constant 0 : i32
    return %arg0, %arg1 : i32, i32
  }
}

module attributes {stable_mosaic.version = 11 : i64} {
  func.func @_xw_bias_stats_kernel(%arg0: i32, %arg1: memref<256x128xbf16, #tpu.memory_space<vmem>>, %arg2: memref<128x128xbf16, #tpu.memory_space<vmem>>, %arg3: memref<1x128xf32, #tpu.memory_space<vmem>>, %arg4: memref<256x128xf32, #tpu.memory_space<vmem>>, %arg5: memref<1x128xf32, #tpu.memory_space<vmem>>, %arg6: memref<1x128xf32, #tpu.memory_space<vmem>>) attributes {dimension_semantics = [#tpu.dimension_semantics<arbitrary>], iteration_bounds = array<i64: 2>, scalar_prefetch = 0 : i64, scratch_operands = 0 : i64, tpu.core_type = #tpu.core_type<tc>, window_params = [{transform_indices = @transform_0, window_bounds = array<i64: 256, 128>}, {pipeline_mode = #tpu.pipeline_mode<synchronous>, transform_indices = @transform_1, window_bounds = array<i64: 128, 128>}, {pipeline_mode = #tpu.pipeline_mode<synchronous>, transform_indices = @transform_2, window_bounds = array<i64: 1, 128>}, {transform_indices = @transform_3, window_bounds = array<i64: 256, 128>}, {pipeline_mode = #tpu.pipeline_mode<synchronous>, transform_indices = @transform_4, window_bounds = array<i64: 1, 128>}, {pipeline_mode = #tpu.pipeline_mode<synchronous>, transform_indices = @transform_5, window_bounds = array<i64: 1, 128>}]} {
    %c0 = arith.constant 0 : index
    %c0_0 = arith.constant 0 : index
    %0 = vector.load %arg1[%c0, %c0_0] : memref<256x128xbf16, #tpu.memory_space<vmem>>, vector<256x128xbf16>
    %c0_1 = arith.constant 0 : index
    %c0_2 = arith.constant 0 : index
    %1 = vector.load %arg2[%c0_1, %c0_2] : memref<128x128xbf16, #tpu.memory_space<vmem>>, vector<128x128xbf16>
    %cst = arith.constant dense<0.000000e+00> : vector<256x128xf32>
    %2 = tpu.matmul %0, %1, %cst {dimension_numbers = #tpu.dot_dimension_numbers<[1], [0], [0], [1], [0, 0, 1, 1], [], []>} : vector<256x128xbf16>, vector<128x128xbf16>, vector<256x128xf32> -> vector<256x128xf32>
    %c0_3 = arith.constant 0 : index
    %c0_4 = arith.constant 0 : index
    %3 = vector.load %arg3[%c0_3, %c0_4] : memref<1x128xf32, #tpu.memory_space<vmem>>, vector<1x128xf32>
    %4 = vector.broadcast %3 : vector<1x128xf32> to vector<256x128xf32>
    %5 = arith.addf %2, %4 : vector<256x128xf32>
    %c0_5 = arith.constant 0 : index
    %c0_6 = arith.constant 0 : index
    %6 = vector.load %arg4[%c0_5, %c0_6] : memref<256x128xf32, #tpu.memory_space<vmem>>, vector<256x128xf32>
    tpu.vector_store %arg4[%c0_5, %c0_6], %5 {strides = array<i32>} : memref<256x128xf32, #tpu.memory_space<vmem>>, vector<256x128xf32>,
    %c256_i32 = arith.constant 256 : i32
    %7 = arith.muli %arg0, %c256_i32 : i32
    %8 = tpu.iota {dimensions = array<i32: 0>} : vector<256x128xi32>
    %9 = vector.broadcast %7 : i32 to vector<256x128xi32>
    %10 = arith.addi %9, %8 : vector<256x128xi32>
    %c512_i32 = arith.constant 512 : i32
    %11 = vector.broadcast %c512_i32 : i32 to vector<256x128xi32>
    %12 = arith.cmpi slt, %10, %11 : vector<256x128xi32>
    %13 = arith.extui %12 : vector<256x128xi1> to vector<256x128xi32>
    %14 = arith.sitofp %13 : vector<256x128xi32> to vector<256x128xf32>
    %15 = arith.mulf %5, %14 : vector<256x128xf32>
    %c0_i32 = arith.constant 0 : i32
    %16 = arith.cmpi eq, %arg0, %c0_i32 : i32
    %17 = arith.extui %16 : i1 to i32
    %c0_i32_7 = arith.constant 0 : i32
    %18 = arith.cmpi ne, %17, %c0_i32_7 : i32
    scf.if %18 {
      %cst_18 = arith.constant 0.000000e+00 : f32
      %30 = vector.broadcast %cst_18 : f32 to vector<1x128xf32>
      %c0_19 = arith.constant 0 : index
      %c0_20 = arith.constant 0 : index
      %31 = vector.load %arg5[%c0_19, %c0_20] : memref<1x128xf32, #tpu.memory_space<vmem>>, vector<1x128xf32>
      tpu.vector_store %arg5[%c0_19, %c0_20], %30 {strides = array<i32>} : memref<1x128xf32, #tpu.memory_space<vmem>>, vector<1x128xf32>,
      %cst_21 = arith.constant 0.000000e+00 : f32
      %32 = vector.broadcast %cst_21 : f32 to vector<1x128xf32>
      %c0_22 = arith.constant 0 : index
      %c0_23 = arith.constant 0 : index
      %33 = vector.load %arg6[%c0_22, %c0_23] : memref<1x128xf32, #tpu.memory_space<vmem>>, vector<1x128xf32>
      tpu.vector_store %arg6[%c0_22, %c0_23], %32 {strides = array<i32>} : memref<1x128xf32, #tpu.memory_space<vmem>>, vector<1x128xf32>,
    } else {
    }
    %c0_8 = arith.constant 0 : index
    %c0_9 = arith.constant 0 : index
    %19 = vector.load %arg5[%c0_8, %c0_9] : memref<1x128xf32, #tpu.memory_space<vmem>>, vector<1x128xf32>
    %cst_10 = arith.constant dense<0.000000e+00> : vector<128xf32>
    %20 = vector.multi_reduction <add>, %15, %cst_10 [0] : vector<256x128xf32> to vector<128xf32>
    %21 = vector.shape_cast %20 : vector<128xf32> to vector<1x128xf32>
    %22 = arith.addf %19, %21 : vector<1x128xf32>
    %c0_11 = arith.constant 0 : index
    %c0_12 = arith.constant 0 : index
    %23 = vector.load %arg5[%c0_11, %c0_12] : memref<1x128xf32, #tpu.memory_space<vmem>>, vector<1x128xf32>
    tpu.vector_store %arg5[%c0_11, %c0_12], %22 {strides = array<i32>} : memref<1x128xf32, #tpu.memory_space<vmem>>, vector<1x128xf32>,
    %c0_13 = arith.constant 0 : index
    %c0_14 = arith.constant 0 : index
    %24 = vector.load %arg6[%c0_13, %c0_14] : memref<1x128xf32, #tpu.memory_space<vmem>>, vector<1x128xf32>
    %25 = arith.mulf %15, %15 : vector<256x128xf32>
    %cst_15 = arith.constant dense<0.000000e+00> : vector<128xf32>
    %26 = vector.multi_reduction <add>, %25, %cst_15 [0] : vector<256x128xf32> to vector<128xf32>
    %27 = vector.shape_cast %26 : vector<128xf32> to vector<1x128xf32>
    %28 = arith.addf %24, %27 : vector<1x128xf32>
    %c0_16 = arith.constant 0 : index
    %c0_17 = arith.constant 0 : index
    %29 = vector.load %arg6[%c0_16, %c0_17] : memref<1x128xf32, #tpu.memory_space<vmem>>, vector<1x128xf32>
    tpu.vector_store %arg6[%c0_16, %c0_17], %28 {strides = array<i32>} : memref<1x128xf32, #tpu.memory_space<vmem>>, vector<1x128xf32>,
    return
  }
  func.func @transform_0(%arg0: i32) -> (i32, i32) {
    %c0_i32 = arith.constant 0 : i32
    %c0_i32_0 = arith.constant 0 : i32
    return %arg0, %c0_i32 : i32, i32
  }
  func.func @transform_1(%arg0: i32) -> (i32, i32) {
    %c0_i32 = arith.constant 0 : i32
    %c0_i32_0 = arith.constant 0 : i32
    %c0_i32_1 = arith.constant 0 : i32
    return %c0_i32, %c0_i32_0 : i32, i32
  }
  func.func @transform_2(%arg0: i32) -> (i32, i32) {
    %c0_i32 = arith.constant 0 : i32
    %c0_i32_0 = arith.constant 0 : i32
    %c0_i32_1 = arith.constant 0 : i32
    return %c0_i32, %c0_i32_0 : i32, i32
  }
  func.func @transform_3(%arg0: i32) -> (i32, i32) {
    %c0_i32 = arith.constant 0 : i32
    %c0_i32_0 = arith.constant 0 : i32
    return %arg0, %c0_i32 : i32, i32
  }
  func.func @transform_4(%arg0: i32) -> (i32, i32) {
    %c0_i32 = arith.constant 0 : i32
    %c0_i32_0 = arith.constant 0 : i32
    %c0_i32_1 = arith.constant 0 : i32
    return %c0_i32, %c0_i32_0 : i32, i32
  }
  func.func @transform_5(%arg0: i32) -> (i32, i32) {
    %c0_i32 = arith.constant 0 : i32
    %c0_i32_0 = arith.constant 0 : i32
    %c0_i32_1 = arith.constant 0 : i32
    return %c0_i32, %c0_i32_0 : i32, i32
  }
}

module attributes {stable_mosaic.version = 11 : i64} {
  func.func @_bn_prelu_xw_kernel(%arg0: i32, %arg1: memref<256x128xf32, #tpu.memory_space<vmem>>, %arg2: memref<1x128xf32, #tpu.memory_space<vmem>>, %arg3: memref<1x128xf32, #tpu.memory_space<vmem>>, %arg4: memref<1x128xf32, #tpu.memory_space<vmem>>, %arg5: memref<1x128xf32, #tpu.memory_space<vmem>>, %arg6: memref<1xf32, #tpu.memory_space<smem>>, %arg7: memref<128x128xbf16, #tpu.memory_space<vmem>>, %arg8: memref<256x128xbf16, #tpu.memory_space<vmem>>) attributes {dimension_semantics = [#tpu.dimension_semantics<parallel>], iteration_bounds = array<i64: 2>, scalar_prefetch = 0 : i64, scratch_operands = 0 : i64, tpu.core_type = #tpu.core_type<tc>, window_params = [{transform_indices = @transform_0, window_bounds = array<i64: 256, 128>}, {pipeline_mode = #tpu.pipeline_mode<synchronous>, transform_indices = @transform_1, window_bounds = array<i64: 1, 128>}, {pipeline_mode = #tpu.pipeline_mode<synchronous>, transform_indices = @transform_2, window_bounds = array<i64: 1, 128>}, {pipeline_mode = #tpu.pipeline_mode<synchronous>, transform_indices = @transform_3, window_bounds = array<i64: 1, 128>}, {pipeline_mode = #tpu.pipeline_mode<synchronous>, transform_indices = @transform_4, window_bounds = array<i64: 1, 128>}, {transform_indices = @transform_5, window_bounds = array<i64: 1>}, {pipeline_mode = #tpu.pipeline_mode<synchronous>, transform_indices = @transform_6, window_bounds = array<i64: 128, 128>}, {transform_indices = @transform_7, window_bounds = array<i64: 256, 128>}]} {
    %c0 = arith.constant 0 : index
    %c0_0 = arith.constant 0 : index
    %0 = vector.load %arg1[%c0, %c0_0] : memref<256x128xf32, #tpu.memory_space<vmem>>, vector<256x128xf32>
    %c0_1 = arith.constant 0 : index
    %c0_2 = arith.constant 0 : index
    %1 = vector.load %arg2[%c0_1, %c0_2] : memref<1x128xf32, #tpu.memory_space<vmem>>, vector<1x128xf32>
    %2 = vector.broadcast %1 : vector<1x128xf32> to vector<256x128xf32>
    %3 = arith.subf %0, %2 : vector<256x128xf32>
    %c0_3 = arith.constant 0 : index
    %c0_4 = arith.constant 0 : index
    %4 = vector.load %arg3[%c0_3, %c0_4] : memref<1x128xf32, #tpu.memory_space<vmem>>, vector<1x128xf32>
    %5 = vector.broadcast %4 : vector<1x128xf32> to vector<256x128xf32>
    %6 = arith.mulf %3, %5 : vector<256x128xf32>
    %c0_5 = arith.constant 0 : index
    %c0_6 = arith.constant 0 : index
    %7 = vector.load %arg4[%c0_5, %c0_6] : memref<1x128xf32, #tpu.memory_space<vmem>>, vector<1x128xf32>
    %8 = vector.broadcast %7 : vector<1x128xf32> to vector<256x128xf32>
    %9 = arith.mulf %6, %8 : vector<256x128xf32>
    %c0_7 = arith.constant 0 : index
    %c0_8 = arith.constant 0 : index
    %10 = vector.load %arg5[%c0_7, %c0_8] : memref<1x128xf32, #tpu.memory_space<vmem>>, vector<1x128xf32>
    %11 = vector.broadcast %10 : vector<1x128xf32> to vector<256x128xf32>
    %12 = arith.addf %9, %11 : vector<256x128xf32>
    %c0_9 = arith.constant 0 : index
    %13 = memref.load %arg6[%c0_9] : memref<1xf32, #tpu.memory_space<smem>>
    %cst = arith.constant 0.000000e+00 : f32
    %14 = vector.broadcast %cst : f32 to vector<256x128xf32>
    %15 = arith.cmpf ogt, %12, %14 : vector<256x128xf32>
    %16 = vector.broadcast %13 : f32 to vector<256x128xf32>
    %17 = arith.mulf %16, %12 : vector<256x128xf32>
    %18 = arith.select %15, %12, %17 : vector<256x128xi1>, vector<256x128xf32>
    %19 = arith.truncf %18 : vector<256x128xf32> to vector<256x128xbf16>
    %c0_10 = arith.constant 0 : index
    %c0_11 = arith.constant 0 : index
    %20 = vector.load %arg7[%c0_10, %c0_11] : memref<128x128xbf16, #tpu.memory_space<vmem>>, vector<128x128xbf16>
    %cst_12 = arith.constant dense<0.000000e+00> : vector<256x128xf32>
    %21 = tpu.matmul %19, %20, %cst_12 {dimension_numbers = #tpu.dot_dimension_numbers<[1], [0], [0], [1], [0, 0, 1, 1], [], []>} : vector<256x128xbf16>, vector<128x128xbf16>, vector<256x128xf32> -> vector<256x128xf32>
    %22 = arith.truncf %21 : vector<256x128xf32> to vector<256x128xbf16>
    %c0_13 = arith.constant 0 : index
    %c0_14 = arith.constant 0 : index
    %23 = vector.load %arg8[%c0_13, %c0_14] : memref<256x128xbf16, #tpu.memory_space<vmem>>, vector<256x128xbf16>
    tpu.vector_store %arg8[%c0_13, %c0_14], %22 {strides = array<i32>} : memref<256x128xbf16, #tpu.memory_space<vmem>>, vector<256x128xbf16>,
    return
  }
  func.func @transform_0(%arg0: i32) -> (i32, i32) {
    %c0_i32 = arith.constant 0 : i32
    %c0_i32_0 = arith.constant 0 : i32
    return %arg0, %c0_i32 : i32, i32
  }
  func.func @transform_1(%arg0: i32) -> (i32, i32) {
    %c0_i32 = arith.constant 0 : i32
    %c0_i32_0 = arith.constant 0 : i32
    %c0_i32_1 = arith.constant 0 : i32
    return %c0_i32, %c0_i32_0 : i32, i32
  }
  func.func @transform_2(%arg0: i32) -> (i32, i32) {
    %c0_i32 = arith.constant 0 : i32
    %c0_i32_0 = arith.constant 0 : i32
    %c0_i32_1 = arith.constant 0 : i32
    return %c0_i32, %c0_i32_0 : i32, i32
  }
  func.func @transform_3(%arg0: i32) -> (i32, i32) {
    %c0_i32 = arith.constant 0 : i32
    %c0_i32_0 = arith.constant 0 : i32
    %c0_i32_1 = arith.constant 0 : i32
    return %c0_i32, %c0_i32_0 : i32, i32
  }
  func.func @transform_4(%arg0: i32) -> (i32, i32) {
    %c0_i32 = arith.constant 0 : i32
    %c0_i32_0 = arith.constant 0 : i32
    %c0_i32_1 = arith.constant 0 : i32
    return %c0_i32, %c0_i32_0 : i32, i32
  }
  func.func @transform_5(%arg0: i32) -> i32 {
    %c0_i32 = arith.constant 0 : i32
    %c0_i32_0 = arith.constant 0 : i32
    return %c0_i32 : i32
  }
  func.func @transform_6(%arg0: i32) -> (i32, i32) {
    %c0_i32 = arith.constant 0 : i32
    %c0_i32_0 = arith.constant 0 : i32
    %c0_i32_1 = arith.constant 0 : i32
    return %c0_i32, %c0_i32_0 : i32, i32
  }
  func.func @transform_7(%arg0: i32) -> (i32, i32) {
    %c0_i32 = arith.constant 0 : i32
    %c0_i32_0 = arith.constant 0 : i32
    return %arg0, %c0_i32 : i32, i32
  }
}

module attributes {stable_mosaic.version = 11 : i64} {
  func.func @_propagate_kernel(%arg0: i32, %arg1: i32, %arg2: i32, %arg3: memref<256x256xbf16, #tpu.memory_space<vmem>>, %arg4: memref<256x128xbf16, #tpu.memory_space<vmem>>, %arg5: memref<1x128xf32, #tpu.memory_space<vmem>>, %arg6: memref<256x128xf32, #tpu.memory_space<vmem>>, %arg7: memref<256x128xf32, #tpu.memory_space<vmem>>) attributes {dimension_semantics = [#tpu.dimension_semantics<parallel>, #tpu.dimension_semantics<parallel>, #tpu.dimension_semantics<arbitrary>], iteration_bounds = array<i64: 2, 1, 2>, scalar_prefetch = 0 : i64, scratch_operands = 1 : i64, tpu.core_type = #tpu.core_type<tc>, window_params = [{transform_indices = @transform_0, window_bounds = array<i64: 256, 256>}, {transform_indices = @transform_1, window_bounds = array<i64: 256, 128>}, {transform_indices = @transform_2, window_bounds = array<i64: 1, 128>}, {transform_indices = @transform_3, window_bounds = array<i64: 256, 128>}]} {
    %c0_i32 = arith.constant 0 : i32
    %0 = arith.cmpi eq, %arg2, %c0_i32 : i32
    %1 = arith.extui %0 : i1 to i32
    %c0_i32_0 = arith.constant 0 : i32
    %2 = arith.cmpi ne, %1, %c0_i32_0 : i32
    scf.if %2 {
      %cst_9 = arith.constant 0.000000e+00 : f32
      %12 = vector.broadcast %cst_9 : f32 to vector<256x128xf32>
      %c0_10 = arith.constant 0 : index
      %c0_11 = arith.constant 0 : index
      %13 = vector.load %arg7[%c0_10, %c0_11] : memref<256x128xf32, #tpu.memory_space<vmem>>, vector<256x128xf32>
      tpu.vector_store %arg7[%c0_10, %c0_11], %12 {strides = array<i32>} : memref<256x128xf32, #tpu.memory_space<vmem>>, vector<256x128xf32>,
    } else {
    }
    %c0 = arith.constant 0 : index
    %c0_1 = arith.constant 0 : index
    %3 = vector.load %arg7[%c0, %c0_1] : memref<256x128xf32, #tpu.memory_space<vmem>>, vector<256x128xf32>
    %c0_2 = arith.constant 0 : index
    %c0_3 = arith.constant 0 : index
    %4 = vector.load %arg3[%c0_2, %c0_3] : memref<256x256xbf16, #tpu.memory_space<vmem>>, vector<256x256xbf16>
    %c0_4 = arith.constant 0 : index
    %c0_5 = arith.constant 0 : index
    %5 = vector.load %arg4[%c0_4, %c0_5] : memref<256x128xbf16, #tpu.memory_space<vmem>>, vector<256x128xbf16>
    %cst = arith.constant dense<0.000000e+00> : vector<256x128xf32>
    %6 = tpu.matmul %4, %5, %cst {dimension_numbers = #tpu.dot_dimension_numbers<[1], [0], [0], [1], [0, 0, 1, 1], [], []>} : vector<256x256xbf16>, vector<256x128xbf16>, vector<256x128xf32> -> vector<256x128xf32>
    %7 = arith.addf %3, %6 : vector<256x128xf32>
    %c0_6 = arith.constant 0 : index
    %c0_7 = arith.constant 0 : index
    %8 = vector.load %arg7[%c0_6, %c0_7] : memref<256x128xf32, #tpu.memory_space<vmem>>, vector<256x128xf32>
    tpu.vector_store %arg7[%c0_6, %c0_7], %7 {strides = array<i32>} : memref<256x128xf32, #tpu.memory_space<vmem>>, vector<256x128xf32>,
    %c1_i32 = arith.constant 1 : i32
    %9 = arith.cmpi eq, %arg2, %c1_i32 : i32
    %10 = arith.extui %9 : i1 to i32
    %c0_i32_8 = arith.constant 0 : i32
    %11 = arith.cmpi ne, %10, %c0_i32_8 : i32
    scf.if %11 {
      %c0_9 = arith.constant 0 : index
      %c0_10 = arith.constant 0 : index
      %12 = vector.load %arg7[%c0_9, %c0_10] : memref<256x128xf32, #tpu.memory_space<vmem>>, vector<256x128xf32>
      %c0_11 = arith.constant 0 : index
      %c0_12 = arith.constant 0 : index
      %13 = vector.load %arg5[%c0_11, %c0_12] : memref<1x128xf32, #tpu.memory_space<vmem>>, vector<1x128xf32>
      %14 = vector.broadcast %13 : vector<1x128xf32> to vector<256x128xf32>
      %15 = arith.addf %12, %14 : vector<256x128xf32>
      %c0_13 = arith.constant 0 : index
      %c0_14 = arith.constant 0 : index
      %16 = vector.load %arg6[%c0_13, %c0_14] : memref<256x128xf32, #tpu.memory_space<vmem>>, vector<256x128xf32>
      tpu.vector_store %arg6[%c0_13, %c0_14], %15 {strides = array<i32>} : memref<256x128xf32, #tpu.memory_space<vmem>>, vector<256x128xf32>,
    } else {
    }
    return
  }
  func.func @transform_0(%arg0: i32, %arg1: i32, %arg2: i32) -> (i32, i32) {
    %c0_i32 = arith.constant 0 : i32
    return %arg0, %arg2 : i32, i32
  }
  func.func @transform_1(%arg0: i32, %arg1: i32, %arg2: i32) -> (i32, i32) {
    %c0_i32 = arith.constant 0 : i32
    return %arg2, %arg1 : i32, i32
  }
  func.func @transform_2(%arg0: i32, %arg1: i32, %arg2: i32) -> (i32, i32) {
    %c0_i32 = arith.constant 0 : i32
    %c0_i32_0 = arith.constant 0 : i32
    return %c0_i32, %arg1 : i32, i32
  }
  func.func @transform_3(%arg0: i32, %arg1: i32, %arg2: i32) -> (i32, i32) {
    %c0_i32 = arith.constant 0 : i32
    return %arg0, %arg1 : i32, i32
  }
}

</mosaic_0001>

<llo_original>
// kernel: _gconv_forward.4
$region0: #{_gconv_forward.4}
  #allocation0 [shape = 'u32[]', space=smem, size = 0x4, offset = 0x4, fixed_abs, tag = 'smem constant byte address 0x4 - core index']
  #allocation1 [shape = 'u32[144,128]{1,0:T(1,128)}', space=vmem, size = 0x12000, scoped, tag = 'internal scratch']
  #allocation2 [shape = 'f32[256,128]{1,0:T(8,128)}', space=vmem, size = 0x20000, scoped, tag = 'scratch operand']
  %s0 = inlined_call_operand.hbm [shape: bf16[512,512], index: 0, kind: input, shape index: {}]
  %s1 = inlined_call_operand.hbm [shape: bf16[512,128], index: 1, kind: input, shape index: {}]
  %s2 = inlined_call_operand.vmem [shape: f32[1,128], index: 2, kind: input, shape index: {}]
  %s3 = inlined_call_operand.vmem [shape: bf16[512,128], index: 3, kind: output, shape index: {}]
  %s4 = sld [smem:[#allocation0]]
  $region61: #{_gconv_forward.4} parent=0
    _
  %s6 = ssub.s32 1, %s4
  %s7 = scalar_select 0, %s6, %s4
  $region1: #{_gconv_forward.4} parent=0
    #allocation3 [shape = 'u8[262144]{0}', space=vmem, size = 0x40000, scoped, tag = 'input window, operand 0']
    #allocation4 [shape = 's32[2]{0}', space=sflag, size = 0x8, scoped, tag = 'scoped memory for _gconv_forward.4']
    #allocation5 [shape = 'u8[131072]{0}', space=vmem, size = 0x20000, scoped, tag = 'input window, operand 1']
    #allocation6 [shape = 's32[2]{0}', space=sflag, size = 0x8, scoped, tag = 'scoped memory for _gconv_forward.4']
    %8 = vsyncpa [#allocation4], 0
    %s9 = scalar_lea.sflag [#allocation4], 1
    %10 = vsyncpa %s9, 0
    %11 = vsyncpa [#allocation6], 0
    %s12 = scalar_lea.sflag [#allocation6], 1
    %13 = vsyncpa %s12, 0
    loop: start=0, step=1, limit=6
    $region2: #{_gconv_forward.4} parent=1 // loop_pre_header
      _
    $region3: #{_gconv_forward.4} parent=1 // loop_header
      %s15 = sphi 0, %s19
      %p16 = scmp.ge.s32.totalorder %s15, 6
      %s22 = sphi 0, %s41
      %s23 = sphi 0, %s37
      %s24 = sphi 0, %s33
      %s25 = sphi 0, %s22
      %s26 = sphi 0, %s23
      %s27 = sphi 0, %s24
      %s28 = sphi 0, %s25
      %s29 = sphi 0, %s26
      %s30 = sphi 0, %s27
      %s46 = sphi 0, %s48
      %s49 = sphi 0, %s46
      %s50 = sphi 0, %s49
      %s66 = sphi 0, %s50
      %s74 = sphi 0, %s76
      %s77 = sphi 0, %s74
      %s78 = sphi 0, %s77
      %s94 = sphi 0, %s78
      %s100 = sphi 0, %s102
      %s103 = sphi 0, %s100
      %s104 = sphi 0, %s103
      %s120 = sphi 0, %s104
      %s128 = sphi 0, %s130
      %s131 = sphi 0, %s128
      %s132 = sphi 0, %s131
      %s148 = sphi 0, %s132
    $region4: #{_gconv_forward.4} parent=1 // loop_header_branch
      %18 = sbr.rel (%p16) target = $region8
    $region5: #{_gconv_forward.4} parent=1 // loop_body
      %s20 = ssub.s32 %s15, 1
      %s21 = ssub.s32 %s15, 2
      %s31 = sadd.s32 1, %s24
      %p32 = scmp.ge.s32.totalorder %s31, 2
      %s33 = scalar_select %p32, 0, %s31
      %s34 = sadd.s32 1, %s23
      %s35 = scalar_select %p32, %s34, %s23
      %p36 = scmp.ge.s32.totalorder %s35, 1
      %s37 = scalar_select %p36, 0, %s35
      %s38 = sadd.s32 1, %s22
      %s39 = scalar_select %p36, %s38, %s22
      %p40 = scmp.ge.s32.totalorder %s39, 2
      %s41 = scalar_select %p40, 0, %s39
      %s42 = ssub.s32 %s22, %s41
      %s43 = ssub.s32 %s24, %s33
      %s44 = sor.u32 %s42, %s43
      %p45 = scmp.eq.s32.totalorder %s44, 0
      %s47 = sadd.s32 %s46, 1
      %s48 = scalar_select %p45, %s46, %s47
      %p51 = pneg %p45
      %p52 = scmp.eq.s32.totalorder %s15, 3
      %p53 = por %p51, %p52
      %p54 = scmp.ne.s32.totalorder %s46, %s49
      %p55 = scmp.eq.s32.totalorder %s15, 0
      %p56 = por %p54, %p55
      %p57 = scmp.ne.s32.totalorder %s46, %s49
      %p58 = scmp.eq.s32.totalorder %s20, 3
      %p59 = por %p57, %p58
      %p60 = scmp.ne.s32.totalorder %s49, %s50
      %p61 = scmp.eq.s32.totalorder %s20, 0
      %p62 = por %p60, %p61
      %p63 = scmp.ne.s32.totalorder %s49, %s50
      %p64 = scmp.eq.s32.totalorder %s21, 3
      %p65 = por %p63, %p64
      %p67 = scmp.ne.s32.totalorder %s50, %s66
      %p68 = scmp.eq.s32.totalorder %s21, 0
      %p69 = por %p67, %p68
      %s70 = ssub.s32 %s24, %s33
      %s71 = ssub.s32 %s23, %s37
      %s72 = sor.u32 %s70, %s71
      %p73 = scmp.eq.s32.totalorder %s72, 0
      %s75 = sadd.s32 %s74, 1
      %s76 = scalar_select %p73, %s74, %s75
      %p79 = pneg %p73
      %p80 = scmp.eq.s32.totalorder %s15, 3
      %p81 = por %p79, %p80
      %p82 = scmp.ne.s32.totalorder %s74, %s77
      %p83 = scmp.eq.s32.totalorder %s15, 0
      %p84 = por %p82, %p83
      %p85 = scmp.ne.s32.totalorder %s74, %s77
      %p86 = scmp.eq.s32.totalorder %s20, 3
      %p87 = por %p85, %p86
      %p88 = scmp.ne.s32.totalorder %s77, %s78
      %p89 = scmp.eq.s32.totalorder %s20, 0
      %p90 = por %p88, %p89
      %p91 = scmp.ne.s32.totalorder %s77, %s78
      %p92 = scmp.eq.s32.totalorder %s21, 3
      %p93 = por %p91, %p92
      %p95 = scmp.ne.s32.totalorder %s78, %s94
      %p96 = scmp.eq.s32.totalorder %s21, 0
      %p97 = por %p95, %p96
      %s98 = ssub.s32 %s23, %s37
      %p99 = scmp.eq.s32.totalorder %s98, 0
      %s101 = sadd.s32 %s100, 1
      %s102 = scalar_select %p99, %s100, %s101
      %p105 = pneg %p99
      %p106 = scmp.eq.s32.totalorder %s15, 3
      %p107 = por %p105, %p106
      %p108 = scmp.ne.s32.totalorder %s100, %s103
      %p109 = scmp.eq.s32.totalorder %s15, 0
      %p110 = por %p108, %p109
      %p111 = scmp.ne.s32.totalorder %s100, %s103
      %p112 = scmp.eq.s32.totalorder %s20, 3
      %p113 = por %p111, %p112
      %p114 = scmp.ne.s32.totalorder %s103, %s104
      %p115 = scmp.eq.s32.totalorder %s20, 0
      %p116 = por %p114, %p115
      %p117 = scmp.ne.s32.totalorder %s103, %s104
      %p118 = scmp.eq.s32.totalorder %s21, 3
      %p119 = por %p117, %p118
      %p121 = scmp.ne.s32.totalorder %s104, %s120
      %p122 = scmp.eq.s32.totalorder %s21, 0
      %p123 = por %p121, %p122
      %s124 = ssub.s32 %s22, %s41
      %s125 = ssub.s32 %s23, %s37
      %s126 = sor.u32 %s124, %s125
      %p127 = scmp.eq.s32.totalorder %s126, 0
      %s129 = sadd.s32 %s128, 1
      %s130 = scalar_select %p127, %s128, %s129
      %p133 = pneg %p127
      %p134 = scmp.eq.s32.totalorder %s15, 3
      %p135 = por %p133, %p134
      %p136 = scmp.ne.s32.totalorder %s128, %s131
      %p137 = scmp.eq.s32.totalorder %s15, 0
      %p138 = por %p136, %p137
      %p139 = scmp.ne.s32.totalorder %s128, %s131
      %p140 = scmp.eq.s32.totalorder %s20, 3
      %p141 = por %p139, %p140
      %p142 = scmp.ne.s32.totalorder %s131, %s132
      %p143 = scmp.eq.s32.totalorder %s20, 0
      %p144 = por %p142, %p143
      %p145 = scmp.ne.s32.totalorder %s131, %s132
      %p146 = scmp.eq.s32.totalorder %s21, 3
      %p147 = por %p145, %p146
      %p149 = scmp.ne.s32.totalorder %s132, %s148
      %p150 = scmp.eq.s32.totalorder %s21, 0
      %p151 = por %p149, %p150
      %p152 = scmp.le.s32.totalorder 1, %s15
      %p153 = scmp.lt.s32.totalorder %s15, 5
      %p154 = pnand %p152, %p153
      %p155 = pneg %p154
      // Predicated region
      $region9: #{_gconv_forward.4} parent=5 // pred_check
        _
      $region10: #{_gconv_forward.4} parent=5 // pred_check_branch
        %157 = sbr.rel (%p154) target = $region12
      $region11: #{_gconv_forward.4} parent=5 // pred_region
        %s158 = ssub.s32 %s15, 1
        // Predicated region
        $region13: #{_gconv_forward.4} parent=11 // pred_check
          %p159 = pneg %p116
        $region14: #{_gconv_forward.4} parent=11 // pred_check_branch
          %161 = sbr.rel (%p159) target = $region16
        $region15: #{_gconv_forward.4} parent=11 // pred_region
          %p162 = scmp.lt.s32.totalorder %s26, 0
          %s163 = scalar_select %p162, %s26, 0
          %s164 = scalar_lea.vmem %s2, %s163
        $region16: #{_gconv_forward.4} parent=11 // pred_fallthru
          _
      $region12: #{_gconv_forward.4} parent=5 // pred_fallthru
        _
      %p165 = scmp.lt.s32.totalorder %s15, 4
      // Predicated region
      $region17: #{_gconv_forward.4} parent=5 // pred_check
        %p166 = pneg %p165
      $region18: #{_gconv_forward.4} parent=5 // pred_check_branch
        %168 = sbr.rel (%p166) target = $region20
      $region19: #{_gconv_forward.4} parent=5 // pred_region
        // Predicated region
        $region21: #{_gconv_forward.4} parent=19 // pred_check
          %p169 = pneg %p56
        $region22: #{_gconv_forward.4} parent=19 // pred_check_branch
          %171 = sbr.rel (%p169) target = $region24
        $region23: #{_gconv_forward.4} parent=19 // pred_region
          %s172 = sand.u32 %s46, 1
          %s173 = scalar_lea.sflag [#allocation4], %s172
          %s174 = sand.u32 %s46, 1
          %s175 = smul.addr %s174, 256
          %s176 = scalar_lea.vmem [#allocation3], %s175
          %s177 = smul.u32 32, %s22
          %s178 = smul.u32 2, %s24
          %s180 = ssub.s32 4096, 4096
          %181 = vsyncadd %s173, %s180
          %s182 = smul.addr %s177, 4
          %s183 = sadd.s32 %s178, %s182
          %s184 = smul.addr %s183, 64
          %s185 = scalar_lea.hbm %s0, %s184
          %s186 = sshll.u32 %s176, 4
          %s187 = int_to_ptr.vmem [resolvable:$true] %s186
          %192 = dma.hbm_to_vmem [thread:$0]  %s185, 4096, %s187, %s173, 256, 128, 8
        $region24: #{_gconv_forward.4} parent=19 // pred_fallthru
          _
        // Predicated region
        $region25: #{_gconv_forward.4} parent=19 // pred_check
          %p193 = pneg %p84
        $region26: #{_gconv_forward.4} parent=19 // pred_check_branch
          %195 = sbr.rel (%p193) target = $region28
        $region27: #{_gconv_forward.4} parent=19 // pred_region
          %s196 = sand.u32 %s74, 1
          %s197 = scalar_lea.sflag [#allocation6], %s196
          %s198 = sand.u32 %s74, 1
          %s199 = smul.addr %s198, 128
          %s200 = scalar_lea.vmem [#allocation5], %s199
          %s201 = smul.u32 32, %s24
          %s203 = ssub.s32 2048, 2048
          %204 = vsyncadd %s197, %s203
          %s205 = sadd.s32 %s23, %s201
          %s206 = smul.addr %s205, 64
          %s207 = scalar_lea.hbm %s1, %s206
          %s208 = sshll.u32 %s200, 4
          %s209 = int_to_ptr.vmem [resolvable:$true] %s208
          %214 = dma.hbm_to_vmem [thread:$0]  %s207, 2048, %s209, %s197, 64, 64, 4
        $region28: #{_gconv_forward.4} parent=19 // pred_fallthru
          _
      $region20: #{_gconv_forward.4} parent=5 // pred_fallthru
        _
      %p215 = scmp.le.s32.totalorder 1, %s15
      %p216 = scmp.lt.s32.totalorder %s15, 5
      %p217 = pnand %p215, %p216
      %p218 = pneg %p217
      // Predicated region
      $region29: #{_gconv_forward.4} parent=5 // pred_check
        _
      $region30: #{_gconv_forward.4} parent=5 // pred_check_branch
        %220 = sbr.rel (%p217) target = $region32
      $region31: #{_gconv_forward.4} parent=5 // pred_region
        %s221 = ssub.s32 %s15, 1
        %s222 = sand.u32 %s49, 1
        %s223 = scalar_lea.sflag [#allocation4], %s222
        %s224 = sand.u32 %s49, 1
        %s225 = smul.addr %s224, 256
        %s226 = scalar_lea.vmem [#allocation3], %s225
        // Predicated region
        $region33: #{_gconv_forward.4} parent=31 // pred_check
          %p227 = pneg %p62
        $region34: #{_gconv_forward.4} parent=31 // pred_check_branch
          %229 = sbr.rel (%p227) target = $region36
        $region35: #{_gconv_forward.4} parent=31 // pred_region
          %230 = dma.done %s223, 4096
        $region36: #{_gconv_forward.4} parent=31 // pred_fallthru
          _
        %s231 = sand.u32 %s77, 1
        %s232 = scalar_lea.sflag [#allocation6], %s231
        %s233 = sand.u32 %s77, 1
        %s234 = smul.addr %s233, 128
        %s235 = scalar_lea.vmem [#allocation5], %s234
        // Predicated region
        $region37: #{_gconv_forward.4} parent=31 // pred_check
          %p236 = pneg %p90
        $region38: #{_gconv_forward.4} parent=31 // pred_check_branch
          %238 = sbr.rel (%p236) target = $region40
        $region39: #{_gconv_forward.4} parent=31 // pred_region
          %239 = dma.done %s232, 2048
        $region40: #{_gconv_forward.4} parent=31 // pred_fallthru
          _
        %s240 = sand.u32 %s49, 1
        %s241 = scalar_lea.sflag [#allocation4], %s240
        %s242 = sand.u32 %s49, 1
        %s243 = smul.addr %s242, 256
        %s244 = scalar_lea.vmem [#allocation3], %s243
        %p245 = pneg %p62
        %p246 = pneg %p59
        %s247 = sand.u32 %s77, 1
        %s248 = scalar_lea.sflag [#allocation6], %s247
        %s249 = sand.u32 %s77, 1
        %s250 = smul.addr %s249, 128
        %s251 = scalar_lea.vmem [#allocation5], %s250
        %p252 = pneg %p90
        %p253 = pneg %p87
        %p254 = scmp.lt.s32.totalorder %s26, 0
        %s255 = scalar_select %p254, %s26, 0
        %s256 = scalar_lea.vmem %s2, %s255
        %p257 = pneg %p116
        %p258 = pneg %p113
        %p259 = pneg %p144
        %p260 = pneg %p141
        %s261 = smul.u32 32, %s25
        %p262 = scmp.lt.s32.totalorder %s261, 63
        %s263 = scalar_select %p262, %s261, 63
        %p264 = scmp.lt.s32.totalorder %s26, 0
        %s265 = scalar_select %p264, %s26, 0
        %s266 = sadd.s32 %s265, %s263
        %s267 = smul.addr %s266, 4
        %s268 = scalar_lea.vmem %s3, %s267
        %s269 = smul.u32 32, %s25
        %s270 = smul.u32 2, %s27
        %s271 = smul.u32 32, %s27
        %p272 = scmp.lt.s32.totalorder %s26, 0
        %s273 = scalar_select %p272, %s26, 0
        %s274 = scalar_lea.vmem %s2, %s273
        %s275 = smul.u32 32, %s25
        %p276 = scmp.lt.s32.totalorder %s275, 63
        %s277 = scalar_select %p276, %s275, 63
        %p278 = scmp.lt.s32.totalorder %s26, 0
        %s279 = scalar_select %p278, %s26, 0
        %s280 = sadd.s32 %s279, %s277
        %s281 = smul.addr %s280, 4
        %s282 = scalar_lea.vmem %s3, %s281
        %s283 = smul.u32 32, %s25
        %p285 = scmp.eq.s32.totalorder %s27, 0
        // Predicated region
        $region41: #{_gconv_forward.4} parent=31 // pred_check
          %p286 = pneg %p285
        $region42: #{_gconv_forward.4} parent=31 // pred_check_branch
          %288 = sbr.rel (%p286) target = $region44
        $region43: #{_gconv_forward.4} parent=31 // pred_region
          %289 = vst [vmem:[#allocation2] sm:$0xff] 0.0
          %290 = vst [vmem:[#allocation2 + $0x8] sm:$0xff] 0.0
          %291 = vst [vmem:[#allocation2 + $0x10] sm:$0xff] 0.0
          %292 = vst [vmem:[#allocation2 + $0x18] sm:$0xff] 0.0
          %293 = vst [vmem:[#allocation2 + $0x20] sm:$0xff] 0.0
          %294 = vst [vmem:[#allocation2 + $0x28] sm:$0xff] 0.0
          %295 = vst [vmem:[#allocation2 + $0x30] sm:$0xff] 0.0
          %296 = vst [vmem:[#allocation2 + $0x38] sm:$0xff] 0.0
          %297 = vst [vmem:[#allocation2 + $0x40] sm:$0xff] 0.0
          %298 = vst [vmem:[#allocation2 + $0x48] sm:$0xff] 0.0
          %299 = vst [vmem:[#allocation2 + $0x50] sm:$0xff] 0.0
          %300 = vst [vmem:[#allocation2 + $0x58] sm:$0xff] 0.0
          %301 = vst [vmem:[#allocation2 + $0x60] sm:$0xff] 0.0
          %302 = vst [vmem:[#allocation2 + $0x68] sm:$0xff] 0.0
          %303 = vst [vmem:[#allocation2 + $0x70] sm:$0xff] 0.0
          %304 = vst [vmem:[#allocation2 + $0x78] sm:$0xff] 0.0
          %305 = vst [vmem:[#allocation2 + $0x80] sm:$0xff] 0.0
          %306 = vst [vmem:[#allocation2 + $0x88] sm:$0xff] 0.0
          %307 = vst [vmem:[#allocation2 + $0x90] sm:$0xff] 0.0
          %308 = vst [vmem:[#allocation2 + $0x98] sm:$0xff] 0.0
          %309 = vst [vmem:[#allocation2 + $0xa0] sm:$0xff] 0.0
          %310 = vst [vmem:[#allocation2 + $0xa8] sm:$0xff] 0.0
          %311 = vst [vmem:[#allocation2 + $0xb0] sm:$0xff] 0.0
          %312 = vst [vmem:[#allocation2 + $0xb8] sm:$0xff] 0.0
          %313 = vst [vmem:[#allocation2 + $0xc0] sm:$0xff] 0.0
          %314 = vst [vmem:[#allocation2 + $0xc8] sm:$0xff] 0.0
          %315 = vst [vmem:[#allocation2 + $0xd0] sm:$0xff] 0.0
          %316 = vst [vmem:[#allocation2 + $0xd8] sm:$0xff] 0.0
          %317 = vst [vmem:[#allocation2 + $0xe0] sm:$0xff] 0.0
          %318 = vst [vmem:[#allocation2 + $0xe8] sm:$0xff] 0.0
          %319 = vst [vmem:[#allocation2 + $0xf0] sm:$0xff] 0.0
          %320 = vst [vmem:[#allocation2 + $0xf8] sm:$0xff] 0.0
        $region44: #{_gconv_forward.4} parent=31 // pred_fallthru
          _
        %v321 = vld [vmem:[#allocation2] sm:$0xff]
        %v322 = vld [vmem:[#allocation2 + $0x8] sm:$0xff]
        %v323 = vld [vmem:[#allocation2 + $0x10] sm:$0xff]
        %v324 = vld [vmem:[#allocation2 + $0x18] sm:$0xff]
        %v325 = vld [vmem:[#allocation2 + $0x20] sm:$0xff]
        %v326 = vld [vmem:[#allocation2 + $0x28] sm:$0xff]
        %v327 = vld [vmem:[#allocation2 + $0x30] sm:$0xff]
        %v328 = vld [vmem:[#allocation2 + $0x38] sm:$0xff]
        %v329 = vld [vmem:[#allocation2 + $0x40] sm:$0xff]
        %v330 = vld [vmem:[#allocation2 + $0x48] sm:$0xff]
        %v331 = vld [vmem:[#allocation2 + $0x50] sm:$0xff]
        %v332 = vld [vmem:[#allocation2 + $0x58] sm:$0xff]
        %v333 = vld [vmem:[#allocation2 + $0x60] sm:$0xff]
        %v334 = vld [vmem:[#allocation2 + $0x68] sm:$0xff]
        %v335 = vld [vmem:[#allocation2 + $0x70] sm:$0xff]
        %v336 = vld [vmem:[#allocation2 + $0x78] sm:$0xff]
        %v337 = vld [vmem:[#allocation2 + $0x80] sm:$0xff]
        %v338 = vld [vmem:[#allocation2 + $0x88] sm:$0xff]
        %v339 = vld [vmem:[#allocation2 + $0x90] sm:$0xff]
        %v340 = vld [vmem:[#allocation2 + $0x98] sm:$0xff]
        %v341 = vld [vmem:[#allocation2 + $0xa0] sm:$0xff]
        %v342 = vld [vmem:[#allocation2 + $0xa8] sm:$0xff]
        %v343 = vld [vmem:[#allocation2 + $0xb0] sm:$0xff]
        %v344 = vld [vmem:[#allocation2 + $0xb8] sm:$0xff]
        %v345 = vld [vmem:[#allocation2 + $0xc0] sm:$0xff]
        %v346 = vld [vmem:[#allocation2 + $0xc8] sm:$0xff]
        %v347 = vld [vmem:[#allocation2 + $0xd0] sm:$0xff]
        %v348 = vld [vmem:[#allocation2 + $0xd8] sm:$0xff]
        %v349 = vld [vmem:[#allocation2 + $0xe0] sm:$0xff]
        %v350 = vld [vmem:[#allocation2 + $0xe8] sm:$0xff]
        %v351 = vld [vmem:[#allocation2 + $0xf0] sm:$0xff]
        %v352 = vld [vmem:[#allocation2 + $0xf8] sm:$0xff]
        %v353 = vld [vmem:[%s226] sm:$0xff]
        %v354 = vld [vmem:[%s226 + $0x8] sm:$0xff]
        %v355 = vld [vmem:[%s226 + $0x10] sm:$0xff]
        %v356 = vld [vmem:[%s226 + $0x18] sm:$0xff]
        %v357 = vld [vmem:[%s226 + $0x20] sm:$0xff]
        %v358 = vld [vmem:[%s226 + $0x28] sm:$0xff]
        %v359 = vld [vmem:[%s226 + $0x30] sm:$0xff]
        %v360 = vld [vmem:[%s226 + $0x38] sm:$0xff]
        %v361 = vld [vmem:[%s226 + $0x40] sm:$0xff]
        %v362 = vld [vmem:[%s226 + $0x48] sm:$0xff]
        %v363 = vld [vmem:[%s226 + $0x50] sm:$0xff]
        %v364 = vld [vmem:[%s226 + $0x58] sm:$0xff]
        %v365 = vld [vmem:[%s226 + $0x60] sm:$0xff]
        %v366 = vld [vmem:[%s226 + $0x68] sm:$0xff]
        %v367 = vld [vmem:[%s226 + $0x70] sm:$0xff]
        %v368 = vld [vmem:[%s226 + $0x78] sm:$0xff]
        %v369 = vld [vmem:[%s226 + $0x80] sm:$0xff]
        %v370 = vld [vmem:[%s226 + $0x88] sm:$0xff]
        %v371 = vld [vmem:[%s226 + $0x90] sm:$0xff]
        %v372 = vld [vmem:[%s226 + $0x98] sm:$0xff]
        %v373 = vld [vmem:[%s226 + $0xa0] sm:$0xff]
        %v374 = vld [vmem:[%s226 + $0xa8] sm:$0xff]
        %v375 = vld [vmem:[%s226 + $0xb0] sm:$0xff]
        %v376 = vld [vmem:[%s226 + $0xb8] sm:$0xff]
        %v377 = vld [vmem:[%s226 + $0xc0] sm:$0xff]
        %v378 = vld [vmem:[%s226 + $0xc8] sm:$0xff]
        %v379 = vld [vmem:[%s226 + $0xd0] sm:$0xff]
        %v380 = vld [vmem:[%s226 + $0xd8] sm:$0xff]
        %v381 = vld [vmem:[%s226 + $0xe0] sm:$0xff]
        %v382 = vld [vmem:[%s226 + $0xe8] sm:$0xff]
        %v383 = vld [vmem:[%s226 + $0xf0] sm:$0xff]
        %v384 = vld [vmem:[%s226 + $0xf8] sm:$0xff]
        %v385 = vld [vmem:[%s235] sm:$0xf]
        %v386 = vld [vmem:[%s235 + $0x4] sm:$0xf]
        %v387 = vld [vmem:[%s235 + $0x8] sm:$0xf]
        %v388 = vld [vmem:[%s235 + $0xc] sm:$0xf]
        %v389 = vld [vmem:[%s235 + $0x10] sm:$0xf]
        %v390 = vld [vmem:[%s235 + $0x14] sm:$0xf]
        %v391 = vld [vmem:[%s235 + $0x18] sm:$0xf]
        %v392 = vld [vmem:[%s235 + $0x1c] sm:$0xf]
        %v393 = vld [vmem:[%s235 + $0x20] sm:$0xf]
        %v394 = vld [vmem:[%s235 + $0x24] sm:$0xf]
        %v395 = vld [vmem:[%s235 + $0x28] sm:$0xf]
        %v396 = vld [vmem:[%s235 + $0x2c] sm:$0xf]
        %v397 = vld [vmem:[%s235 + $0x30] sm:$0xf]
        %v398 = vld [vmem:[%s235 + $0x34] sm:$0xf]
        %v399 = vld [vmem:[%s235 + $0x38] sm:$0xf]
        %v400 = vld [vmem:[%s235 + $0x3c] sm:$0xf]
        %v401 = vld [vmem:[%s235 + $0x40] sm:$0xf]
        %v402 = vld [vmem:[%s235 + $0x44] sm:$0xf]
        %v403 = vld [vmem:[%s235 + $0x48] sm:$0xf]
        %v404 = vld [vmem:[%s235 + $0x4c] sm:$0xf]
        %v405 = vld [vmem:[%s235 + $0x50] sm:$0xf]
        %v406 = vld [vmem:[%s235 + $0x54] sm:$0xf]
        %v407 = vld [vmem:[%s235 + $0x58] sm:$0xf]
        %v408 = vld [vmem:[%s235 + $0x5c] sm:$0xf]
        %v409 = vld [vmem:[%s235 + $0x60] sm:$0xf]
        %v410 = vld [vmem:[%s235 + $0x64] sm:$0xf]
        %v411 = vld [vmem:[%s235 + $0x68] sm:$0xf]
        %v412 = vld [vmem:[%s235 + $0x6c] sm:$0xf]
        %v413 = vld [vmem:[%s235 + $0x70] sm:$0xf]
        %v414 = vld [vmem:[%s235 + $0x74] sm:$0xf]
        %v415 = vld [vmem:[%s235 + $0x78] sm:$0xf]
        %v416 = vld [vmem:[%s235 + $0x7c] sm:$0xf]
        %v449 = vunpack.c.l.b16 %v353
        %v450 = vunpack.c.h.b16 %v353
        %v451 = vunpack.c.l.b16 %v354
        %v452 = vunpack.c.h.b16 %v354
        %v453 = vunpack.c.l.b16 %v355
        %v454 = vunpack.c.h.b16 %v355
        %v455 = vunpack.c.l.b16 %v356
        %v456 = vunpack.c.h.b16 %v356
        %v457 = vunpack.c.l.b16 %v357
        %v458 = vunpack.c.h.b16 %v357
        %v459 = vunpack.c.l.b16 %v358
        %v460 = vunpack.c.h.b16 %v358
        %v461 = vunpack.c.l.b16 %v359
        %v462 = vunpack.c.h.b16 %v359
        %v463 = vunpack.c.l.b16 %v360
        %v464 = vunpack.c.h.b16 %v360
        %v465 = vunpack.c.l.b16 %v361
        %v466 = vunpack.c.h.b16 %v361
        %v467 = vunpack.c.l.b16 %v362
        %v468 = vunpack.c.h.b16 %v362
        %v469 = vunpack.c.l.b16 %v363
        %v470 = vunpack.c.h.b16 %v363
        %v471 = vunpack.c.l.b16 %v364
        %v472 = vunpack.c.h.b16 %v364
        %v473 = vunpack.c.l.b16 %v365
        %v474 = vunpack.c.h.b16 %v365
        %v475 = vunpack.c.l.b16 %v366
        %v476 = vunpack.c.h.b16 %v366
        %v477 = vunpack.c.l.b16 %v367
        %v478 = vunpack.c.h.b16 %v367
        %v479 = vunpack.c.l.b16 %v368
        %v480 = vunpack.c.h.b16 %v368
        %v481 = vunpack.c.l.b16 %v369
        %v482 = vunpack.c.h.b16 %v369
        %v483 = vunpack.c.l.b16 %v370
        %v484 = vunpack.c.h.b16 %v370
        %v485 = vunpack.c.l.b16 %v371
        %v486 = vunpack.c.h.b16 %v371
        %v487 = vunpack.c.l.b16 %v372
        %v488 = vunpack.c.h.b16 %v372
        %v489 = vunpack.c.l.b16 %v373
        %v490 = vunpack.c.h.b16 %v373
        %v491 = vunpack.c.l.b16 %v374
        %v492 = vunpack.c.h.b16 %v374
        %v493 = vunpack.c.l.b16 %v375
        %v494 = vunpack.c.h.b16 %v375
        %v495 = vunpack.c.l.b16 %v376
        %v496 = vunpack.c.h.b16 %v376
        %v497 = vunpack.c.l.b16 %v377
        %v498 = vunpack.c.h.b16 %v377
        %v499 = vunpack.c.l.b16 %v378
        %v500 = vunpack.c.h.b16 %v378
        %v501 = vunpack.c.l.b16 %v379
        %v502 = vunpack.c.h.b16 %v379
        %v503 = vunpack.c.l.b16 %v380
        %v504 = vunpack.c.h.b16 %v380
        %v505 = vunpack.c.l.b16 %v381
        %v506 = vunpack.c.h.b16 %v381
        %v507 = vunpack.c.l.b16 %v382
        %v508 = vunpack.c.h.b16 %v382
        %v509 = vunpack.c.l.b16 %v383
        %v510 = vunpack.c.h.b16 %v383
        %v511 = vunpack.c.l.b16 %v384
        %v512 = vunpack.c.h.b16 %v384
        %v513 = vpack.c.b16 %v451, %v449
        %v514 = vpack.c.b16 %v452, %v450
        %v515 = vpack.c.b16 %v455, %v453
        %v516 = vpack.c.b16 %v456, %v454
        %v517 = vpack.c.b16 %v459, %v457
        %v518 = vpack.c.b16 %v460, %v458
        %v519 = vpack.c.b16 %v463, %v461
        %v520 = vpack.c.b16 %v464, %v462
        %v521 = vpack.c.b16 %v467, %v465
        %v522 = vpack.c.b16 %v468, %v466
        %v523 = vpack.c.b16 %v471, %v469
        %v524 = vpack.c.b16 %v472, %v470
        %v525 = vpack.c.b16 %v475, %v473
        %v526 = vpack.c.b16 %v476, %v474
        %v527 = vpack.c.b16 %v479, %v477
        %v528 = vpack.c.b16 %v480, %v478
        %v529 = vpack.c.b16 %v483, %v481
        %v530 = vpack.c.b16 %v484, %v482
        %v531 = vpack.c.b16 %v487, %v485
        %v532 = vpack.c.b16 %v488, %v486
        %v533 = vpack.c.b16 %v491, %v489
        %v534 = vpack.c.b16 %v492, %v490
        %v535 = vpack.c.b16 %v495, %v493
        %v536 = vpack.c.b16 %v496, %v494
        %v537 = vpack.c.b16 %v499, %v497
        %v538 = vpack.c.b16 %v500, %v498
        %v539 = vpack.c.b16 %v503, %v501
        %v540 = vpack.c.b16 %v504, %v502
        %v541 = vpack.c.b16 %v507, %v505
        %v542 = vpack.c.b16 %v508, %v506
        %v543 = vpack.c.b16 %v511, %v509
        %v544 = vpack.c.b16 %v512, %v510
        %v609 = vunpack.c.l.b16 %v385
        %v610 = vunpack.c.l.b16 %v386
        %v611 = vunpack.c.l.b16 %v387
        %v612 = vunpack.c.l.b16 %v388
        %v613 = vunpack.c.l.b16 %v389
        %v614 = vunpack.c.l.b16 %v390
        %v615 = vunpack.c.l.b16 %v391
        %v616 = vunpack.c.l.b16 %v392
        %v617 = vunpack.c.l.b16 %v393
        %v618 = vunpack.c.l.b16 %v394
        %v619 = vunpack.c.l.b16 %v395
        %v620 = vunpack.c.l.b16 %v396
        %v621 = vunpack.c.l.b16 %v397
        %v622 = vunpack.c.l.b16 %v398
        %v623 = vunpack.c.l.b16 %v399
        %v624 = vunpack.c.l.b16 %v400
        %v625 = vunpack.c.l.b16 %v401
        %v626 = vunpack.c.l.b16 %v402
        %v627 = vunpack.c.l.b16 %v403
        %v628 = vunpack.c.l.b16 %v404
        %v629 = vunpack.c.l.b16 %v405
        %v630 = vunpack.c.l.b16 %v406
        %v631 = vunpack.c.l.b16 %v407
        %v632 = vunpack.c.l.b16 %v408
        %v633 = vunpack.c.l.b16 %v409
        %v634 = vunpack.c.l.b16 %v410
        %v635 = vunpack.c.l.b16 %v411
        %v636 = vunpack.c.l.b16 %v412
        %v637 = vunpack.c.l.b16 %v413
        %v638 = vunpack.c.l.b16 %v414
        %v639 = vunpack.c.l.b16 %v415
        %v640 = vunpack.c.l.b16 %v416
        %v641 = vpack.c.b16 %v610, %v609
        %v642 = vpack.c.b16 %v612, %v611
        %v643 = vpack.c.b16 %v614, %v613
        %v644 = vpack.c.b16 %v616, %v615
        %v645 = vpack.c.b16 %v618, %v617
        %v646 = vpack.c.b16 %v620, %v619
        %v647 = vpack.c.b16 %v622, %v621
        %v648 = vpack.c.b16 %v624, %v623
        %v649 = vpack.c.b16 %v626, %v625
        %v650 = vpack.c.b16 %v628, %v627
        %v651 = vpack.c.b16 %v630, %v629
        %v652 = vpack.c.b16 %v632, %v631
        %v653 = vpack.c.b16 %v634, %v633
        %v654 = vpack.c.b16 %v636, %v635
        %v655 = vpack.c.b16 %v638, %v637
        %v656 = vpack.c.b16 %v640, %v639
        %673 = vmatprep.subr.bf16.mxu0 0
        %674 = vmatpush1.bf16.msra.mxu0 %v641
        %675 = vmatprep.subr.bf16.mxu0 0
        %676 = vmatpush1.bf16.msra.mxu0 %v642
        %677 = vmatprep.subr.bf16.mxu0 0
        %678 = vmatpush1.bf16.msra.mxu0 %v643
        %679 = vmatprep.subr.bf16.mxu0 0
        %680 = vmatpush1.bf16.msra.mxu0 %v644
        %681 = vmatprep.subr.bf16.mxu0 0
        %682 = vmatpush1.bf16.msra.mxu0 %v645
        %683 = vmatprep.subr.bf16.mxu0 0
        %684 = vmatpush1.bf16.msra.mxu0 %v646
        %685 = vmatprep.subr.bf16.mxu0 0
        %686 = vmatpush1.bf16.msra.mxu0 %v647
        %687 = vmatprep.subr.bf16.mxu0 0
        %688 = vmatpush1.bf16.msra.mxu0 %v648
        %689 = vmatprep.subr.bf16.mxu0 0
        %690 = vmatpush1.bf16.msra.mxu0 %v649
        %691 = vmatprep.subr.bf16.mxu0 0
        %692 = vmatpush1.bf16.msra.mxu0 %v650
        %693 = vmatprep.subr.bf16.mxu0 0
        %694 = vmatpush1.bf16.msra.mxu0 %v651
        %695 = vmatprep.subr.bf16.mxu0 0
        %696 = vmatpush1.bf16.msra.mxu0 %v652
        %697 = vmatprep.subr.bf16.mxu0 0
        %698 = vmatpush1.bf16.msra.mxu0 %v653
        %699 = vmatprep.subr.bf16.mxu0 0
        %700 = vmatpush1.bf16.msra.mxu0 %v654
        %701 = vmatprep.subr.bf16.mxu0 0
        %702 = vmatpush1.bf16.msra.mxu0 %v655
        %703 = vmatprep.subr.bf16.mxu0 0
        %704 = vmatpush1.bf16.msra.mxu0 %v656
        %705 = vmatprep.mubr.bf16.mxu0 %v514
        %706 = vmatmul.mubr.bf16.gmra.mrb[0].mxu0 %v513
        %v707 = vpop.f32.mrb[0].mxu0
        %v708 = vadd.f32 0.0, %v707
        %v709 = vpop.f32.mrb[0].mxu0
        %v710 = vpop.f32.mrb[0].mxu0
        %v711 = vadd.f32 0.0, %v710
        %v712 = vpop.f32.mrb[0].mxu0
        %713 = vmatprep.mubr.bf16.mxu0 %v516
        %714 = vmatmul.mubr.bf16.gmra.mrb[0].mxu0 %v515
        %v715 = vpop.f32.mrb[0].mxu0
        %v716 = vadd.f32 0.0, %v715
        %v717 = vpop.f32.mrb[0].mxu0
        %v718 = vpop.f32.mrb[0].mxu0
        %v719 = vadd.f32 0.0, %v718
        %v720 = vpop.f32.mrb[0].mxu0
        %721 = vmatprep.mubr.bf16.mxu0 %v518
        %722 = vmatmul.mubr.bf16.gmra.mrb[0].mxu0 %v517
        %v723 = vpop.f32.mrb[0].mxu0
        %v724 = vadd.f32 0.0, %v723
        %v725 = vpop.f32.mrb[0].mxu0
        %v726 = vpop.f32.mrb[0].mxu0
        %v727 = vadd.f32 0.0, %v726
        %v728 = vpop.f32.mrb[0].mxu0
        %729 = vmatprep.mubr.bf16.mxu0 %v520
        %730 = vmatmul.mubr.bf16.gmra.mrb[0].mxu0 %v519
        %v731 = vpop.f32.mrb[0].mxu0
        %v732 = vadd.f32 0.0, %v731
        %v733 = vpop.f32.mrb[0].mxu0
        %v734 = vpop.f32.mrb[0].mxu0
        %v735 = vadd.f32 0.0, %v734
        %v736 = vpop.f32.mrb[0].mxu0
        %737 = vmatprep.mubr.bf16.mxu0 %v522
        %738 = vmatmul.mubr.bf16.gmra.mrb[0].mxu0 %v521
        %v739 = vpop.f32.mrb[0].mxu0
        %v740 = vadd.f32 0.0, %v739
        %v741 = vpop.f32.mrb[0].mxu0
        %v742 = vpop.f32.mrb[0].mxu0
        %v743 = vadd.f32 0.0, %v742
        %v744 = vpop.f32.mrb[0].mxu0
        %745 = vmatprep.mubr.bf16.mxu0 %v524
        %746 = vmatmul.mubr.bf16.gmra.mrb[0].mxu0 %v523
        %v747 = vpop.f32.mrb[0].mxu0
        %v748 = vadd.f32 0.0, %v747
        %v749 = vpop.f32.mrb[0].mxu0
        %v750 = vpop.f32.mrb[0].mxu0
        %v751 = vadd.f32 0.0, %v750
        %v752 = vpop.f32.mrb[0].mxu0
        %753 = vmatprep.mubr.bf16.mxu0 %v526
        %754 = vmatmul.mubr.bf16.gmra.mrb[0].mxu0 %v525
        %v755 = vpop.f32.mrb[0].mxu0
        %v756 = vadd.f32 0.0, %v755
        %v757 = vpop.f32.mrb[0].mxu0
        %v758 = vpop.f32.mrb[0].mxu0
        %v759 = vadd.f32 0.0, %v758
        %v760 = vpop.f32.mrb[0].mxu0
        %761 = vmatprep.mubr.bf16.mxu0 %v528
        %762 = vmatmul.mubr.bf16.gmra.mrb[0].mxu0 %v527
        %v763 = vpop.f32.mrb[0].mxu0
        %v764 = vadd.f32 0.0, %v763
        %v765 = vpop.f32.mrb[0].mxu0
        %v766 = vpop.f32.mrb[0].mxu0
        %v767 = vadd.f32 0.0, %v766
        %v768 = vpop.f32.mrb[0].mxu0
        %769 = vmatprep.mubr.bf16.mxu0 %v530
        %770 = vmatmul.mubr.bf16.gmra.mrb[0].mxu0 %v529
        %v771 = vpop.f32.mrb[0].mxu0
        %v772 = vadd.f32 0.0, %v771
        %v773 = vpop.f32.mrb[0].mxu0
        %v774 = vpop.f32.mrb[0].mxu0
        %v775 = vadd.f32 0.0, %v774
        %v776 = vpop.f32.mrb[0].mxu0
        %777 = vmatprep.mubr.bf16.mxu0 %v532
        %778 = vmatmul.mubr.bf16.gmra.mrb[0].mxu0 %v531
        %v779 = vpop.f32.mrb[0].mxu0
        %v780 = vadd.f32 0.0, %v779
        %v781 = vpop.f32.mrb[0].mxu0
        %v782 = vpop.f32.mrb[0].mxu0
        %v783 = vadd.f32 0.0, %v782
        %v784 = vpop.f32.mrb[0].mxu0
        %785 = vmatprep.mubr.bf16.mxu0 %v534
        %786 = vmatmul.mubr.bf16.gmra.mrb[0].mxu0 %v533
        %v787 = vpop.f32.mrb[0].mxu0
        %v788 = vadd.f32 0.0, %v787
        %v789 = vpop.f32.mrb[0].mxu0
        %v790 = vpop.f32.mrb[0].mxu0
        %v791 = vadd.f32 0.0, %v790
        %v792 = vpop.f32.mrb[0].mxu0
        %793 = vmatprep.mubr.bf16.mxu0 %v536
        %794 = vmatmul.mubr.bf16.gmra.mrb[0].mxu0 %v535
        %v795 = vpop.f32.mrb[0].mxu0
        %v796 = vadd.f32 0.0, %v795
        %v797 = vpop.f32.mrb[0].mxu0
        %v798 = vpop.f32.mrb[0].mxu0
        %v799 = vadd.f32 0.0, %v798
        %v800 = vpop.f32.mrb[0].mxu0
        %801 = vmatprep.mubr.bf16.mxu0 %v538
        %802 = vmatmul.mubr.bf16.gmra.mrb[0].mxu0 %v537
        %v803 = vpop.f32.mrb[0].mxu0
        %v804 = vadd.f32 0.0, %v803
        %v805 = vpop.f32.mrb[0].mxu0
        %v806 = vpop.f32.mrb[0].mxu0
        %v807 = vadd.f32 0.0, %v806
        %v808 = vpop.f32.mrb[0].mxu0
        %809 = vmatprep.mubr.bf16.mxu0 %v540
        %810 = vmatmul.mubr.bf16.gmra.mrb[0].mxu0 %v539
        %v811 = vpop.f32.mrb[0].mxu0
        %v812 = vadd.f32 0.0, %v811
        %v813 = vpop.f32.mrb[0].mxu0
        %v814 = vpop.f32.mrb[0].mxu0
        %v815 = vadd.f32 0.0, %v814
        %v816 = vpop.f32.mrb[0].mxu0
        %817 = vmatprep.mubr.bf16.mxu0 %v542
        %818 = vmatmul.mubr.bf16.gmra.mrb[0].mxu0 %v541
        %v819 = vpop.f32.mrb[0].mxu0
        %v820 = vadd.f32 0.0, %v819
        %v821 = vpop.f32.mrb[0].mxu0
        %v822 = vpop.f32.mrb[0].mxu0
        %v823 = vadd.f32 0.0, %v822
        %v824 = vpop.f32.mrb[0].mxu0
        %825 = vmatprep.mubr.bf16.mxu0 %v544
        %826 = vmatmul.mubr.bf16.gmra.mrb[0].mxu0 %v543
        %v827 = vpop.f32.mrb[0].mxu0
        %v828 = vadd.f32 0.0, %v827
        %v829 = vpop.f32.mrb[0].mxu0
        %v830 = vpop.f32.mrb[0].mxu0
        %v831 = vadd.f32 0.0, %v830
        %v832 = vpop.f32.mrb[0].mxu0
        %833 = vdwg.mxu0
        %v834 = vadd.f32 %v321, %v708
        %v835 = vadd.f32 %v322, %v711
        %v836 = vadd.f32 %v323, %v716
        %v837 = vadd.f32 %v324, %v719
        %v838 = vadd.f32 %v325, %v724
        %v839 = vadd.f32 %v326, %v727
        %v840 = vadd.f32 %v327, %v732
        %v841 = vadd.f32 %v328, %v735
        %v842 = vadd.f32 %v329, %v740
        %v843 = vadd.f32 %v330, %v743
        %v844 = vadd.f32 %v331, %v748
        %v845 = vadd.f32 %v332, %v751
        %v846 = vadd.f32 %v333, %v756
        %v847 = vadd.f32 %v334, %v759
        %v848 = vadd.f32 %v335, %v764
        %v849 = vadd.f32 %v336, %v767
        %v850 = vadd.f32 %v337, %v772
        %v851 = vadd.f32 %v338, %v775
        %v852 = vadd.f32 %v339, %v780
        %v853 = vadd.f32 %v340, %v783
        %v854 = vadd.f32 %v341, %v788
        %v855 = vadd.f32 %v342, %v791
        %v856 = vadd.f32 %v343, %v796
        %v857 = vadd.f32 %v344, %v799
        %v858 = vadd.f32 %v345, %v804
        %v859 = vadd.f32 %v346, %v807
        %v860 = vadd.f32 %v347, %v812
        %v861 = vadd.f32 %v348, %v815
        %v862 = vadd.f32 %v349, %v820
        %v863 = vadd.f32 %v350, %v823
        %v864 = vadd.f32 %v351, %v828
        %v865 = vadd.f32 %v352, %v831
        %866 = vst [vmem:[#allocation2] sm:$0xff] %v834
        %867 = vst [vmem:[#allocation2 + $0x8] sm:$0xff] %v835
        %868 = vst [vmem:[#allocation2 + $0x10] sm:$0xff] %v836
        %869 = vst [vmem:[#allocation2 + $0x18] sm:$0xff] %v837
        %870 = vst [vmem:[#allocation2 + $0x20] sm:$0xff] %v838
        %871 = vst [vmem:[#allocation2 + $0x28] sm:$0xff] %v839
        %872 = vst [vmem:[#allocation2 + $0x30] sm:$0xff] %v840
        %873 = vst [vmem:[#allocation2 + $0x38] sm:$0xff] %v841
        %874 = vst [vmem:[#allocation2 + $0x40] sm:$0xff] %v842
        %875 = vst [vmem:[#allocation2 + $0x48] sm:$0xff] %v843
        %876 = vst [vmem:[#allocation2 + $0x50] sm:$0xff] %v844
        %877 = vst [vmem:[#allocation2 + $0x58] sm:$0xff] %v845
        %878 = vst [vmem:[#allocation2 + $0x60] sm:$0xff] %v846
        %879 = vst [vmem:[#allocation2 + $0x68] sm:$0xff] %v847
        %880 = vst [vmem:[#allocation2 + $0x70] sm:$0xff] %v848
        %881 = vst [vmem:[#allocation2 + $0x78] sm:$0xff] %v849
        %882 = vst [vmem:[#allocation2 + $0x80] sm:$0xff] %v850
        %883 = vst [vmem:[#allocation2 + $0x88] sm:$0xff] %v851
        %884 = vst [vmem:[#allocation2 + $0x90] sm:$0xff] %v852
        %885 = vst [vmem:[#allocation2 + $0x98] sm:$0xff] %v853
        %886 = vst [vmem:[#allocation2 + $0xa0] sm:$0xff] %v854
        %887 = vst [vmem:[#allocation2 + $0xa8] sm:$0xff] %v855
        %888 = vst [vmem:[#allocation2 + $0xb0] sm:$0xff] %v856
        %889 = vst [vmem:[#allocation2 + $0xb8] sm:$0xff] %v857
        %890 = vst [vmem:[#allocation2 + $0xc0] sm:$0xff] %v858
        %891 = vst [vmem:[#allocation2 + $0xc8] sm:$0xff] %v859
        %892 = vst [vmem:[#allocation2 + $0xd0] sm:$0xff] %v860
        %893 = vst [vmem:[#allocation2 + $0xd8] sm:$0xff] %v861
        %894 = vst [vmem:[#allocation2 + $0xe0] sm:$0xff] %v862
        %895 = vst [vmem:[#allocation2 + $0xe8] sm:$0xff] %v863
        %896 = vst [vmem:[#allocation2 + $0xf0] sm:$0xff] %v864
        %897 = vst [vmem:[#allocation2 + $0xf8] sm:$0xff] %v865
        %p898 = scmp.eq.s32.totalorder %s27, 1
        // Predicated region
        $region45: #{_gconv_forward.4} parent=31 // pred_check
          %p899 = pneg %p898
        $region46: #{_gconv_forward.4} parent=31 // pred_check_branch
          %901 = sbr.rel (%p899) target = $region48
        $region47: #{_gconv_forward.4} parent=31 // pred_region
          %v902 = vld [vmem:[#allocation2] sm:$0xff]
          %v903 = vld [vmem:[#allocation2 + $0x8] sm:$0xff]
          %v904 = vld [vmem:[#allocation2 + $0x10] sm:$0xff]
          %v905 = vld [vmem:[#allocation2 + $0x18] sm:$0xff]
          %v906 = vld [vmem:[#allocation2 + $0x20] sm:$0xff]
          %v907 = vld [vmem:[#allocation2 + $0x28] sm:$0xff]
          %v908 = vld [vmem:[#allocation2 + $0x30] sm:$0xff]
          %v909 = vld [vmem:[#allocation2 + $0x38] sm:$0xff]
          %v910 = vld [vmem:[#allocation2 + $0x40] sm:$0xff]
          %v911 = vld [vmem:[#allocation2 + $0x48] sm:$0xff]
          %v912 = vld [vmem:[#allocation2 + $0x50] sm:$0xff]
          %v913 = vld [vmem:[#allocation2 + $0x58] sm:$0xff]
          %v914 = vld [vmem:[#allocation2 + $0x60] sm:$0xff]
          %v915 = vld [vmem:[#allocation2 + $0x68] sm:$0xff]
          %v916 = vld [vmem:[#allocation2 + $0x70] sm:$0xff]
          %v917 = vld [vmem:[#allocation2 + $0x78] sm:$0xff]
          %v918 = vld [vmem:[#allocation2 + $0x80] sm:$0xff]
          %v919 = vld [vmem:[#allocation2 + $0x88] sm:$0xff]
          %v920 = vld [vmem:[#allocation2 + $0x90] sm:$0xff]
          %v921 = vld [vmem:[#allocation2 + $0x98] sm:$0xff]
          %v922 = vld [vmem:[#allocation2 + $0xa0] sm:$0xff]
          %v923 = vld [vmem:[#allocation2 + $0xa8] sm:$0xff]
          %v924 = vld [vmem:[#allocation2 + $0xb0] sm:$0xff]
          %v925 = vld [vmem:[#allocation2 + $0xb8] sm:$0xff]
          %v926 = vld [vmem:[#allocation2 + $0xc0] sm:$0xff]
          %v927 = vld [vmem:[#allocation2 + $0xc8] sm:$0xff]
          %v928 = vld [vmem:[#allocation2 + $0xd0] sm:$0xff]
          %v929 = vld [vmem:[#allocation2 + $0xd8] sm:$0xff]
          %v930 = vld [vmem:[#allocation2 + $0xe0] sm:$0xff]
          %v931 = vld [vmem:[#allocation2 + $0xe8] sm:$0xff]
          %v932 = vld [vmem:[#allocation2 + $0xf0] sm:$0xff]
          %v933 = vld [vmem:[#allocation2 + $0xf8] sm:$0xff]
          %v934 = vld [vmem:[%s274] sm:$0x1]
          %v936 = vlaneseq
          %v937 = vshrl.u32 %v936, 7
          %v938 = vsub.s32 0, %v937
          %v939 = vrot.slane %v934, %v938
          %v941 = vadd.f32 %v902, %v939
          %v942 = vadd.f32 %v903, %v939
          %v943 = vadd.f32 %v904, %v939
          %v944 = vadd.f32 %v905, %v939
          %v945 = vadd.f32 %v906, %v939
          %v946 = vadd.f32 %v907, %v939
          %v947 = vadd.f32 %v908, %v939
          %v948 = vadd.f32 %v909, %v939
          %v949 = vadd.f32 %v910, %v939
          %v950 = vadd.f32 %v911, %v939
          %v951 = vadd.f32 %v912, %v939
          %v952 = vadd.f32 %v913, %v939
          %v953 = vadd.f32 %v914, %v939
          %v954 = vadd.f32 %v915, %v939
          %v955 = vadd.f32 %v916, %v939
          %v956 = vadd.f32 %v917, %v939
          %v957 = vadd.f32 %v918, %v939
          %v958 = vadd.f32 %v919, %v939
          %v959 = vadd.f32 %v920, %v939
          %v960 = vadd.f32 %v921, %v939
          %v961 = vadd.f32 %v922, %v939
          %v962 = vadd.f32 %v923, %v939
          %v963 = vadd.f32 %v924, %v939
          %v964 = vadd.f32 %v925, %v939
          %v965 = vadd.f32 %v926, %v939
          %v966 = vadd.f32 %v927, %v939
          %v967 = vadd.f32 %v928, %v939
          %v968 = vadd.f32 %v929, %v939
          %v969 = vadd.f32 %v930, %v939
          %v970 = vadd.f32 %v931, %v939
          %v971 = vadd.f32 %v932, %v939
          %v972 = vadd.f32 %v933, %v939
          %v973 = vpack.c.bf16 %v942, %v941
          %v974 = vpack.c.bf16 %v944, %v943
          %v975 = vpack.c.bf16 %v946, %v945
          %v976 = vpack.c.bf16 %v948, %v947
          %v977 = vpack.c.bf16 %v950, %v949
          %v978 = vpack.c.bf16 %v952, %v951
          %v979 = vpack.c.bf16 %v954, %v953
          %v980 = vpack.c.bf16 %v956, %v955
          %v981 = vpack.c.bf16 %v958, %v957
          %v982 = vpack.c.bf16 %v960, %v959
          %v983 = vpack.c.bf16 %v962, %v961
          %v984 = vpack.c.bf16 %v964, %v963
          %v985 = vpack.c.bf16 %v966, %v965
          %v986 = vpack.c.bf16 %v968, %v967
          %v987 = vpack.c.bf16 %v970, %v969
          %v988 = vpack.c.bf16 %v972, %v971
          %v1005 = vunpack.c.l.b16 %v973
          %v1006 = vunpack.c.h.b16 %v973
          %v1007 = vunpack.c.l.b16 %v974
          %v1008 = vunpack.c.h.b16 %v974
          %v1009 = vunpack.c.l.b16 %v975
          %v1010 = vunpack.c.h.b16 %v975
          %v1011 = vunpack.c.l.b16 %v976
          %v1012 = vunpack.c.h.b16 %v976
          %v1013 = vunpack.c.l.b16 %v977
          %v1014 = vunpack.c.h.b16 %v977
          %v1015 = vunpack.c.l.b16 %v978
          %v1016 = vunpack.c.h.b16 %v978
          %v1017 = vunpack.c.l.b16 %v979
          %v1018 = vunpack.c.h.b16 %v979
          %v1019 = vunpack.c.l.b16 %v980
          %v1020 = vunpack.c.h.b16 %v980
          %v1021 = vunpack.c.l.b16 %v981
          %v1022 = vunpack.c.h.b16 %v981
          %v1023 = vunpack.c.l.b16 %v982
          %v1024 = vunpack.c.h.b16 %v982
          %v1025 = vunpack.c.l.b16 %v983
          %v1026 = vunpack.c.h.b16 %v983
          %v1027 = vunpack.c.l.b16 %v984
          %v1028 = vunpack.c.h.b16 %v984
          %v1029 = vunpack.c.l.b16 %v985
          %v1030 = vunpack.c.h.b16 %v985
          %v1031 = vunpack.c.l.b16 %v986
          %v1032 = vunpack.c.h.b16 %v986
          %v1033 = vunpack.c.l.b16 %v987
          %v1034 = vunpack.c.h.b16 %v987
          %v1035 = vunpack.c.l.b16 %v988
          %v1036 = vunpack.c.h.b16 %v988
          %v1037 = vpack.c.b16 %v1005, %v1005
          %v1038 = vpack.c.b16 %v1006, %v1006
          %v1039 = vpack.c.b16 %v1007, %v1007
          %v1040 = vpack.c.b16 %v1008, %v1008
          %v1041 = vpack.c.b16 %v1009, %v1009
          %v1042 = vpack.c.b16 %v1010, %v1010
          %v1043 = vpack.c.b16 %v1011, %v1011
          %v1044 = vpack.c.b16 %v1012, %v1012
          %v1045 = vpack.c.b16 %v1013, %v1013
          %v1046 = vpack.c.b16 %v1014, %v1014
          %v1047 = vpack.c.b16 %v1015, %v1015
          %v1048 = vpack.c.b16 %v1016, %v1016
          %v1049 = vpack.c.b16 %v1017, %v1017
          %v1050 = vpack.c.b16 %v1018, %v1018
          %v1051 = vpack.c.b16 %v1019, %v1019
          %v1052 = vpack.c.b16 %v1020, %v1020
          %v1053 = vpack.c.b16 %v1021, %v1021
          %v1054 = vpack.c.b16 %v1022, %v1022
          %v1055 = vpack.c.b16 %v1023, %v1023
          %v1056 = vpack.c.b16 %v1024, %v1024
          %v1057 = vpack.c.b16 %v1025, %v1025
          %v1058 = vpack.c.b16 %v1026, %v1026
          %v1059 = vpack.c.b16 %v1027, %v1027
          %v1060 = vpack.c.b16 %v1028, %v1028
          %v1061 = vpack.c.b16 %v1029, %v1029
          %v1062 = vpack.c.b16 %v1030, %v1030
          %v1063 = vpack.c.b16 %v1031, %v1031
          %v1064 = vpack.c.b16 %v1032, %v1032
          %v1065 = vpack.c.b16 %v1033, %v1033
          %v1066 = vpack.c.b16 %v1034, %v1034
          %v1067 = vpack.c.b16 %v1035, %v1035
          %v1068 = vpack.c.b16 %v1036, %v1036
          %1101 = vst [vmem:[%s282] sm:$0xf] %v1037
          %1102 = vst [vmem:[%s282 + $0x4] sm:$0xf] %v1038
          %1103 = vst [vmem:[%s282 + $0x8] sm:$0xf] %v1039
          %1104 = vst [vmem:[%s282 + $0xc] sm:$0xf] %v1040
          %1105 = vst [vmem:[%s282 + $0x10] sm:$0xf] %v1041
          %1106 = vst [vmem:[%s282 + $0x14] sm:$0xf] %v1042
          %1107 = vst [vmem:[%s282 + $0x18] sm:$0xf] %v1043
          %1108 = vst [vmem:[%s282 + $0x1c] sm:$0xf] %v1044
          %1109 = vst [vmem:[%s282 + $0x20] sm:$0xf] %v1045
          %1110 = vst [vmem:[%s282 + $0x24] sm:$0xf] %v1046
          %1111 = vst [vmem:[%s282 + $0x28] sm:$0xf] %v1047
          %1112 = vst [vmem:[%s282 + $0x2c] sm:$0xf] %v1048
          %1113 = vst [vmem:[%s282 + $0x30] sm:$0xf] %v1049
          %1114 = vst [vmem:[%s282 + $0x34] sm:$0xf] %v1050
          %1115 = vst [vmem:[%s282 + $0x38] sm:$0xf] %v1051
          %1116 = vst [vmem:[%s282 + $0x3c] sm:$0xf] %v1052
          %1117 = vst [vmem:[%s282 + $0x40] sm:$0xf] %v1053
          %1118 = vst [vmem:[%s282 + $0x44] sm:$0xf] %v1054
          %1119 = vst [vmem:[%s282 + $0x48] sm:$0xf] %v1055
          %1120 = vst [vmem:[%s282 + $0x4c] sm:$0xf] %v1056
          %1121 = vst [vmem:[%s282 + $0x50] sm:$0xf] %v1057
          %1122 = vst [vmem:[%s282 + $0x54] sm:$0xf] %v1058
          %1123 = vst [vmem:[%s282 + $0x58] sm:$0xf] %v1059
          %1124 = vst [vmem:[%s282 + $0x5c] sm:$0xf] %v1060
          %1125 = vst [vmem:[%s282 + $0x60] sm:$0xf] %v1061
          %1126 = vst [vmem:[%s282 + $0x64] sm:$0xf] %v1062
          %1127 = vst [vmem:[%s282 + $0x68] sm:$0xf] %v1063
          %1128 = vst [vmem:[%s282 + $0x6c] sm:$0xf] %v1064
          %1129 = vst [vmem:[%s282 + $0x70] sm:$0xf] %v1065
          %1130 = vst [vmem:[%s282 + $0x74] sm:$0xf] %v1066
          %1131 = vst [vmem:[%s282 + $0x78] sm:$0xf] %v1067
          %1132 = vst [vmem:[%s282 + $0x7c] sm:$0xf] %v1068
        $region48: #{_gconv_forward.4} parent=31 // pred_fallthru
          _
        %s1133 = smul.u32 32, %s25
        %p1134 = scmp.lt.s32.totalorder %s1133, 63
        %s1135 = scalar_select %p1134, %s1133, 63
        %p1136 = scmp.lt.s32.totalorder %s26, 0
        %s1137 = scalar_select %p1136, %s26, 0
        %s1138 = sadd.s32 %s1137, %s1135
        %s1139 = smul.addr %s1138, 4
        %s1140 = scalar_lea.vmem %s3, %s1139
        // Predicated region
        $region49: #{_gconv_forward.4} parent=31 // pred_check
          %p1141 = pneg %p141
        $region50: #{_gconv_forward.4} parent=31 // pred_check_branch
          %1143 = sbr.rel (%p1141) target = $region52
        $region51: #{_gconv_forward.4} parent=31 // pred_region
          %s1144 = smul.u32 32, %s25
        $region52: #{_gconv_forward.4} parent=31 // pred_fallthru
          _
      $region32: #{_gconv_forward.4} parent=5 // pred_fallthru
        _
      %p1145 = scmp.le.s32.totalorder 2, %s15
      // Predicated region
      $region53: #{_gconv_forward.4} parent=5 // pred_check
        %p1146 = pneg %p1145
      $region54: #{_gconv_forward.4} parent=5 // pred_check_branch
        %1148 = sbr.rel (%p1146) target = $region56
      $region55: #{_gconv_forward.4} parent=5 // pred_region
        %s1149 = ssub.s32 %s15, 2
        // Predicated region
        $region57: #{_gconv_forward.4} parent=55 // pred_check
          %p1150 = pneg %p147
        $region58: #{_gconv_forward.4} parent=55 // pred_check_branch
          %1152 = sbr.rel (%p1150) target = $region60
        $region59: #{_gconv_forward.4} parent=55 // pred_region
          %s1153 = smul.u32 32, %s28
          %p1154 = scmp.lt.s32.totalorder %s1153, 63
          %s1155 = scalar_select %p1154, %s1153, 63
          %p1156 = scmp.lt.s32.totalorder %s29, 0
          %s1157 = scalar_select %p1156, %s29, 0
          %s1158 = sadd.s32 %s1157, %s1155
          %s1159 = smul.addr %s1158, 4
          %s1160 = scalar_lea.vmem %s3, %s1159
        $region60: #{_gconv_forward.4} parent=55 // pred_fallthru
          _
      $region56: #{_gconv_forward.4} parent=5 // pred_fallthru
        _
    $region6: #{_gconv_forward.4} parent=1 // loop_footer
      %s19 = sadd.s32 1, %s15
    $region7: #{_gconv_forward.4} parent=1 // loop_footer_branch
      %14 = sbr.rel target = $region3
    $region8: #{_gconv_forward.4} parent=1 // loop_exit
      _
    %1161 = vsyncpa [#allocation4], 1
    %s1162 = scalar_lea.sflag [#allocation4], 1
    %1163 = vsyncpa %s1162, 1
    %1164 = vsyncpa [#allocation6], 1
    %s1165 = scalar_lea.sflag [#allocation6], 1
    %1166 = vsyncpa %s1165, 1

// kernel: _gconv_forward.5
$region0: #{_gconv_forward.5}
  #allocation0 [shape = 'u32[]', space=smem, size = 0x4, offset = 0x4, fixed_abs, tag = 'smem constant byte address 0x4 - core index']
  #allocation1 [shape = 'u32[144,128]{1,0:T(1,128)}', space=vmem, size = 0x12000, scoped, tag = 'internal scratch']
  %s0 = inlined_call_operand.vmem [shape: bf16[512,128], index: 0, kind: input, shape index: {}]
  %s1 = inlined_call_operand.vmem [shape: bf16[128,128], index: 1, kind: input, shape index: {}]
  %s2 = inlined_call_operand.vmem [shape: f32[1,128], index: 2, kind: input, shape index: {}]
  %s3 = inlined_call_operand.vmem [shape: f32[512,128], index: 3, kind: output, shape index: {0}]
  %s4 = inlined_call_operand.vmem [shape: f32[1,128], index: 4, kind: output, shape index: {1}]
  %s5 = inlined_call_operand.vmem [shape: f32[1,128], index: 5, kind: output, shape index: {2}]
  %6 = xla_tuple %s3, %s4, %s5
  %s7 = sld [smem:[#allocation0]]
  $region65: #{_gconv_forward.5} parent=0
    _
  %s9 = ssub.s32 1, %s7
  %s10 = scalar_select 0, %s9, %s7
  loop: start=0, step=1, limit=4
  $region2: #{_gconv_forward.5} parent=0 // loop_pre_header
    _
  $region3: #{_gconv_forward.5} parent=0 // loop_header
    %s12 = sphi 0, %s16
    %p13 = scmp.ge.s32.totalorder %s12, 4
    %s22 = sphi 0, %s24
    %s25 = sphi 0, %s22
    %s26 = sphi 0, %s25
    %s42 = sphi 0, %s26
    %s46 = sphi 0, %s46
    %s48 = sphi 0, %s46
    %s49 = sphi 0, %s48
    %s63 = sphi 0, %s49
    %s67 = sphi 0, %s67
    %s69 = sphi 0, %s67
    %s70 = sphi 0, %s69
    %s84 = sphi 0, %s70
    %s90 = sphi 0, %s92
    %s93 = sphi 0, %s90
    %s94 = sphi 0, %s93
    %s110 = sphi 0, %s94
    %s114 = sphi 0, %s114
    %s116 = sphi 0, %s114
    %s117 = sphi 0, %s116
    %s131 = sphi 0, %s117
    %s135 = sphi 0, %s135
    %s137 = sphi 0, %s135
    %s138 = sphi 0, %s137
    %s152 = sphi 0, %s138
  $region4: #{_gconv_forward.5} parent=0 // loop_header_branch
    %15 = sbr.rel (%p13) target = $region8
  $region5: #{_gconv_forward.5} parent=0 // loop_body
    %s17 = ssub.s32 %s12, 1
    %s18 = ssub.s32 %s12, 2
    %s19 = sadd.s32 %s12, 1
    %s20 = ssub.s32 %s12, %s19
    %p21 = scmp.eq.s32.totalorder %s20, 0
    %s23 = sadd.s32 %s22, 1
    %s24 = scalar_select %p21, %s22, %s23
    %p27 = pneg %p21
    %p28 = scmp.eq.s32.totalorder %s12, 1
    %p29 = por %p27, %p28
    %p30 = scmp.ne.s32.totalorder %s22, %s25
    %p31 = scmp.eq.s32.totalorder %s12, 0
    %p32 = por %p30, %p31
    %p33 = scmp.ne.s32.totalorder %s22, %s25
    %p34 = scmp.eq.s32.totalorder %s17, 1
    %p35 = por %p33, %p34
    %p36 = scmp.ne.s32.totalorder %s25, %s26
    %p37 = scmp.eq.s32.totalorder %s17, 0
    %p38 = por %p36, %p37
    %p39 = scmp.ne.s32.totalorder %s25, %s26
    %p40 = scmp.eq.s32.totalorder %s18, 1
    %p41 = por %p39, %p40
    %p43 = scmp.ne.s32.totalorder %s26, %s42
    %p44 = scmp.eq.s32.totalorder %s18, 0
    %p45 = por %p43, %p44
    %s47 = sadd.s32 %s46, 1
    %p50 = scmp.eq.s32.totalorder %s12, 1
    %p51 = scmp.ne.s32.totalorder %s46, %s48
    %p52 = scmp.eq.s32.totalorder %s12, 0
    %p53 = por %p51, %p52
    %p54 = scmp.ne.s32.totalorder %s46, %s48
    %p55 = scmp.eq.s32.totalorder %s17, 1
    %p56 = por %p54, %p55
    %p57 = scmp.ne.s32.totalorder %s48, %s49
    %p58 = scmp.eq.s32.totalorder %s17, 0
    %p59 = por %p57, %p58
    %p60 = scmp.ne.s32.totalorder %s48, %s49
    %p61 = scmp.eq.s32.totalorder %s18, 1
    %p62 = por %p60, %p61
    %p64 = scmp.ne.s32.totalorder %s49, %s63
    %p65 = scmp.eq.s32.totalorder %s18, 0
    %p66 = por %p64, %p65
    %s68 = sadd.s32 %s67, 1
    %p71 = scmp.eq.s32.totalorder %s12, 1
    %p72 = scmp.ne.s32.totalorder %s67, %s69
    %p73 = scmp.eq.s32.totalorder %s12, 0
    %p74 = por %p72, %p73
    %p75 = scmp.ne.s32.totalorder %s67, %s69
    %p76 = scmp.eq.s32.totalorder %s17, 1
    %p77 = por %p75, %p76
    %p78 = scmp.ne.s32.totalorder %s69, %s70
    %p79 = scmp.eq.s32.totalorder %s17, 0
    %p80 = por %p78, %p79
    %p81 = scmp.ne.s32.totalorder %s69, %s70
    %p82 = scmp.eq.s32.totalorder %s18, 1
    %p83 = por %p81, %p82
    %p85 = scmp.ne.s32.totalorder %s70, %s84
    %p86 = scmp.eq.s32.totalorder %s18, 0
    %p87 = por %p85, %p86
    %s88 = ssub.s32 %s12, %s19
    %p89 = scmp.eq.s32.totalorder %s88, 0
    %s91 = sadd.s32 %s90, 1
    %s92 = scalar_select %p89, %s90, %s91
    %p95 = pneg %p89
    %p96 = scmp.eq.s32.totalorder %s12, 1
    %p97 = por %p95, %p96
    %p98 = scmp.ne.s32.totalorder %s90, %s93
    %p99 = scmp.eq.s32.totalorder %s12, 0
    %p100 = por %p98, %p99
    %p101 = scmp.ne.s32.totalorder %s90, %s93
    %p102 = scmp.eq.s32.totalorder %s17, 1
    %p103 = por %p101, %p102
    %p104 = scmp.ne.s32.totalorder %s93, %s94
    %p105 = scmp.eq.s32.totalorder %s17, 0
    %p106 = por %p104, %p105
    %p107 = scmp.ne.s32.totalorder %s93, %s94
    %p108 = scmp.eq.s32.totalorder %s18, 1
    %p109 = por %p107, %p108
    %p111 = scmp.ne.s32.totalorder %s94, %s110
    %p112 = scmp.eq.s32.totalorder %s18, 0
    %p113 = por %p111, %p112
    %s115 = sadd.s32 %s114, 1
    %p118 = scmp.eq.s32.totalorder %s12, 1
    %p119 = scmp.ne.s32.totalorder %s114, %s116
    %p120 = scmp.eq.s32.totalorder %s12, 0
    %p121 = por %p119, %p120
    %p122 = scmp.ne.s32.totalorder %s114, %s116
    %p123 = scmp.eq.s32.totalorder %s17, 1
    %p124 = por %p122, %p123
    %p125 = scmp.ne.s32.totalorder %s116, %s117
    %p126 = scmp.eq.s32.totalorder %s17, 0
    %p127 = por %p125, %p126
    %p128 = scmp.ne.s32.totalorder %s116, %s117
    %p129 = scmp.eq.s32.totalorder %s18, 1
    %p130 = por %p128, %p129
    %p132 = scmp.ne.s32.totalorder %s117, %s131
    %p133 = scmp.eq.s32.totalorder %s18, 0
    %p134 = por %p132, %p133
    %s136 = sadd.s32 %s135, 1
    %p139 = scmp.eq.s32.totalorder %s12, 1
    %p140 = scmp.ne.s32.totalorder %s135, %s137
    %p141 = scmp.eq.s32.totalorder %s12, 0
    %p142 = por %p140, %p141
    %p143 = scmp.ne.s32.totalorder %s135, %s137
    %p144 = scmp.eq.s32.totalorder %s17, 1
    %p145 = por %p143, %p144
    %p146 = scmp.ne.s32.totalorder %s137, %s138
    %p147 = scmp.eq.s32.totalorder %s17, 0
    %p148 = por %p146, %p147
    %p149 = scmp.ne.s32.totalorder %s137, %s138
    %p150 = scmp.eq.s32.totalorder %s18, 1
    %p151 = por %p149, %p150
    %p153 = scmp.ne.s32.totalorder %s138, %s152
    %p154 = scmp.eq.s32.totalorder %s18, 0
    %p155 = por %p153, %p154
    %p156 = scmp.le.s32.totalorder 1, %s12
    %p157 = scmp.lt.s32.totalorder %s12, 3
    %p158 = pnand %p156, %p157
    %p159 = pneg %p158
    // Predicated region
    $region9: #{_gconv_forward.5} parent=5 // pred_check
      _
    $region10: #{_gconv_forward.5} parent=5 // pred_check_branch
      %161 = sbr.rel (%p158) target = $region12
    $region11: #{_gconv_forward.5} parent=5 // pred_region
      %s162 = ssub.s32 %s12, 1
      // Predicated region
      $region13: #{_gconv_forward.5} parent=11 // pred_check
        %p163 = pneg %p59
      $region14: #{_gconv_forward.5} parent=11 // pred_check_branch
        %165 = sbr.rel (%p163) target = $region16
      $region15: #{_gconv_forward.5} parent=11 // pred_region
        _
      $region16: #{_gconv_forward.5} parent=11 // pred_fallthru
        _
      // Predicated region
      $region17: #{_gconv_forward.5} parent=11 // pred_check
        %p166 = pneg %p80
      $region18: #{_gconv_forward.5} parent=11 // pred_check_branch
        %168 = sbr.rel (%p166) target = $region20
      $region19: #{_gconv_forward.5} parent=11 // pred_region
        _
      $region20: #{_gconv_forward.5} parent=11 // pred_fallthru
        _
    $region12: #{_gconv_forward.5} parent=5 // pred_fallthru
      _
    %p169 = scmp.lt.s32.totalorder %s12, 2
    // Predicated region
    $region21: #{_gconv_forward.5} parent=5 // pred_check
      %p170 = pneg %p169
    $region22: #{_gconv_forward.5} parent=5 // pred_check_branch
      %172 = sbr.rel (%p170) target = $region24
    $region23: #{_gconv_forward.5} parent=5 // pred_region
      // Predicated region
      $region25: #{_gconv_forward.5} parent=23 // pred_check
        %p173 = pneg %p32
      $region26: #{_gconv_forward.5} parent=23 // pred_check_branch
        %175 = sbr.rel (%p173) target = $region28
      $region27: #{_gconv_forward.5} parent=23 // pred_region
        %s176 = smul.u32 32, %s12
        %p177 = scmp.lt.s32.totalorder %s176, 63
        %s178 = scalar_select %p177, %s176, 63
        %s179 = smul.addr %s178, 4
        %s180 = scalar_lea.vmem %s0, %s179
        %s181 = smul.u32 32, %s12
      $region28: #{_gconv_forward.5} parent=23 // pred_fallthru
        _
    $region24: #{_gconv_forward.5} parent=5 // pred_fallthru
      _
    %p182 = scmp.le.s32.totalorder 1, %s12
    %p183 = scmp.lt.s32.totalorder %s12, 3
    %p184 = pnand %p182, %p183
    %p185 = pneg %p184
    // Predicated region
    $region29: #{_gconv_forward.5} parent=5 // pred_check
      _
    $region30: #{_gconv_forward.5} parent=5 // pred_check_branch
      %187 = sbr.rel (%p184) target = $region32
    $region31: #{_gconv_forward.5} parent=5 // pred_region
      %s188 = ssub.s32 %s12, 1
      %s189 = smul.u32 32, %s17
      %p190 = scmp.lt.s32.totalorder %s189, 63
      %s191 = scalar_select %p190, %s189, 63
      %s192 = smul.addr %s191, 4
      %s193 = scalar_lea.vmem %s0, %s192
      %p194 = pneg %p38
      %p195 = pneg %p35
      %p196 = pneg %p59
      %p197 = pneg %p56
      %p198 = pneg %p80
      %p199 = pneg %p77
      %p200 = pneg %p106
      %p201 = pneg %p103
      %s202 = smul.u32 32, %s17
      %p203 = scmp.lt.s32.totalorder %s202, 63
      %s204 = scalar_select %p203, %s202, 63
      %s205 = smul.addr %s204, 8
      %s206 = scalar_lea.vmem %s3, %s205
      %p207 = pneg %p127
      %p208 = pneg %p124
      %p209 = pneg %p148
      %p210 = pneg %p145
      %s211 = smul.u32 32, %s17
      %p212 = scmp.lt.s32.totalorder %s211, 63
      %s213 = scalar_select %p212, %s211, 63
      %s214 = smul.addr %s213, 4
      %s215 = scalar_lea.vmem %s0, %s214
      %s216 = smul.u32 32, %s17
      %s217 = smul.u32 32, %s17
      %p218 = scmp.lt.s32.totalorder %s217, 63
      %s219 = scalar_select %p218, %s217, 63
      %s220 = smul.addr %s219, 8
      %s221 = scalar_lea.vmem %s3, %s220
      %s222 = smul.u32 32, %s17
      %v224 = vld [vmem:[%s215] sm:$0xf]
      %v225 = vld [vmem:[%s215 + $0x4] sm:$0xf]
      %v226 = vld [vmem:[%s215 + $0x8] sm:$0xf]
      %v227 = vld [vmem:[%s215 + $0xc] sm:$0xf]
      %v228 = vld [vmem:[%s215 + $0x10] sm:$0xf]
      %v229 = vld [vmem:[%s215 + $0x14] sm:$0xf]
      %v230 = vld [vmem:[%s215 + $0x18] sm:$0xf]
      %v231 = vld [vmem:[%s215 + $0x1c] sm:$0xf]
      %v232 = vld [vmem:[%s215 + $0x20] sm:$0xf]
      %v233 = vld [vmem:[%s215 + $0x24] sm:$0xf]
      %v234 = vld [vmem:[%s215 + $0x28] sm:$0xf]
      %v235 = vld [vmem:[%s215 + $0x2c] sm:$0xf]
      %v236 = vld [vmem:[%s215 + $0x30] sm:$0xf]
      %v237 = vld [vmem:[%s215 + $0x34] sm:$0xf]
      %v238 = vld [vmem:[%s215 + $0x38] sm:$0xf]
      %v239 = vld [vmem:[%s215 + $0x3c] sm:$0xf]
      %v240 = vld [vmem:[%s215 + $0x40] sm:$0xf]
      %v241 = vld [vmem:[%s215 + $0x44] sm:$0xf]
      %v242 = vld [vmem:[%s215 + $0x48] sm:$0xf]
      %v243 = vld [vmem:[%s215 + $0x4c] sm:$0xf]
      %v244 = vld [vmem:[%s215 + $0x50] sm:$0xf]
      %v245 = vld [vmem:[%s215 + $0x54] sm:$0xf]
      %v246 = vld [vmem:[%s215 + $0x58] sm:$0xf]
      %v247 = vld [vmem:[%s215 + $0x5c] sm:$0xf]
      %v248 = vld [vmem:[%s215 + $0x60] sm:$0xf]
      %v249 = vld [vmem:[%s215 + $0x64] sm:$0xf]
      %v250 = vld [vmem:[%s215 + $0x68] sm:$0xf]
      %v251 = vld [vmem:[%s215 + $0x6c] sm:$0xf]
      %v252 = vld [vmem:[%s215 + $0x70] sm:$0xf]
      %v253 = vld [vmem:[%s215 + $0x74] sm:$0xf]
      %v254 = vld [vmem:[%s215 + $0x78] sm:$0xf]
      %v255 = vld [vmem:[%s215 + $0x7c] sm:$0xf]
      %v256 = vld [vmem:[%s1] sm:$0xf]
      %v257 = vld [vmem:[%s1 + $0x4] sm:$0xf]
      %v258 = vld [vmem:[%s1 + $0x8] sm:$0xf]
      %v259 = vld [vmem:[%s1 + $0xc] sm:$0xf]
      %v260 = vld [vmem:[%s1 + $0x10] sm:$0xf]
      %v261 = vld [vmem:[%s1 + $0x14] sm:$0xf]
      %v262 = vld [vmem:[%s1 + $0x18] sm:$0xf]
      %v263 = vld [vmem:[%s1 + $0x1c] sm:$0xf]
      %v264 = vld [vmem:[%s1 + $0x20] sm:$0xf]
      %v265 = vld [vmem:[%s1 + $0x24] sm:$0xf]
      %v266 = vld [vmem:[%s1 + $0x28] sm:$0xf]
      %v267 = vld [vmem:[%s1 + $0x2c] sm:$0xf]
      %v268 = vld [vmem:[%s1 + $0x30] sm:$0xf]
      %v269 = vld [vmem:[%s1 + $0x34] sm:$0xf]
      %v270 = vld [vmem:[%s1 + $0x38] sm:$0xf]
      %v271 = vld [vmem:[%s1 + $0x3c] sm:$0xf]
      %v272 = vld [vmem:[%s2] sm:$0x1]
      %v274 = vlaneseq
      %v275 = vshrl.u32 %v274, 7
      %v276 = vsub.s32 0, %v275
      %v277 = vrot.slane %v272, %v276
      %v311 = vunpack.c.l.b16 %v224
      %v312 = vunpack.c.l.b16 %v225
      %v313 = vunpack.c.l.b16 %v226
      %v314 = vunpack.c.l.b16 %v227
      %v315 = vunpack.c.l.b16 %v228
      %v316 = vunpack.c.l.b16 %v229
      %v317 = vunpack.c.l.b16 %v230
      %v318 = vunpack.c.l.b16 %v231
      %v319 = vunpack.c.l.b16 %v232
      %v320 = vunpack.c.l.b16 %v233
      %v321 = vunpack.c.l.b16 %v234
      %v322 = vunpack.c.l.b16 %v235
      %v323 = vunpack.c.l.b16 %v236
      %v324 = vunpack.c.l.b16 %v237
      %v325 = vunpack.c.l.b16 %v238
      %v326 = vunpack.c.l.b16 %v239
      %v327 = vunpack.c.l.b16 %v240
      %v328 = vunpack.c.l.b16 %v241
      %v329 = vunpack.c.l.b16 %v242
      %v330 = vunpack.c.l.b16 %v243
      %v331 = vunpack.c.l.b16 %v244
      %v332 = vunpack.c.l.b16 %v245
      %v333 = vunpack.c.l.b16 %v246
      %v334 = vunpack.c.l.b16 %v247
      %v335 = vunpack.c.l.b16 %v248
      %v336 = vunpack.c.l.b16 %v249
      %v337 = vunpack.c.l.b16 %v250
      %v338 = vunpack.c.l.b16 %v251
      %v339 = vunpack.c.l.b16 %v252
      %v340 = vunpack.c.l.b16 %v253
      %v341 = vunpack.c.l.b16 %v254
      %v342 = vunpack.c.l.b16 %v255
      %v343 = vpack.c.b16 %v312, %v311
      %v344 = vpack.c.b16 %v314, %v313
      %v345 = vpack.c.b16 %v316, %v315
      %v346 = vpack.c.b16 %v318, %v317
      %v347 = vpack.c.b16 %v320, %v319
      %v348 = vpack.c.b16 %v322, %v321
      %v349 = vpack.c.b16 %v324, %v323
      %v350 = vpack.c.b16 %v326, %v325
      %v351 = vpack.c.b16 %v328, %v327
      %v352 = vpack.c.b16 %v330, %v329
      %v353 = vpack.c.b16 %v332, %v331
      %v354 = vpack.c.b16 %v334, %v333
      %v355 = vpack.c.b16 %v336, %v335
      %v356 = vpack.c.b16 %v338, %v337
      %v357 = vpack.c.b16 %v340, %v339
      %v358 = vpack.c.b16 %v342, %v341
      %v391 = vunpack.c.l.b16 %v256
      %v392 = vunpack.c.l.b16 %v257
      %v393 = vunpack.c.l.b16 %v258
      %v394 = vunpack.c.l.b16 %v259
      %v395 = vunpack.c.l.b16 %v260
      %v396 = vunpack.c.l.b16 %v261
      %v397 = vunpack.c.l.b16 %v262
      %v398 = vunpack.c.l.b16 %v263
      %v399 = vunpack.c.l.b16 %v264
      %v400 = vunpack.c.l.b16 %v265
      %v401 = vunpack.c.l.b16 %v266
      %v402 = vunpack.c.l.b16 %v267
      %v403 = vunpack.c.l.b16 %v268
      %v404 = vunpack.c.l.b16 %v269
      %v405 = vunpack.c.l.b16 %v270
      %v406 = vunpack.c.l.b16 %v271
      %v407 = vpack.c.b16 %v392, %v391
      %v408 = vpack.c.b16 %v394, %v393
      %v409 = vpack.c.b16 %v396, %v395
      %v410 = vpack.c.b16 %v398, %v397
      %v411 = vpack.c.b16 %v400, %v399
      %v412 = vpack.c.b16 %v402, %v401
      %v413 = vpack.c.b16 %v404, %v403
      %v414 = vpack.c.b16 %v406, %v405
      %423 = vmatprep.subr.bf16.mxu0 0
      %424 = vmatpush1.bf16.msra.mxu0 %v407
      %425 = vmatprep.subr.bf16.mxu0 0
      %426 = vmatpush1.bf16.msra.mxu0 %v408
      %427 = vmatprep.subr.bf16.mxu0 0
      %428 = vmatpush1.bf16.msra.mxu0 %v409
      %429 = vmatprep.subr.bf16.mxu0 0
      %430 = vmatpush1.bf16.msra.mxu0 %v410
      %431 = vmatprep.subr.bf16.mxu0 0
      %432 = vmatpush1.bf16.msra.mxu0 %v411
      %433 = vmatprep.subr.bf16.mxu0 0
      %434 = vmatpush1.bf16.msra.mxu0 %v412
      %435 = vmatprep.subr.bf16.mxu0 0
      %436 = vmatpush1.bf16.msra.mxu0 %v413
      %437 = vmatprep.subr.bf16.mxu0 0
      %438 = vmatpush1.bf16.msra.mxu0 %v414
      %439 = vmatprep.subr.bf16.mxu0 0
      %440 = vmatpush1.bf16.msra.mxu0 0
      %441 = vmatprep.subr.bf16.mxu0 0
      %442 = vmatpush1.bf16.msra.mxu0 0
      %443 = vmatprep.subr.bf16.mxu0 0
      %444 = vmatpush1.bf16.msra.mxu0 0
      %445 = vmatprep.subr.bf16.mxu0 0
      %446 = vmatpush1.bf16.msra.mxu0 0
      %447 = vmatprep.subr.bf16.mxu0 0
      %448 = vmatpush1.bf16.msra.mxu0 0
      %449 = vmatprep.subr.bf16.mxu0 0
      %450 = vmatpush1.bf16.msra.mxu0 0
      %451 = vmatprep.subr.bf16.mxu0 0
      %452 = vmatpush1.bf16.msra.mxu0 0
      %453 = vmatprep.subr.bf16.mxu0 0
      %454 = vmatpush1.bf16.msra.mxu0 0
      %455 = vmatprep.mubr.bf16.mxu0 0
      %456 = vmatmul.mubr.bf16.gmra.mrb[0].mxu0 %v343
      %v457 = vpop.f32.mrb[0].mxu0
      %v458 = vadd.f32 %v277, %v457
      %v459 = vpop.f32.mrb[0].mxu0
      %v460 = vpop.f32.mrb[0].mxu0
      %v461 = vadd.f32 %v277, %v460
      %v462 = vpop.f32.mrb[0].mxu0
      %463 = vmatprep.mubr.bf16.mxu0 0
      %464 = vmatmul.mubr.bf16.gmra.mrb[0].mxu0 %v344
      %v465 = vpop.f32.mrb[0].mxu0
      %v466 = vadd.f32 %v277, %v465
      %v467 = vpop.f32.mrb[0].mxu0
      %v468 = vpop.f32.mrb[0].mxu0
      %v469 = vadd.f32 %v277, %v468
      %v470 = vpop.f32.mrb[0].mxu0
      %471 = vmatprep.mubr.bf16.mxu0 0
      %472 = vmatmul.mubr.bf16.gmra.mrb[0].mxu0 %v345
      %v473 = vpop.f32.mrb[0].mxu0
      %v474 = vadd.f32 %v277, %v473
      %v475 = vpop.f32.mrb[0].mxu0
      %v476 = vpop.f32.mrb[0].mxu0
      %v477 = vadd.f32 %v277, %v476
      %v478 = vpop.f32.mrb[0].mxu0
      %479 = vmatprep.mubr.bf16.mxu0 0
      %480 = vmatmul.mubr.bf16.gmra.mrb[0].mxu0 %v346
      %v481 = vpop.f32.mrb[0].mxu0
      %v482 = vadd.f32 %v277, %v481
      %v483 = vpop.f32.mrb[0].mxu0
      %v484 = vpop.f32.mrb[0].mxu0
      %v485 = vadd.f32 %v277, %v484
      %v486 = vpop.f32.mrb[0].mxu0
      %487 = vmatprep.mubr.bf16.mxu0 0
      %488 = vmatmul.mubr.bf16.gmra.mrb[0].mxu0 %v347
      %v489 = vpop.f32.mrb[0].mxu0
      %v490 = vadd.f32 %v277, %v489
      %v491 = vpop.f32.mrb[0].mxu0
      %v492 = vpop.f32.mrb[0].mxu0
      %v493 = vadd.f32 %v277, %v492
      %v494 = vpop.f32.mrb[0].mxu0
      %495 = vmatprep.mubr.bf16.mxu0 0
      %496 = vmatmul.mubr.bf16.gmra.mrb[0].mxu0 %v348
      %v497 = vpop.f32.mrb[0].mxu0
      %v498 = vadd.f32 %v277, %v497
      %v499 = vpop.f32.mrb[0].mxu0
      %v500 = vpop.f32.mrb[0].mxu0
      %v501 = vadd.f32 %v277, %v500
      %v502 = vpop.f32.mrb[0].mxu0
      %503 = vmatprep.mubr.bf16.mxu0 0
      %504 = vmatmul.mubr.bf16.gmra.mrb[0].mxu0 %v349
      %v505 = vpop.f32.mrb[0].mxu0
      %v506 = vadd.f32 %v277, %v505
      %v507 = vpop.f32.mrb[0].mxu0
      %v508 = vpop.f32.mrb[0].mxu0
      %v509 = vadd.f32 %v277, %v508
      %v510 = vpop.f32.mrb[0].mxu0
      %511 = vmatprep.mubr.bf16.mxu0 0
      %512 = vmatmul.mubr.bf16.gmra.mrb[0].mxu0 %v350
      %v513 = vpop.f32.mrb[0].mxu0
      %v514 = vadd.f32 %v277, %v513
      %v515 = vpop.f32.mrb[0].mxu0
      %v516 = vpop.f32.mrb[0].mxu0
      %v517 = vadd.f32 %v277, %v516
      %v518 = vpop.f32.mrb[0].mxu0
      %519 = vmatprep.mubr.bf16.mxu0 0
      %520 = vmatmul.mubr.bf16.gmra.mrb[0].mxu0 %v351
      %v521 = vpop.f32.mrb[0].mxu0
      %v522 = vadd.f32 %v277, %v521
      %v523 = vpop.f32.mrb[0].mxu0
      %v524 = vpop.f32.mrb[0].mxu0
      %v525 = vadd.f32 %v277, %v524
      %v526 = vpop.f32.mrb[0].mxu0
      %527 = vmatprep.mubr.bf16.mxu0 0
      %528 = vmatmul.mubr.bf16.gmra.mrb[0].mxu0 %v352
      %v529 = vpop.f32.mrb[0].mxu0
      %v530 = vadd.f32 %v277, %v529
      %v531 = vpop.f32.mrb[0].mxu0
      %v532 = vpop.f32.mrb[0].mxu0
      %v533 = vadd.f32 %v277, %v532
      %v534 = vpop.f32.mrb[0].mxu0
      %535 = vmatprep.mubr.bf16.mxu0 0
      %536 = vmatmul.mubr.bf16.gmra.mrb[0].mxu0 %v353
      %v537 = vpop.f32.mrb[0].mxu0
      %v538 = vadd.f32 %v277, %v537
      %v539 = vpop.f32.mrb[0].mxu0
      %v540 = vpop.f32.mrb[0].mxu0
      %v541 = vadd.f32 %v277, %v540
      %v542 = vpop.f32.mrb[0].mxu0
      %543 = vmatprep.mubr.bf16.mxu0 0
      %544 = vmatmul.mubr.bf16.gmra.mrb[0].mxu0 %v354
      %v545 = vpop.f32.mrb[0].mxu0
      %v546 = vadd.f32 %v277, %v545
      %v547 = vpop.f32.mrb[0].mxu0
      %v548 = vpop.f32.mrb[0].mxu0
      %v549 = vadd.f32 %v277, %v548
      %v550 = vpop.f32.mrb[0].mxu0
      %551 = vmatprep.mubr.bf16.mxu0 0
      %552 = vmatmul.mubr.bf16.gmra.mrb[0].mxu0 %v355
      %v553 = vpop.f32.mrb[0].mxu0
      %v554 = vadd.f32 %v277, %v553
      %v555 = vpop.f32.mrb[0].mxu0
      %v556 = vpop.f32.mrb[0].mxu0
      %v557 = vadd.f32 %v277, %v556
      %v558 = vpop.f32.mrb[0].mxu0
      %559 = vmatprep.mubr.bf16.mxu0 0
      %560 = vmatmul.mubr.bf16.gmra.mrb[0].mxu0 %v356
      %v561 = vpop.f32.mrb[0].mxu0
      %v562 = vadd.f32 %v277, %v561
      %v563 = vpop.f32.mrb[0].mxu0
      %v564 = vpop.f32.mrb[0].mxu0
      %v565 = vadd.f32 %v277, %v564
      %v566 = vpop.f32.mrb[0].mxu0
      %567 = vmatprep.mubr.bf16.mxu0 0
      %568 = vmatmul.mubr.bf16.gmra.mrb[0].mxu0 %v357
      %v569 = vpop.f32.mrb[0].mxu0
      %v570 = vadd.f32 %v277, %v569
      %v571 = vpop.f32.mrb[0].mxu0
      %v572 = vpop.f32.mrb[0].mxu0
      %v573 = vadd.f32 %v277, %v572
      %v574 = vpop.f32.mrb[0].mxu0
      %575 = vmatprep.mubr.bf16.mxu0 0
      %576 = vmatmul.mubr.bf16.gmra.mrb[0].mxu0 %v358
      %v577 = vpop.f32.mrb[0].mxu0
      %v578 = vadd.f32 %v277, %v577
      %v579 = vpop.f32.mrb[0].mxu0
      %v580 = vpop.f32.mrb[0].mxu0
      %v581 = vadd.f32 %v277, %v580
      %v582 = vpop.f32.mrb[0].mxu0
      %583 = vdwg.mxu0
      %584 = vst [vmem:[%s221] sm:$0xff] %v458
      %585 = vst [vmem:[%s221 + $0x8] sm:$0xff] %v461
      %586 = vst [vmem:[%s221 + $0x10] sm:$0xff] %v466
      %587 = vst [vmem:[%s221 + $0x18] sm:$0xff] %v469
      %588 = vst [vmem:[%s221 + $0x20] sm:$0xff] %v474
      %589 = vst [vmem:[%s221 + $0x28] sm:$0xff] %v477
      %590 = vst [vmem:[%s221 + $0x30] sm:$0xff] %v482
      %591 = vst [vmem:[%s221 + $0x38] sm:$0xff] %v485
      %592 = vst [vmem:[%s221 + $0x40] sm:$0xff] %v490
      %593 = vst [vmem:[%s221 + $0x48] sm:$0xff] %v493
      %594 = vst [vmem:[%s221 + $0x50] sm:$0xff] %v498
      %595 = vst [vmem:[%s221 + $0x58] sm:$0xff] %v501
      %596 = vst [vmem:[%s221 + $0x60] sm:$0xff] %v506
      %597 = vst [vmem:[%s221 + $0x68] sm:$0xff] %v509
      %598 = vst [vmem:[%s221 + $0x70] sm:$0xff] %v514
      %599 = vst [vmem:[%s221 + $0x78] sm:$0xff] %v517
      %600 = vst [vmem:[%s221 + $0x80] sm:$0xff] %v522
      %601 = vst [vmem:[%s221 + $0x88] sm:$0xff] %v525
      %602 = vst [vmem:[%s221 + $0x90] sm:$0xff] %v530
      %603 = vst [vmem:[%s221 + $0x98] sm:$0xff] %v533
      %604 = vst [vmem:[%s221 + $0xa0] sm:$0xff] %v538
      %605 = vst [vmem:[%s221 + $0xa8] sm:$0xff] %v541
      %606 = vst [vmem:[%s221 + $0xb0] sm:$0xff] %v546
      %607 = vst [vmem:[%s221 + $0xb8] sm:$0xff] %v549
      %608 = vst [vmem:[%s221 + $0xc0] sm:$0xff] %v554
      %609 = vst [vmem:[%s221 + $0xc8] sm:$0xff] %v557
      %610 = vst [vmem:[%s221 + $0xd0] sm:$0xff] %v562
      %611 = vst [vmem:[%s221 + $0xd8] sm:$0xff] %v565
      %612 = vst [vmem:[%s221 + $0xe0] sm:$0xff] %v570
      %613 = vst [vmem:[%s221 + $0xe8] sm:$0xff] %v573
      %614 = vst [vmem:[%s221 + $0xf0] sm:$0xff] %v578
      %615 = vst [vmem:[%s221 + $0xf8] sm:$0xff] %v581
      %s616 = smul.u32 %s17, 256
      %v617 = vlaneseq
      %v618 = vshrl.u32 %v617, 7
      %v619 = vadd.s32 %v618, 8
      %v620 = vadd.s32 %v618, 16
      %v621 = vadd.s32 %v618, 24
      %v622 = vadd.s32 %v618, 32
      %v623 = vadd.s32 %v618, 40
      %v624 = vadd.s32 %v618, 48
      %v625 = vadd.s32 %v618, 56
      %v626 = vadd.s32 %v618, 64
      %v627 = vadd.s32 %v618, 72
      %v628 = vadd.s32 %v618, 80
      %v629 = vadd.s32 %v618, 88
      %v630 = vadd.s32 %v618, 96
      %v631 = vadd.s32 %v618, 104
      %v632 = vadd.s32 %v618, 112
      %v633 = vadd.s32 %v618, 120
      %v634 = vadd.s32 %v618, 128
      %v635 = vadd.s32 %v618, 136
      %v636 = vadd.s32 %v618, 144
      %v637 = vadd.s32 %v618, 152
      %v638 = vadd.s32 %v618, 160
      %v639 = vadd.s32 %v618, 168
      %v640 = vadd.s32 %v618, 176
      %v641 = vadd.s32 %v618, 184
      %v642 = vadd.s32 %v618, 192
      %v643 = vadd.s32 %v618, 200
      %v644 = vadd.s32 %v618, 208
      %v645 = vadd.s32 %v618, 216
      %v646 = vadd.s32 %v618, 224
      %v647 = vadd.s32 %v618, 232
      %v648 = vadd.s32 %v618, 240
      %v649 = vadd.s32 %v618, 248
      %v650 = vstv %s616
      %v651 = vadd.s32 %v650, %v618
      %v652 = vadd.s32 %v650, %v619
      %v653 = vadd.s32 %v650, %v620
      %v654 = vadd.s32 %v650, %v621
      %v655 = vadd.s32 %v650, %v622
      %v656 = vadd.s32 %v650, %v623
      %v657 = vadd.s32 %v650, %v624
      %v658 = vadd.s32 %v650, %v625
      %v659 = vadd.s32 %v650, %v626
      %v660 = vadd.s32 %v650, %v627
      %v661 = vadd.s32 %v650, %v628
      %v662 = vadd.s32 %v650, %v629
      %v663 = vadd.s32 %v650, %v630
      %v664 = vadd.s32 %v650, %v631
      %v665 = vadd.s32 %v650, %v632
      %v666 = vadd.s32 %v650, %v633
      %v667 = vadd.s32 %v650, %v634
      %v668 = vadd.s32 %v650, %v635
      %v669 = vadd.s32 %v650, %v636
      %v670 = vadd.s32 %v650, %v637
      %v671 = vadd.s32 %v650, %v638
      %v672 = vadd.s32 %v650, %v639
      %v673 = vadd.s32 %v650, %v640
      %v674 = vadd.s32 %v650, %v641
      %v675 = vadd.s32 %v650, %v642
      %v676 = vadd.s32 %v650, %v643
      %v677 = vadd.s32 %v650, %v644
      %v678 = vadd.s32 %v650, %v645
      %v679 = vadd.s32 %v650, %v646
      %v680 = vadd.s32 %v650, %v647
      %v681 = vadd.s32 %v650, %v648
      %v682 = vadd.s32 %v650, %v649
      %vm683 = vcmp.lt.s32.totalorder %v651, 512
      %vm684 = vcmp.lt.s32.totalorder %v652, 512
      %vm685 = vcmp.lt.s32.totalorder %v653, 512
      %vm686 = vcmp.lt.s32.totalorder %v654, 512
      %vm687 = vcmp.lt.s32.totalorder %v655, 512
      %vm688 = vcmp.lt.s32.totalorder %v656, 512
      %vm689 = vcmp.lt.s32.totalorder %v657, 512
      %vm690 = vcmp.lt.s32.totalorder %v658, 512
      %vm691 = vcmp.lt.s32.totalorder %v659, 512
      %vm692 = vcmp.lt.s32.totalorder %v660, 512
      %vm693 = vcmp.lt.s32.totalorder %v661, 512
      %vm694 = vcmp.lt.s32.totalorder %v662, 512
      %vm695 = vcmp.lt.s32.totalorder %v663, 512
      %vm696 = vcmp.lt.s32.totalorder %v664, 512
      %vm697 = vcmp.lt.s32.totalorder %v665, 512
      %vm698 = vcmp.lt.s32.totalorder %v666, 512
      %vm699 = vcmp.lt.s32.totalorder %v667, 512
      %vm700 = vcmp.lt.s32.totalorder %v668, 512
      %vm701 = vcmp.lt.s32.totalorder %v669, 512
      %vm702 = vcmp.lt.s32.totalorder %v670, 512
      %vm703 = vcmp.lt.s32.totalorder %v671, 512
      %vm704 = vcmp.lt.s32.totalorder %v672, 512
      %vm705 = vcmp.lt.s32.totalorder %v673, 512
      %vm706 = vcmp.lt.s32.totalorder %v674, 512
      %vm707 = vcmp.lt.s32.totalorder %v675, 512
      %vm708 = vcmp.lt.s32.totalorder %v676, 512
      %vm709 = vcmp.lt.s32.totalorder %v677, 512
      %vm710 = vcmp.lt.s32.totalorder %v678, 512
      %vm711 = vcmp.lt.s32.totalorder %v679, 512
      %vm712 = vcmp.lt.s32.totalorder %v680, 512
      %vm713 = vcmp.lt.s32.totalorder %v681, 512
      %vm714 = vcmp.lt.s32.totalorder %v682, 512
      %v715 = vsel %vm683, 1, 0
      %v716 = vsel %vm684, 1, 0
      %v717 = vsel %vm685, 1, 0
      %v718 = vsel %vm686, 1, 0
      %v719 = vsel %vm687, 1, 0
      %v720 = vsel %vm688, 1, 0
      %v721 = vsel %vm689, 1, 0
      %v722 = vsel %vm690, 1, 0
      %v723 = vsel %vm691, 1, 0
      %v724 = vsel %vm692, 1, 0
      %v725 = vsel %vm693, 1, 0
      %v726 = vsel %vm694, 1, 0
      %v727 = vsel %vm695, 1, 0
      %v728 = vsel %vm696, 1, 0
      %v729 = vsel %vm697, 1, 0
      %v730 = vsel %vm698, 1, 0
      %v731 = vsel %vm699, 1, 0
      %v732 = vsel %vm700, 1, 0
      %v733 = vsel %vm701, 1, 0
      %v734 = vsel %vm702, 1, 0
      %v735 = vsel %vm703, 1, 0
      %v736 = vsel %vm704, 1, 0
      %v737 = vsel %vm705, 1, 0
      %v738 = vsel %vm706, 1, 0
      %v739 = vsel %vm707, 1, 0
      %v740 = vsel %vm708, 1, 0
      %v741 = vsel %vm709, 1, 0
      %v742 = vsel %vm710, 1, 0
      %v743 = vsel %vm711, 1, 0
      %v744 = vsel %vm712, 1, 0
      %v745 = vsel %vm713, 1, 0
      %v746 = vsel %vm714, 1, 0
      %v747 = vcvt.s32.f32 %v715
      %v748 = vcvt.s32.f32 %v716
      %v749 = vcvt.s32.f32 %v717
      %v750 = vcvt.s32.f32 %v718
      %v751 = vcvt.s32.f32 %v719
      %v752 = vcvt.s32.f32 %v720
      %v753 = vcvt.s32.f32 %v721
      %v754 = vcvt.s32.f32 %v722
      %v755 = vcvt.s32.f32 %v723
      %v756 = vcvt.s32.f32 %v724
      %v757 = vcvt.s32.f32 %v725
      %v758 = vcvt.s32.f32 %v726
      %v759 = vcvt.s32.f32 %v727
      %v760 = vcvt.s32.f32 %v728
      %v761 = vcvt.s32.f32 %v729
      %v762 = vcvt.s32.f32 %v730
      %v763 = vcvt.s32.f32 %v731
      %v764 = vcvt.s32.f32 %v732
      %v765 = vcvt.s32.f32 %v733
      %v766 = vcvt.s32.f32 %v734
      %v767 = vcvt.s32.f32 %v735
      %v768 = vcvt.s32.f32 %v736
      %v769 = vcvt.s32.f32 %v737
      %v770 = vcvt.s32.f32 %v738
      %v771 = vcvt.s32.f32 %v739
      %v772 = vcvt.s32.f32 %v740
      %v773 = vcvt.s32.f32 %v741
      %v774 = vcvt.s32.f32 %v742
      %v775 = vcvt.s32.f32 %v743
      %v776 = vcvt.s32.f32 %v744
      %v777 = vcvt.s32.f32 %v745
      %v778 = vcvt.s32.f32 %v746
      %v779 = vmul.f32 %v458, %v747
      %v780 = vmul.f32 %v461, %v748
      %v781 = vmul.f32 %v466, %v749
      %v782 = vmul.f32 %v469, %v750
      %v783 = vmul.f32 %v474, %v751
      %v784 = vmul.f32 %v477, %v752
      %v785 = vmul.f32 %v482, %v753
      %v786 = vmul.f32 %v485, %v754
      %v787 = vmul.f32 %v490, %v755
      %v788 = vmul.f32 %v493, %v756
      %v789 = vmul.f32 %v498, %v757
      %v790 = vmul.f32 %v501, %v758
      %v791 = vmul.f32 %v506, %v759
      %v792 = vmul.f32 %v509, %v760
      %v793 = vmul.f32 %v514, %v761
      %v794 = vmul.f32 %v517, %v762
      %v795 = vmul.f32 %v522, %v763
      %v796 = vmul.f32 %v525, %v764
      %v797 = vmul.f32 %v530, %v765
      %v798 = vmul.f32 %v533, %v766
      %v799 = vmul.f32 %v538, %v767
      %v800 = vmul.f32 %v541, %v768
      %v801 = vmul.f32 %v546, %v769
      %v802 = vmul.f32 %v549, %v770
      %v803 = vmul.f32 %v554, %v771
      %v804 = vmul.f32 %v557, %v772
      %v805 = vmul.f32 %v562, %v773
      %v806 = vmul.f32 %v565, %v774
      %v807 = vmul.f32 %v570, %v775
      %v808 = vmul.f32 %v573, %v776
      %v809 = vmul.f32 %v578, %v777
      %v810 = vmul.f32 %v581, %v778
      %p811 = scmp.eq.s32.totalorder %s17, 0
      // Predicated region
      $region33: #{_gconv_forward.5} parent=31 // pred_check
        %p812 = pneg %p811
      $region34: #{_gconv_forward.5} parent=31 // pred_check_branch
        %814 = sbr.rel (%p812) target = $region36
      $region35: #{_gconv_forward.5} parent=31 // pred_region
        %815 = vst [vmem:[%s4] sm:$0x1] 0.0
        %816 = vst [vmem:[%s5] sm:$0x1] 0.0
      $region36: #{_gconv_forward.5} parent=31 // pred_fallthru
        _
      %v817 = vld [vmem:[%s4] sm:$0x1]
      %v818 = vadd.f32 %v779, %v780
      %v819 = vadd.f32 %v818, %v781
      %v820 = vadd.f32 %v819, %v782
      %v821 = vadd.f32 %v820, %v783
      %v822 = vadd.f32 %v821, %v784
      %v823 = vadd.f32 %v822, %v785
      %v824 = vadd.f32 %v823, %v786
      %v825 = vadd.f32 %v824, %v787
      %v826 = vadd.f32 %v825, %v788
      %v827 = vadd.f32 %v826, %v789
      %v828 = vadd.f32 %v827, %v790
      %v829 = vadd.f32 %v828, %v791
      %v830 = vadd.f32 %v829, %v792
      %v831 = vadd.f32 %v830, %v793
      %v832 = vadd.f32 %v831, %v794
      %v833 = vadd.f32 %v832, %v795
      %v834 = vadd.f32 %v833, %v796
      %v835 = vadd.f32 %v834, %v797
      %v836 = vadd.f32 %v835, %v798
      %v837 = vadd.f32 %v836, %v799
      %v838 = vadd.f32 %v837, %v800
      %v839 = vadd.f32 %v838, %v801
      %v840 = vadd.f32 %v839, %v802
      %v841 = vadd.f32 %v840, %v803
      %v842 = vadd.f32 %v841, %v804
      %v843 = vadd.f32 %v842, %v805
      %v844 = vadd.f32 %v843, %v806
      %v845 = vadd.f32 %v844, %v807
      %v846 = vadd.f32 %v845, %v808
      %v847 = vadd.f32 %v846, %v809
      %v848 = vadd.f32 %v847, %v810
      %v849 = vrot.slane %v848, 4
      %v850 = vadd.f32 %v848, %v849
      %v851 = vrot.slane %v850, 2
      %v852 = vadd.f32 %v850, %v851
      %v853 = vrot.slane %v852, 1
      %v854 = vadd.f32 %v852, %v853
      %v855 = vadd.f32 %v817, %v854
      %856 = vst [vmem:[%s4] sm:$0x1] %v855
      %v857 = vld [vmem:[%s5] sm:$0x1]
      %v858 = vmul.f32 %v779, %v779
      %v859 = vmul.f32 %v780, %v780
      %v860 = vmul.f32 %v781, %v781
      %v861 = vmul.f32 %v782, %v782
      %v862 = vmul.f32 %v783, %v783
      %v863 = vmul.f32 %v784, %v784
      %v864 = vmul.f32 %v785, %v785
      %v865 = vmul.f32 %v786, %v786
      %v866 = vmul.f32 %v787, %v787
      %v867 = vmul.f32 %v788, %v788
      %v868 = vmul.f32 %v789, %v789
      %v869 = vmul.f32 %v790, %v790
      %v870 = vmul.f32 %v791, %v791
      %v871 = vmul.f32 %v792, %v792
      %v872 = vmul.f32 %v793, %v793
      %v873 = vmul.f32 %v794, %v794
      %v874 = vmul.f32 %v795, %v795
      %v875 = vmul.f32 %v796, %v796
      %v876 = vmul.f32 %v797, %v797
      %v877 = vmul.f32 %v798, %v798
      %v878 = vmul.f32 %v799, %v799
      %v879 = vmul.f32 %v800, %v800
      %v880 = vmul.f32 %v801, %v801
      %v881 = vmul.f32 %v802, %v802
      %v882 = vmul.f32 %v803, %v803
      %v883 = vmul.f32 %v804, %v804
      %v884 = vmul.f32 %v805, %v805
      %v885 = vmul.f32 %v806, %v806
      %v886 = vmul.f32 %v807, %v807
      %v887 = vmul.f32 %v808, %v808
      %v888 = vmul.f32 %v809, %v809
      %v889 = vmul.f32 %v810, %v810
      %v890 = vadd.f32 %v858, %v859
      %v891 = vadd.f32 %v890, %v860
      %v892 = vadd.f32 %v891, %v861
      %v893 = vadd.f32 %v892, %v862
      %v894 = vadd.f32 %v893, %v863
      %v895 = vadd.f32 %v894, %v864
      %v896 = vadd.f32 %v895, %v865
      %v897 = vadd.f32 %v896, %v866
      %v898 = vadd.f32 %v897, %v867
      %v899 = vadd.f32 %v898, %v868
      %v900 = vadd.f32 %v899, %v869
      %v901 = vadd.f32 %v900, %v870
      %v902 = vadd.f32 %v901, %v871
      %v903 = vadd.f32 %v902, %v872
      %v904 = vadd.f32 %v903, %v873
      %v905 = vadd.f32 %v904, %v874
      %v906 = vadd.f32 %v905, %v875
      %v907 = vadd.f32 %v906, %v876
      %v908 = vadd.f32 %v907, %v877
      %v909 = vadd.f32 %v908, %v878
      %v910 = vadd.f32 %v909, %v879
      %v911 = vadd.f32 %v910, %v880
      %v912 = vadd.f32 %v911, %v881
      %v913 = vadd.f32 %v912, %v882
      %v914 = vadd.f32 %v913, %v883
      %v915 = vadd.f32 %v914, %v884
      %v916 = vadd.f32 %v915, %v885
      %v917 = vadd.f32 %v916, %v886
      %v918 = vadd.f32 %v917, %v887
      %v919 = vadd.f32 %v918, %v888
      %v920 = vadd.f32 %v919, %v889
      %v921 = vrot.slane %v920, 4
      %v922 = vadd.f32 %v920, %v921
      %v923 = vrot.slane %v922, 2
      %v924 = vadd.f32 %v922, %v923
      %v925 = vrot.slane %v924, 1
      %v926 = vadd.f32 %v924, %v925
      %v927 = vadd.f32 %v857, %v926
      %928 = vst [vmem:[%s5] sm:$0x1] %v927
      %s929 = smul.u32 32, %s17
      %p930 = scmp.lt.s32.totalorder %s929, 63
      %s931 = scalar_select %p930, %s929, 63
      %s932 = smul.addr %s931, 8
      %s933 = scalar_lea.vmem %s3, %s932
      // Predicated region
      $region37: #{_gconv_forward.5} parent=31 // pred_check
        %p934 = pneg %p103
      $region38: #{_gconv_forward.5} parent=31 // pred_check_branch
        %936 = sbr.rel (%p934) target = $region40
      $region39: #{_gconv_forward.5} parent=31 // pred_region
        %s937 = smul.u32 32, %s17
      $region40: #{_gconv_forward.5} parent=31 // pred_fallthru
        _
      // Predicated region
      $region41: #{_gconv_forward.5} parent=31 // pred_check
        %p938 = pneg %p124
      $region42: #{_gconv_forward.5} parent=31 // pred_check_branch
        %940 = sbr.rel (%p938) target = $region44
      $region43: #{_gconv_forward.5} parent=31 // pred_region
        _
      $region44: #{_gconv_forward.5} parent=31 // pred_fallthru
        _
      // Predicated region
      $region45: #{_gconv_forward.5} parent=31 // pred_check
        %p941 = pneg %p145
      $region46: #{_gconv_forward.5} parent=31 // pred_check_branch
        %943 = sbr.rel (%p941) target = $region48
      $region47: #{_gconv_forward.5} parent=31 // pred_region
        _
      $region48: #{_gconv_forward.5} parent=31 // pred_fallthru
        _
      // Predicated region
      $region49: #{_gconv_forward.5} parent=31 // pred_check
        %p944 = pneg %p124
      $region50: #{_gconv_forward.5} parent=31 // pred_check_branch
        %946 = sbr.rel (%p944) target = $region52
      $region51: #{_gconv_forward.5} parent=31 // pred_region
        _
      $region52: #{_gconv_forward.5} parent=31 // pred_fallthru
        _
      // Predicated region
      $region53: #{_gconv_forward.5} parent=31 // pred_check
        %p947 = pneg %p145
      $region54: #{_gconv_forward.5} parent=31 // pred_check_branch
        %949 = sbr.rel (%p947) target = $region56
      $region55: #{_gconv_forward.5} parent=31 // pred_region
        _
      $region56: #{_gconv_forward.5} parent=31 // pred_fallthru
        _
    $region32: #{_gconv_forward.5} parent=5 // pred_fallthru
      _
    %p950 = scmp.le.s32.totalorder 2, %s12
    // Predicated region
    $region57: #{_gconv_forward.5} parent=5 // pred_check
      %p951 = pneg %p950
    $region58: #{_gconv_forward.5} parent=5 // pred_check_branch
      %953 = sbr.rel (%p951) target = $region60
    $region59: #{_gconv_forward.5} parent=5 // pred_region
      %s954 = ssub.s32 %s12, 2
      // Predicated region
      $region61: #{_gconv_forward.5} parent=59 // pred_check
        %p955 = pneg %p109
      $region62: #{_gconv_forward.5} parent=59 // pred_check_branch
        %957 = sbr.rel (%p955) target = $region64
      $region63: #{_gconv_forward.5} parent=59 // pred_region
        %s958 = smul.u32 32, %s18
        %p959 = scmp.lt.s32.totalorder %s958, 63
        %s960 = scalar_select %p959, %s958, 63
        %s961 = smul.addr %s960, 8
        %s962 = scalar_lea.vmem %s3, %s961
      $region64: #{_gconv_forward.5} parent=59 // pred_fallthru
        _
    $region60: #{_gconv_forward.5} parent=5 // pred_fallthru
      _
  $region6: #{_gconv_forward.5} parent=0 // loop_footer
    %s16 = sadd.s32 1, %s12
  $region7: #{_gconv_forward.5} parent=0 // loop_footer_branch
    %11 = sbr.rel target = $region3
  $region8: #{_gconv_forward.5} parent=0 // loop_exit
    _

// kernel: _gconv_forward.7
$region0: #{_gconv_forward.7}
  #allocation0 [shape = 'u32[]', space=smem, size = 0x4, offset = 0x4, fixed_abs, tag = 'smem constant byte address 0x4 - core index']
  #allocation1 [shape = 'u32[144,128]{1,0:T(1,128)}', space=vmem, size = 0x12000, scoped, tag = 'internal scratch']
  #allocation2 [shape = 'f32[256,128]{1,0:T(8,128)}', space=vmem, size = 0x20000, scoped, tag = 'scratch operand']
  %s0 = inlined_call_operand.vmem [shape: bf16[512,512], index: 0, kind: input, shape index: {}]
  %s1 = inlined_call_operand.vmem [shape: bf16[512,128], index: 1, kind: input, shape index: {}]
  %s2 = inlined_call_operand.vmem [shape: f32[1,128], index: 2, kind: input, shape index: {}]
  %s3 = inlined_call_operand.hbm [shape: f32[512,128], index: 3, kind: output, shape index: {}]
  %s4 = sld [smem:[#allocation0]]
  $region91: #{_gconv_forward.7} parent=0
    _
  %s6 = ssub.s32 1, %s4
  %s7 = scalar_select 0, %s6, %s4
  $region1: #{_gconv_forward.7} parent=0
    #allocation3 [shape = 'u8[262144]{0}', space=vmem, size = 0x40000, scoped, tag = 'input window, operand 0']
    #allocation4 [shape = 'u8[262144]{0}', space=vmem, size = 0x40000, scoped, tag = 'output window, operand 0']
    #allocation5 [shape = 's32[2]{0}', space=sflag, size = 0x8, scoped, tag = 'scoped memory for _gconv_forward.7']
    %8 = vsyncpa [#allocation5], 0
    %s9 = scalar_lea.sflag [#allocation5], 1
    %10 = vsyncpa %s9, 0
    loop: start=0, step=1, limit=6
    $region2: #{_gconv_forward.7} parent=1 // loop_pre_header
      _
    $region3: #{_gconv_forward.7} parent=1 // loop_header
      %s12 = sphi 0, %s16
      %p13 = scmp.ge.s32.totalorder %s12, 6
      %s19 = sphi 0, %s38
      %s20 = sphi 0, %s34
      %s21 = sphi 0, %s30
      %s22 = sphi 0, %s19
      %s23 = sphi 0, %s20
      %s24 = sphi 0, %s21
      %s25 = sphi 0, %s22
      %s26 = sphi 0, %s23
      %s27 = sphi 0, %s24
      %s43 = sphi 0, %s45
      %s46 = sphi 0, %s43
      %s47 = sphi 0, %s46
      %s63 = sphi 0, %s47
      %s71 = sphi 0, %s73
      %s74 = sphi 0, %s71
      %s75 = sphi 0, %s74
      %s91 = sphi 0, %s75
      %s97 = sphi 0, %s99
      %s100 = sphi 0, %s97
      %s101 = sphi 0, %s100
      %s117 = sphi 0, %s101
      %s125 = sphi 0, %s127
      %s128 = sphi 0, %s125
      %s129 = sphi 0, %s128
      %s145 = sphi 0, %s129
    $region4: #{_gconv_forward.7} parent=1 // loop_header_branch
      %15 = sbr.rel (%p13) target = $region8
    $region5: #{_gconv_forward.7} parent=1 // loop_body
      %s17 = ssub.s32 %s12, 1
      %s18 = ssub.s32 %s12, 2
      %s28 = sadd.s32 1, %s21
      %p29 = scmp.ge.s32.totalorder %s28, 2
      %s30 = scalar_select %p29, 0, %s28
      %s31 = sadd.s32 1, %s20
      %s32 = scalar_select %p29, %s31, %s20
      %p33 = scmp.ge.s32.totalorder %s32, 1
      %s34 = scalar_select %p33, 0, %s32
      %s35 = sadd.s32 1, %s19
      %s36 = scalar_select %p33, %s35, %s19
      %p37 = scmp.ge.s32.totalorder %s36, 2
      %s38 = scalar_select %p37, 0, %s36
      %s39 = ssub.s32 %s19, %s38
      %s40 = ssub.s32 %s21, %s30
      %s41 = sor.u32 %s39, %s40
      %p42 = scmp.eq.s32.totalorder %s41, 0
      %s44 = sadd.s32 %s43, 1
      %s45 = scalar_select %p42, %s43, %s44
      %p48 = pneg %p42
      %p49 = scmp.eq.s32.totalorder %s12, 3
      %p50 = por %p48, %p49
      %p51 = scmp.ne.s32.totalorder %s43, %s46
      %p52 = scmp.eq.s32.totalorder %s12, 0
      %p53 = por %p51, %p52
      %p54 = scmp.ne.s32.totalorder %s43, %s46
      %p55 = scmp.eq.s32.totalorder %s17, 3
      %p56 = por %p54, %p55
      %p57 = scmp.ne.s32.totalorder %s46, %s47
      %p58 = scmp.eq.s32.totalorder %s17, 0
      %p59 = por %p57, %p58
      %p60 = scmp.ne.s32.totalorder %s46, %s47
      %p61 = scmp.eq.s32.totalorder %s18, 3
      %p62 = por %p60, %p61
      %p64 = scmp.ne.s32.totalorder %s47, %s63
      %p65 = scmp.eq.s32.totalorder %s18, 0
      %p66 = por %p64, %p65
      %s67 = ssub.s32 %s21, %s30
      %s68 = ssub.s32 %s20, %s34
      %s69 = sor.u32 %s67, %s68
      %p70 = scmp.eq.s32.totalorder %s69, 0
      %s72 = sadd.s32 %s71, 1
      %s73 = scalar_select %p70, %s71, %s72
      %p76 = pneg %p70
      %p77 = scmp.eq.s32.totalorder %s12, 3
      %p78 = por %p76, %p77
      %p79 = scmp.ne.s32.totalorder %s71, %s74
      %p80 = scmp.eq.s32.totalorder %s12, 0
      %p81 = por %p79, %p80
      %p82 = scmp.ne.s32.totalorder %s71, %s74
      %p83 = scmp.eq.s32.totalorder %s17, 3
      %p84 = por %p82, %p83
      %p85 = scmp.ne.s32.totalorder %s74, %s75
      %p86 = scmp.eq.s32.totalorder %s17, 0
      %p87 = por %p85, %p86
      %p88 = scmp.ne.s32.totalorder %s74, %s75
      %p89 = scmp.eq.s32.totalorder %s18, 3
      %p90 = por %p88, %p89
      %p92 = scmp.ne.s32.totalorder %s75, %s91
      %p93 = scmp.eq.s32.totalorder %s18, 0
      %p94 = por %p92, %p93
      %s95 = ssub.s32 %s20, %s34
      %p96 = scmp.eq.s32.totalorder %s95, 0
      %s98 = sadd.s32 %s97, 1
      %s99 = scalar_select %p96, %s97, %s98
      %p102 = pneg %p96
      %p103 = scmp.eq.s32.totalorder %s12, 3
      %p104 = por %p102, %p103
      %p105 = scmp.ne.s32.totalorder %s97, %s100
      %p106 = scmp.eq.s32.totalorder %s12, 0
      %p107 = por %p105, %p106
      %p108 = scmp.ne.s32.totalorder %s97, %s100
      %p109 = scmp.eq.s32.totalorder %s17, 3
      %p110 = por %p108, %p109
      %p111 = scmp.ne.s32.totalorder %s100, %s101
      %p112 = scmp.eq.s32.totalorder %s17, 0
      %p113 = por %p111, %p112
      %p114 = scmp.ne.s32.totalorder %s100, %s101
      %p115 = scmp.eq.s32.totalorder %s18, 3
      %p116 = por %p114, %p115
      %p118 = scmp.ne.s32.totalorder %s101, %s117
      %p119 = scmp.eq.s32.totalorder %s18, 0
      %p120 = por %p118, %p119
      %s121 = ssub.s32 %s19, %s38
      %s122 = ssub.s32 %s20, %s34
      %s123 = sor.u32 %s121, %s122
      %p124 = scmp.eq.s32.totalorder %s123, 0
      %s126 = sadd.s32 %s125, 1
      %s127 = scalar_select %p124, %s125, %s126
      %p130 = pneg %p124
      %p131 = scmp.eq.s32.totalorder %s12, 3
      %p132 = por %p130, %p131
      %p133 = scmp.ne.s32.totalorder %s125, %s128
      %p134 = scmp.eq.s32.totalorder %s12, 0
      %p135 = por %p133, %p134
      %p136 = scmp.ne.s32.totalorder %s125, %s128
      %p137 = scmp.eq.s32.totalorder %s17, 3
      %p138 = por %p136, %p137
      %p139 = scmp.ne.s32.totalorder %s128, %s129
      %p140 = scmp.eq.s32.totalorder %s17, 0
      %p141 = por %p139, %p140
      %p142 = scmp.ne.s32.totalorder %s128, %s129
      %p143 = scmp.eq.s32.totalorder %s18, 3
      %p144 = por %p142, %p143
      %p146 = scmp.ne.s32.totalorder %s129, %s145
      %p147 = scmp.eq.s32.totalorder %s18, 0
      %p148 = por %p146, %p147
      %p149 = scmp.le.s32.totalorder 1, %s12
      %p150 = scmp.lt.s32.totalorder %s12, 5
      %p151 = pnand %p149, %p150
      %p152 = pneg %p151
      // Predicated region
      $region9: #{_gconv_forward.7} parent=5 // pred_check
        _
      $region10: #{_gconv_forward.7} parent=5 // pred_check_branch
        %154 = sbr.rel (%p151) target = $region12
      $region11: #{_gconv_forward.7} parent=5 // pred_region
        %s155 = ssub.s32 %s12, 1
        // Predicated region
        $region13: #{_gconv_forward.7} parent=11 // pred_check
          %p156 = pneg %p113
        $region14: #{_gconv_forward.7} parent=11 // pred_check_branch
          %158 = sbr.rel (%p156) target = $region16
        $region15: #{_gconv_forward.7} parent=11 // pred_region
          %p159 = scmp.lt.s32.totalorder %s23, 0
          %s160 = scalar_select %p159, %s23, 0
          %s161 = scalar_lea.vmem %s2, %s160
        $region16: #{_gconv_forward.7} parent=11 // pred_fallthru
          _
      $region12: #{_gconv_forward.7} parent=5 // pred_fallthru
        _
      %p162 = scmp.lt.s32.totalorder %s12, 4
      // Predicated region
      $region17: #{_gconv_forward.7} parent=5 // pred_check
        %p163 = pneg %p162
      $region18: #{_gconv_forward.7} parent=5 // pred_check_branch
        %165 = sbr.rel (%p163) target = $region20
      $region19: #{_gconv_forward.7} parent=5 // pred_region
        // Predicated region
        $region21: #{_gconv_forward.7} parent=19 // pred_check
          %p166 = pneg %p53
        $region22: #{_gconv_forward.7} parent=19 // pred_check_branch
          %168 = sbr.rel (%p166) target = $region24
        $region23: #{_gconv_forward.7} parent=19 // pred_region
          %s169 = sand.u32 %s43, 1
          %s170 = sand.u32 %s43, 1
          %s171 = smul.addr %s170, 256
          %s172 = scalar_lea.vmem [#allocation3], %s171
          %s173 = smul.u32 32, %s19
          %s174 = smul.u32 2, %s21
          %s175 = smul.addr %s173, 4
          %s176 = sadd.s32 %s174, %s175
          %s177 = smul.addr %s176, 4
          %s178 = scalar_lea.vmem %s0, %s177
          // Predicated region
          $region25: #{_gconv_forward.7} parent=23 // pred_check
            _
          $region26: #{_gconv_forward.7} parent=23 // pred_check_branch
            %180 = sbr.rel (0) target = $region28
          $region27: #{_gconv_forward.7} parent=23 // pred_region
            // Predicated region
            $region29: #{_gconv_forward.7} parent=27 // pred_check
              _
            $region30: #{_gconv_forward.7} parent=27 // pred_check_branch
              %182 = sbr.rel (0) target = $region32
            $region31: #{_gconv_forward.7} parent=27 // pred_region
              // Predicated region
              $region44: #{_gconv_forward.7} parent=31 // pred_check
                _
              $region45: #{_gconv_forward.7} parent=31 // pred_check_branch
                %259 = sbr.rel (0) target = $region47
              $region46: #{_gconv_forward.7} parent=31 // pred_region
                loop: start=0, step=1, limit=1
                $region48: #{_gconv_forward.7} parent=46 // loop_pre_header
                  _
                $region49: #{_gconv_forward.7} parent=46 // loop_header
                  %s261 = sphi 0, %s265
                  %p262 = scmp.ge.s32.totalorder %s261, 1
                  %s266 = sphi %s178, %s178
                  %s267 = sphi %s172, %s172
                $region50: #{_gconv_forward.7} parent=46 // loop_header_branch
                  %264 = sbr.rel (%p262) target = $region54
                $region51: #{_gconv_forward.7} parent=46 // loop_body
                  %v268 = vld [vmem:[%s266] sm:$0xff]
                  %269 = vst [vmem:[%s267] sm:$0xff] %v268
                  %v270 = vld [vmem:[%s266 + $0x10] sm:$0xff]
                  %271 = vst [vmem:[%s267 + $0x8] sm:$0xff] %v270
                  %v272 = vld [vmem:[%s266 + $0x20] sm:$0xff]
                  %273 = vst [vmem:[%s267 + $0x10] sm:$0xff] %v272
                  %v274 = vld [vmem:[%s266 + $0x30] sm:$0xff]
                  %275 = vst [vmem:[%s267 + $0x18] sm:$0xff] %v274
                  %v276 = vld [vmem:[%s266 + $0x40] sm:$0xff]
                  %277 = vst [vmem:[%s267 + $0x20] sm:$0xff] %v276
                  %v278 = vld [vmem:[%s266 + $0x50] sm:$0xff]
                  %279 = vst [vmem:[%s267 + $0x28] sm:$0xff] %v278
                  %v280 = vld [vmem:[%s266 + $0x60] sm:$0xff]
                  %281 = vst [vmem:[%s267 + $0x30] sm:$0xff] %v280
                  %v282 = vld [vmem:[%s266 + $0x70] sm:$0xff]
                  %283 = vst [vmem:[%s267 + $0x38] sm:$0xff] %v282
                  %v284 = vld [vmem:[%s266 + $0x80] sm:$0xff]
                  %285 = vst [vmem:[%s267 + $0x40] sm:$0xff] %v284
                  %v286 = vld [vmem:[%s266 + $0x90] sm:$0xff]
                  %287 = vst [vmem:[%s267 + $0x48] sm:$0xff] %v286
                  %v288 = vld [vmem:[%s266 + $0xa0] sm:$0xff]
                  %289 = vst [vmem:[%s267 + $0x50] sm:$0xff] %v288
                  %v290 = vld [vmem:[%s266 + $0xb0] sm:$0xff]
                  %291 = vst [vmem:[%s267 + $0x58] sm:$0xff] %v290
                  %v292 = vld [vmem:[%s266 + $0xc0] sm:$0xff]
                  %293 = vst [vmem:[%s267 + $0x60] sm:$0xff] %v292
                  %v294 = vld [vmem:[%s266 + $0xd0] sm:$0xff]
                  %295 = vst [vmem:[%s267 + $0x68] sm:$0xff] %v294
                  %v296 = vld [vmem:[%s266 + $0xe0] sm:$0xff]
                  %297 = vst [vmem:[%s267 + $0x70] sm:$0xff] %v296
                  %v298 = vld [vmem:[%s266 + $0xf0] sm:$0xff]
                  %299 = vst [vmem:[%s267 + $0x78] sm:$0xff] %v298
                  %v300 = vld [vmem:[%s266 + $0x100] sm:$0xff]
                  %301 = vst [vmem:[%s267 + $0x80] sm:$0xff] %v300
                  %v302 = vld [vmem:[%s266 + $0x110] sm:$0xff]
                  %303 = vst [vmem:[%s267 + $0x88] sm:$0xff] %v302
                  %v304 = vld [vmem:[%s266 + $0x120] sm:$0xff]
                  %305 = vst [vmem:[%s267 + $0x90] sm:$0xff] %v304
                  %v306 = vld [vmem:[%s266 + $0x130] sm:$0xff]
                  %307 = vst [vmem:[%s267 + $0x98] sm:$0xff] %v306
                  %v308 = vld [vmem:[%s266 + $0x140] sm:$0xff]
                  %309 = vst [vmem:[%s267 + $0xa0] sm:$0xff] %v308
                  %v310 = vld [vmem:[%s266 + $0x150] sm:$0xff]
                  %311 = vst [vmem:[%s267 + $0xa8] sm:$0xff] %v310
                  %v312 = vld [vmem:[%s266 + $0x160] sm:$0xff]
                  %313 = vst [vmem:[%s267 + $0xb0] sm:$0xff] %v312
                  %v314 = vld [vmem:[%s266 + $0x170] sm:$0xff]
                  %315 = vst [vmem:[%s267 + $0xb8] sm:$0xff] %v314
                  %v316 = vld [vmem:[%s266 + $0x180] sm:$0xff]
                  %317 = vst [vmem:[%s267 + $0xc0] sm:$0xff] %v316
                  %v318 = vld [vmem:[%s266 + $0x190] sm:$0xff]
                  %319 = vst [vmem:[%s267 + $0xc8] sm:$0xff] %v318
                  %v320 = vld [vmem:[%s266 + $0x1a0] sm:$0xff]
                  %321 = vst [vmem:[%s267 + $0xd0] sm:$0xff] %v320
                  %v322 = vld [vmem:[%s266 + $0x1b0] sm:$0xff]
                  %323 = vst [vmem:[%s267 + $0xd8] sm:$0xff] %v322
                  %v324 = vld [vmem:[%s266 + $0x1c0] sm:$0xff]
                  %325 = vst [vmem:[%s267 + $0xe0] sm:$0xff] %v324
                  %v326 = vld [vmem:[%s266 + $0x1d0] sm:$0xff]
                  %327 = vst [vmem:[%s267 + $0xe8] sm:$0xff] %v326
                  %v328 = vld [vmem:[%s266 + $0x1e0] sm:$0xff]
                  %329 = vst [vmem:[%s267 + $0xf0] sm:$0xff] %v328
                  %v330 = vld [vmem:[%s266 + $0x1f0] sm:$0xff]
                  %331 = vst [vmem:[%s267 + $0xf8] sm:$0xff] %v330
                $region52: #{_gconv_forward.7} parent=46 // loop_footer
                  %s265 = sadd.s32 1, %s261
                $region53: #{_gconv_forward.7} parent=46 // loop_footer_branch
                  %260 = sbr.rel target = $region49
                $region54: #{_gconv_forward.7} parent=46 // loop_exit
                  _
              $region47: #{_gconv_forward.7} parent=31 // pred_fallthru
                _
              // Predicated region
              $region55: #{_gconv_forward.7} parent=31 // pred_check
                _
              $region56: #{_gconv_forward.7} parent=31 // pred_check_branch
                %333 = sbr.rel target = $region58
              $region57: #{_gconv_forward.7} parent=31 // pred_region
                _
              $region58: #{_gconv_forward.7} parent=31 // pred_fallthru
                _
            $region32: #{_gconv_forward.7} parent=27 // pred_fallthru
              _
            // Predicated region
            $region33: #{_gconv_forward.7} parent=27 // pred_check
              _
            $region34: #{_gconv_forward.7} parent=27 // pred_check_branch
              %184 = sbr.rel target = $region36
            $region35: #{_gconv_forward.7} parent=27 // pred_region
              loop: start=0, step=1, limit=1
              $region37: #{_gconv_forward.7} parent=35 // loop_pre_header
                _
              $region38: #{_gconv_forward.7} parent=35 // loop_header
                %s187 = sphi 0, %s191
                %p188 = scmp.ge.s32.totalorder %s187, 1
                %s192 = sphi %s178, %s178
                %s193 = sphi %s172, %s172
              $region39: #{_gconv_forward.7} parent=35 // loop_header_branch
                %190 = sbr.rel (%p188) target = $region43
              $region40: #{_gconv_forward.7} parent=35 // loop_body
                %v194 = vld [vmem:[%s192] sm:$0xff]
                %195 = vst [vmem:[%s193] sm:$0xff] %v194
                %v196 = vld [vmem:[%s192 + $0x10] sm:$0xff]
                %197 = vst [vmem:[%s193 + $0x8] sm:$0xff] %v196
                %v198 = vld [vmem:[%s192 + $0x20] sm:$0xff]
                %199 = vst [vmem:[%s193 + $0x10] sm:$0xff] %v198
                %v200 = vld [vmem:[%s192 + $0x30] sm:$0xff]
                %201 = vst [vmem:[%s193 + $0x18] sm:$0xff] %v200
                %v202 = vld [vmem:[%s192 + $0x40] sm:$0xff]
                %203 = vst [vmem:[%s193 + $0x20] sm:$0xff] %v202
                %v204 = vld [vmem:[%s192 + $0x50] sm:$0xff]
                %205 = vst [vmem:[%s193 + $0x28] sm:$0xff] %v204
                %v206 = vld [vmem:[%s192 + $0x60] sm:$0xff]
                %207 = vst [vmem:[%s193 + $0x30] sm:$0xff] %v206
                %v208 = vld [vmem:[%s192 + $0x70] sm:$0xff]
                %209 = vst [vmem:[%s193 + $0x38] sm:$0xff] %v208
                %v210 = vld [vmem:[%s192 + $0x80] sm:$0xff]
                %211 = vst [vmem:[%s193 + $0x40] sm:$0xff] %v210
                %v212 = vld [vmem:[%s192 + $0x90] sm:$0xff]
                %213 = vst [vmem:[%s193 + $0x48] sm:$0xff] %v212
                %v214 = vld [vmem:[%s192 + $0xa0] sm:$0xff]
                %215 = vst [vmem:[%s193 + $0x50] sm:$0xff] %v214
                %v216 = vld [vmem:[%s192 + $0xb0] sm:$0xff]
                %217 = vst [vmem:[%s193 + $0x58] sm:$0xff] %v216
                %v218 = vld [vmem:[%s192 + $0xc0] sm:$0xff]
                %219 = vst [vmem:[%s193 + $0x60] sm:$0xff] %v218
                %v220 = vld [vmem:[%s192 + $0xd0] sm:$0xff]
                %221 = vst [vmem:[%s193 + $0x68] sm:$0xff] %v220
                %v222 = vld [vmem:[%s192 + $0xe0] sm:$0xff]
                %223 = vst [vmem:[%s193 + $0x70] sm:$0xff] %v222
                %v224 = vld [vmem:[%s192 + $0xf0] sm:$0xff]
                %225 = vst [vmem:[%s193 + $0x78] sm:$0xff] %v224
                %v226 = vld [vmem:[%s192 + $0x100] sm:$0xff]
                %227 = vst [vmem:[%s193 + $0x80] sm:$0xff] %v226
                %v228 = vld [vmem:[%s192 + $0x110] sm:$0xff]
                %229 = vst [vmem:[%s193 + $0x88] sm:$0xff] %v228
                %v230 = vld [vmem:[%s192 + $0x120] sm:$0xff]
                %231 = vst [vmem:[%s193 + $0x90] sm:$0xff] %v230
                %v232 = vld [vmem:[%s192 + $0x130] sm:$0xff]
                %233 = vst [vmem:[%s193 + $0x98] sm:$0xff] %v232
                %v234 = vld [vmem:[%s192 + $0x140] sm:$0xff]
                %235 = vst [vmem:[%s193 + $0xa0] sm:$0xff] %v234
                %v236 = vld [vmem:[%s192 + $0x150] sm:$0xff]
                %237 = vst [vmem:[%s193 + $0xa8] sm:$0xff] %v236
                %v238 = vld [vmem:[%s192 + $0x160] sm:$0xff]
                %239 = vst [vmem:[%s193 + $0xb0] sm:$0xff] %v238
                %v240 = vld [vmem:[%s192 + $0x170] sm:$0xff]
                %241 = vst [vmem:[%s193 + $0xb8] sm:$0xff] %v240
                %v242 = vld [vmem:[%s192 + $0x180] sm:$0xff]
                %243 = vst [vmem:[%s193 + $0xc0] sm:$0xff] %v242
                %v244 = vld [vmem:[%s192 + $0x190] sm:$0xff]
                %245 = vst [vmem:[%s193 + $0xc8] sm:$0xff] %v244
                %v246 = vld [vmem:[%s192 + $0x1a0] sm:$0xff]
                %247 = vst [vmem:[%s193 + $0xd0] sm:$0xff] %v246
                %v248 = vld [vmem:[%s192 + $0x1b0] sm:$0xff]
                %249 = vst [vmem:[%s193 + $0xd8] sm:$0xff] %v248
                %v250 = vld [vmem:[%s192 + $0x1c0] sm:$0xff]
                %251 = vst [vmem:[%s193 + $0xe0] sm:$0xff] %v250
                %v252 = vld [vmem:[%s192 + $0x1d0] sm:$0xff]
                %253 = vst [vmem:[%s193 + $0xe8] sm:$0xff] %v252
                %v254 = vld [vmem:[%s192 + $0x1e0] sm:$0xff]
                %255 = vst [vmem:[%s193 + $0xf0] sm:$0xff] %v254
                %v256 = vld [vmem:[%s192 + $0x1f0] sm:$0xff]
                %257 = vst [vmem:[%s193 + $0xf8] sm:$0xff] %v256
              $region41: #{_gconv_forward.7} parent=35 // loop_footer
                %s191 = sadd.s32 1, %s187
              $region42: #{_gconv_forward.7} parent=35 // loop_footer_branch
                %186 = sbr.rel target = $region38
              $region43: #{_gconv_forward.7} parent=35 // loop_exit
                _
            $region36: #{_gconv_forward.7} parent=27 // pred_fallthru
              _
          $region28: #{_gconv_forward.7} parent=23 // pred_fallthru
            _
          %334 = vnop
        $region24: #{_gconv_forward.7} parent=19 // pred_fallthru
          _
        // Predicated region
        $region59: #{_gconv_forward.7} parent=19 // pred_check
          %p335 = pneg %p81
        $region60: #{_gconv_forward.7} parent=19 // pred_check_branch
          %337 = sbr.rel (%p335) target = $region62
        $region61: #{_gconv_forward.7} parent=19 // pred_region
          %s338 = smul.u32 32, %s21
          %p339 = scmp.lt.s32.totalorder %s338, 63
          %s340 = scalar_select %p339, %s338, 63
          %p341 = scmp.lt.s32.totalorder %s20, 0
          %s342 = scalar_select %p341, %s20, 0
          %s343 = sadd.s32 %s342, %s340
          %s344 = smul.addr %s343, 4
          %s345 = scalar_lea.vmem %s1, %s344
          %s346 = smul.u32 32, %s21
        $region62: #{_gconv_forward.7} parent=19 // pred_fallthru
          _
      $region20: #{_gconv_forward.7} parent=5 // pred_fallthru
        _
      %p347 = scmp.le.s32.totalorder 1, %s12
      %p348 = scmp.lt.s32.totalorder %s12, 5
      %p349 = pnand %p347, %p348
      %p350 = pneg %p349
      // Predicated region
      $region63: #{_gconv_forward.7} parent=5 // pred_check
        _
      $region64: #{_gconv_forward.7} parent=5 // pred_check_branch
        %352 = sbr.rel (%p349) target = $region66
      $region65: #{_gconv_forward.7} parent=5 // pred_region
        %s353 = ssub.s32 %s12, 1
        %s354 = sand.u32 %s46, 1
        %s355 = sand.u32 %s46, 1
        %s356 = smul.addr %s355, 256
        %s357 = scalar_lea.vmem [#allocation3], %s356
        // Predicated region
        $region67: #{_gconv_forward.7} parent=65 // pred_check
          %p358 = pneg %p59
        $region68: #{_gconv_forward.7} parent=65 // pred_check_branch
          %360 = sbr.rel (%p358) target = $region70
        $region69: #{_gconv_forward.7} parent=65 // pred_region
          _
        $region70: #{_gconv_forward.7} parent=65 // pred_fallthru
          _
        %s361 = sand.u32 %s46, 1
        %s362 = sand.u32 %s46, 1
        %s363 = smul.addr %s362, 256
        %s364 = scalar_lea.vmem [#allocation3], %s363
        %p365 = pneg %p59
        %p366 = pneg %p56
        %s367 = smul.u32 32, %s24
        %p368 = scmp.lt.s32.totalorder %s367, 63
        %s369 = scalar_select %p368, %s367, 63
        %p370 = scmp.lt.s32.totalorder %s23, 0
        %s371 = scalar_select %p370, %s23, 0
        %s372 = sadd.s32 %s371, %s369
        %s373 = smul.addr %s372, 4
        %s374 = scalar_lea.vmem %s1, %s373
        %p375 = pneg %p87
        %p376 = pneg %p84
        %p377 = scmp.lt.s32.totalorder %s23, 0
        %s378 = scalar_select %p377, %s23, 0
        %s379 = scalar_lea.vmem %s2, %s378
        %p380 = pneg %p113
        %p381 = pneg %p110
        %p382 = pneg %p141
        %p383 = pneg %p138
        %s384 = sand.u32 %s128, 1
        %s385 = scalar_lea.sflag [#allocation5], %s384
        %s386 = sand.u32 %s128, 1
        %s387 = smul.addr %s386, 256
        %s388 = scalar_lea.vmem [#allocation4], %s387
        %s389 = smul.u32 32, %s22
        %s390 = smul.u32 2, %s24
        %s391 = smul.u32 32, %s24
        %p392 = scmp.lt.s32.totalorder %s391, 63
        %s393 = scalar_select %p392, %s391, 63
        %p394 = scmp.lt.s32.totalorder %s23, 0
        %s395 = scalar_select %p394, %s23, 0
        %s396 = sadd.s32 %s395, %s393
        %s397 = smul.addr %s396, 4
        %s398 = scalar_lea.vmem %s1, %s397
        %s399 = smul.u32 32, %s24
        %p400 = scmp.lt.s32.totalorder %s23, 0
        %s401 = scalar_select %p400, %s23, 0
        %s402 = scalar_lea.vmem %s2, %s401
        %s403 = smul.u32 32, %s22
        %p405 = scmp.eq.s32.totalorder %s24, 0
        // Predicated region
        $region71: #{_gconv_forward.7} parent=65 // pred_check
          %p406 = pneg %p405
        $region72: #{_gconv_forward.7} parent=65 // pred_check_branch
          %408 = sbr.rel (%p406) target = $region74
        $region73: #{_gconv_forward.7} parent=65 // pred_region
          %409 = vst [vmem:[#allocation2] sm:$0xff] 0.0
          %410 = vst [vmem:[#allocation2 + $0x8] sm:$0xff] 0.0
          %411 = vst [vmem:[#allocation2 + $0x10] sm:$0xff] 0.0
          %412 = vst [vmem:[#allocation2 + $0x18] sm:$0xff] 0.0
          %413 = vst [vmem:[#allocation2 + $0x20] sm:$0xff] 0.0
          %414 = vst [vmem:[#allocation2 + $0x28] sm:$0xff] 0.0
          %415 = vst [vmem:[#allocation2 + $0x30] sm:$0xff] 0.0
          %416 = vst [vmem:[#allocation2 + $0x38] sm:$0xff] 0.0
          %417 = vst [vmem:[#allocation2 + $0x40] sm:$0xff] 0.0
          %418 = vst [vmem:[#allocation2 + $0x48] sm:$0xff] 0.0
          %419 = vst [vmem:[#allocation2 + $0x50] sm:$0xff] 0.0
          %420 = vst [vmem:[#allocation2 + $0x58] sm:$0xff] 0.0
          %421 = vst [vmem:[#allocation2 + $0x60] sm:$0xff] 0.0
          %422 = vst [vmem:[#allocation2 + $0x68] sm:$0xff] 0.0
          %423 = vst [vmem:[#allocation2 + $0x70] sm:$0xff] 0.0
          %424 = vst [vmem:[#allocation2 + $0x78] sm:$0xff] 0.0
          %425 = vst [vmem:[#allocation2 + $0x80] sm:$0xff] 0.0
          %426 = vst [vmem:[#allocation2 + $0x88] sm:$0xff] 0.0
          %427 = vst [vmem:[#allocation2 + $0x90] sm:$0xff] 0.0
          %428 = vst [vmem:[#allocation2 + $0x98] sm:$0xff] 0.0
          %429 = vst [vmem:[#allocation2 + $0xa0] sm:$0xff] 0.0
          %430 = vst [vmem:[#allocation2 + $0xa8] sm:$0xff] 0.0
          %431 = vst [vmem:[#allocation2 + $0xb0] sm:$0xff] 0.0
          %432 = vst [vmem:[#allocation2 + $0xb8] sm:$0xff] 0.0
          %433 = vst [vmem:[#allocation2 + $0xc0] sm:$0xff] 0.0
          %434 = vst [vmem:[#allocation2 + $0xc8] sm:$0xff] 0.0
          %435 = vst [vmem:[#allocation2 + $0xd0] sm:$0xff] 0.0
          %436 = vst [vmem:[#allocation2 + $0xd8] sm:$0xff] 0.0
          %437 = vst [vmem:[#allocation2 + $0xe0] sm:$0xff] 0.0
          %438 = vst [vmem:[#allocation2 + $0xe8] sm:$0xff] 0.0
          %439 = vst [vmem:[#allocation2 + $0xf0] sm:$0xff] 0.0
          %440 = vst [vmem:[#allocation2 + $0xf8] sm:$0xff] 0.0
        $region74: #{_gconv_forward.7} parent=65 // pred_fallthru
          _
        %v441 = vld [vmem:[#allocation2] sm:$0xff]
        %v442 = vld [vmem:[#allocation2 + $0x8] sm:$0xff]
        %v443 = vld [vmem:[#allocation2 + $0x10] sm:$0xff]
        %v444 = vld [vmem:[#allocation2 + $0x18] sm:$0xff]
        %v445 = vld [vmem:[#allocation2 + $0x20] sm:$0xff]
        %v446 = vld [vmem:[#allocation2 + $0x28] sm:$0xff]
        %v447 = vld [vmem:[#allocation2 + $0x30] sm:$0xff]
        %v448 = vld [vmem:[#allocation2 + $0x38] sm:$0xff]
        %v449 = vld [vmem:[#allocation2 + $0x40] sm:$0xff]
        %v450 = vld [vmem:[#allocation2 + $0x48] sm:$0xff]
        %v451 = vld [vmem:[#allocation2 + $0x50] sm:$0xff]
        %v452 = vld [vmem:[#allocation2 + $0x58] sm:$0xff]
        %v453 = vld [vmem:[#allocation2 + $0x60] sm:$0xff]
        %v454 = vld [vmem:[#allocation2 + $0x68] sm:$0xff]
        %v455 = vld [vmem:[#allocation2 + $0x70] sm:$0xff]
        %v456 = vld [vmem:[#allocation2 + $0x78] sm:$0xff]
        %v457 = vld [vmem:[#allocation2 + $0x80] sm:$0xff]
        %v458 = vld [vmem:[#allocation2 + $0x88] sm:$0xff]
        %v459 = vld [vmem:[#allocation2 + $0x90] sm:$0xff]
        %v460 = vld [vmem:[#allocation2 + $0x98] sm:$0xff]
        %v461 = vld [vmem:[#allocation2 + $0xa0] sm:$0xff]
        %v462 = vld [vmem:[#allocation2 + $0xa8] sm:$0xff]
        %v463 = vld [vmem:[#allocation2 + $0xb0] sm:$0xff]
        %v464 = vld [vmem:[#allocation2 + $0xb8] sm:$0xff]
        %v465 = vld [vmem:[#allocation2 + $0xc0] sm:$0xff]
        %v466 = vld [vmem:[#allocation2 + $0xc8] sm:$0xff]
        %v467 = vld [vmem:[#allocation2 + $0xd0] sm:$0xff]
        %v468 = vld [vmem:[#allocation2 + $0xd8] sm:$0xff]
        %v469 = vld [vmem:[#allocation2 + $0xe0] sm:$0xff]
        %v470 = vld [vmem:[#allocation2 + $0xe8] sm:$0xff]
        %v471 = vld [vmem:[#allocation2 + $0xf0] sm:$0xff]
        %v472 = vld [vmem:[#allocation2 + $0xf8] sm:$0xff]
        %v473 = vld [vmem:[%s357] sm:$0xff]
        %v474 = vld [vmem:[%s357 + $0x8] sm:$0xff]
        %v475 = vld [vmem:[%s357 + $0x10] sm:$0xff]
        %v476 = vld [vmem:[%s357 + $0x18] sm:$0xff]
        %v477 = vld [vmem:[%s357 + $0x20] sm:$0xff]
        %v478 = vld [vmem:[%s357 + $0x28] sm:$0xff]
        %v479 = vld [vmem:[%s357 + $0x30] sm:$0xff]
        %v480 = vld [vmem:[%s357 + $0x38] sm:$0xff]
        %v481 = vld [vmem:[%s357 + $0x40] sm:$0xff]
        %v482 = vld [vmem:[%s357 + $0x48] sm:$0xff]
        %v483 = vld [vmem:[%s357 + $0x50] sm:$0xff]
        %v484 = vld [vmem:[%s357 + $0x58] sm:$0xff]
        %v485 = vld [vmem:[%s357 + $0x60] sm:$0xff]
        %v486 = vld [vmem:[%s357 + $0x68] sm:$0xff]
        %v487 = vld [vmem:[%s357 + $0x70] sm:$0xff]
        %v488 = vld [vmem:[%s357 + $0x78] sm:$0xff]
        %v489 = vld [vmem:[%s357 + $0x80] sm:$0xff]
        %v490 = vld [vmem:[%s357 + $0x88] sm:$0xff]
        %v491 = vld [vmem:[%s357 + $0x90] sm:$0xff]
        %v492 = vld [vmem:[%s357 + $0x98] sm:$0xff]
        %v493 = vld [vmem:[%s357 + $0xa0] sm:$0xff]
        %v494 = vld [vmem:[%s357 + $0xa8] sm:$0xff]
        %v495 = vld [vmem:[%s357 + $0xb0] sm:$0xff]
        %v496 = vld [vmem:[%s357 + $0xb8] sm:$0xff]
        %v497 = vld [vmem:[%s357 + $0xc0] sm:$0xff]
        %v498 = vld [vmem:[%s357 + $0xc8] sm:$0xff]
        %v499 = vld [vmem:[%s357 + $0xd0] sm:$0xff]
        %v500 = vld [vmem:[%s357 + $0xd8] sm:$0xff]
        %v501 = vld [vmem:[%s357 + $0xe0] sm:$0xff]
        %v502 = vld [vmem:[%s357 + $0xe8] sm:$0xff]
        %v503 = vld [vmem:[%s357 + $0xf0] sm:$0xff]
        %v504 = vld [vmem:[%s357 + $0xf8] sm:$0xff]
        %v505 = vld [vmem:[%s398] sm:$0xf]
        %v506 = vld [vmem:[%s398 + $0x4] sm:$0xf]
        %v507 = vld [vmem:[%s398 + $0x8] sm:$0xf]
        %v508 = vld [vmem:[%s398 + $0xc] sm:$0xf]
        %v509 = vld [vmem:[%s398 + $0x10] sm:$0xf]
        %v510 = vld [vmem:[%s398 + $0x14] sm:$0xf]
        %v511 = vld [vmem:[%s398 + $0x18] sm:$0xf]
        %v512 = vld [vmem:[%s398 + $0x1c] sm:$0xf]
        %v513 = vld [vmem:[%s398 + $0x20] sm:$0xf]
        %v514 = vld [vmem:[%s398 + $0x24] sm:$0xf]
        %v515 = vld [vmem:[%s398 + $0x28] sm:$0xf]
        %v516 = vld [vmem:[%s398 + $0x2c] sm:$0xf]
        %v517 = vld [vmem:[%s398 + $0x30] sm:$0xf]
        %v518 = vld [vmem:[%s398 + $0x34] sm:$0xf]
        %v519 = vld [vmem:[%s398 + $0x38] sm:$0xf]
        %v520 = vld [vmem:[%s398 + $0x3c] sm:$0xf]
        %v521 = vld [vmem:[%s398 + $0x40] sm:$0xf]
        %v522 = vld [vmem:[%s398 + $0x44] sm:$0xf]
        %v523 = vld [vmem:[%s398 + $0x48] sm:$0xf]
        %v524 = vld [vmem:[%s398 + $0x4c] sm:$0xf]
        %v525 = vld [vmem:[%s398 + $0x50] sm:$0xf]
        %v526 = vld [vmem:[%s398 + $0x54] sm:$0xf]
        %v527 = vld [vmem:[%s398 + $0x58] sm:$0xf]
        %v528 = vld [vmem:[%s398 + $0x5c] sm:$0xf]
        %v529 = vld [vmem:[%s398 + $0x60] sm:$0xf]
        %v530 = vld [vmem:[%s398 + $0x64] sm:$0xf]
        %v531 = vld [vmem:[%s398 + $0x68] sm:$0xf]
        %v532 = vld [vmem:[%s398 + $0x6c] sm:$0xf]
        %v533 = vld [vmem:[%s398 + $0x70] sm:$0xf]
        %v534 = vld [vmem:[%s398 + $0x74] sm:$0xf]
        %v535 = vld [vmem:[%s398 + $0x78] sm:$0xf]
        %v536 = vld [vmem:[%s398 + $0x7c] sm:$0xf]
        %v569 = vunpack.c.l.b16 %v473
        %v570 = vunpack.c.h.b16 %v473
        %v571 = vunpack.c.l.b16 %v474
        %v572 = vunpack.c.h.b16 %v474
        %v573 = vunpack.c.l.b16 %v475
        %v574 = vunpack.c.h.b16 %v475
        %v575 = vunpack.c.l.b16 %v476
        %v576 = vunpack.c.h.b16 %v476
        %v577 = vunpack.c.l.b16 %v477
        %v578 = vunpack.c.h.b16 %v477
        %v579 = vunpack.c.l.b16 %v478
        %v580 = vunpack.c.h.b16 %v478
        %v581 = vunpack.c.l.b16 %v479
        %v582 = vunpack.c.h.b16 %v479
        %v583 = vunpack.c.l.b16 %v480
        %v584 = vunpack.c.h.b16 %v480
        %v585 = vunpack.c.l.b16 %v481
        %v586 = vunpack.c.h.b16 %v481
        %v587 = vunpack.c.l.b16 %v482
        %v588 = vunpack.c.h.b16 %v482
        %v589 = vunpack.c.l.b16 %v483
        %v590 = vunpack.c.h.b16 %v483
        %v591 = vunpack.c.l.b16 %v484
        %v592 = vunpack.c.h.b16 %v484
        %v593 = vunpack.c.l.b16 %v485
        %v594 = vunpack.c.h.b16 %v485
        %v595 = vunpack.c.l.b16 %v486
        %v596 = vunpack.c.h.b16 %v486
        %v597 = vunpack.c.l.b16 %v487
        %v598 = vunpack.c.h.b16 %v487
        %v599 = vunpack.c.l.b16 %v488
        %v600 = vunpack.c.h.b16 %v488
        %v601 = vunpack.c.l.b16 %v489
        %v602 = vunpack.c.h.b16 %v489
        %v603 = vunpack.c.l.b16 %v490
        %v604 = vunpack.c.h.b16 %v490
        %v605 = vunpack.c.l.b16 %v491
        %v606 = vunpack.c.h.b16 %v491
        %v607 = vunpack.c.l.b16 %v492
        %v608 = vunpack.c.h.b16 %v492
        %v609 = vunpack.c.l.b16 %v493
        %v610 = vunpack.c.h.b16 %v493
        %v611 = vunpack.c.l.b16 %v494
        %v612 = vunpack.c.h.b16 %v494
        %v613 = vunpack.c.l.b16 %v495
        %v614 = vunpack.c.h.b16 %v495
        %v615 = vunpack.c.l.b16 %v496
        %v616 = vunpack.c.h.b16 %v496
        %v617 = vunpack.c.l.b16 %v497
        %v618 = vunpack.c.h.b16 %v497
        %v619 = vunpack.c.l.b16 %v498
        %v620 = vunpack.c.h.b16 %v498
        %v621 = vunpack.c.l.b16 %v499
        %v622 = vunpack.c.h.b16 %v499
        %v623 = vunpack.c.l.b16 %v500
        %v624 = vunpack.c.h.b16 %v500
        %v625 = vunpack.c.l.b16 %v501
        %v626 = vunpack.c.h.b16 %v501
        %v627 = vunpack.c.l.b16 %v502
        %v628 = vunpack.c.h.b16 %v502
        %v629 = vunpack.c.l.b16 %v503
        %v630 = vunpack.c.h.b16 %v503
        %v631 = vunpack.c.l.b16 %v504
        %v632 = vunpack.c.h.b16 %v504
        %v633 = vpack.c.b16 %v571, %v569
        %v634 = vpack.c.b16 %v572, %v570
        %v635 = vpack.c.b16 %v575, %v573
        %v636 = vpack.c.b16 %v576, %v574
        %v637 = vpack.c.b16 %v579, %v577
        %v638 = vpack.c.b16 %v580, %v578
        %v639 = vpack.c.b16 %v583, %v581
        %v640 = vpack.c.b16 %v584, %v582
        %v641 = vpack.c.b16 %v587, %v585
        %v642 = vpack.c.b16 %v588, %v586
        %v643 = vpack.c.b16 %v591, %v589
        %v644 = vpack.c.b16 %v592, %v590
        %v645 = vpack.c.b16 %v595, %v593
        %v646 = vpack.c.b16 %v596, %v594
        %v647 = vpack.c.b16 %v599, %v597
        %v648 = vpack.c.b16 %v600, %v598
        %v649 = vpack.c.b16 %v603, %v601
        %v650 = vpack.c.b16 %v604, %v602
        %v651 = vpack.c.b16 %v607, %v605
        %v652 = vpack.c.b16 %v608, %v606
        %v653 = vpack.c.b16 %v611, %v609
        %v654 = vpack.c.b16 %v612, %v610
        %v655 = vpack.c.b16 %v615, %v613
        %v656 = vpack.c.b16 %v616, %v614
        %v657 = vpack.c.b16 %v619, %v617
        %v658 = vpack.c.b16 %v620, %v618
        %v659 = vpack.c.b16 %v623, %v621
        %v660 = vpack.c.b16 %v624, %v622
        %v661 = vpack.c.b16 %v627, %v625
        %v662 = vpack.c.b16 %v628, %v626
        %v663 = vpack.c.b16 %v631, %v629
        %v664 = vpack.c.b16 %v632, %v630
        %v729 = vunpack.c.l.b16 %v505
        %v730 = vunpack.c.l.b16 %v506
        %v731 = vunpack.c.l.b16 %v507
        %v732 = vunpack.c.l.b16 %v508
        %v733 = vunpack.c.l.b16 %v509
        %v734 = vunpack.c.l.b16 %v510
        %v735 = vunpack.c.l.b16 %v511
        %v736 = vunpack.c.l.b16 %v512
        %v737 = vunpack.c.l.b16 %v513
        %v738 = vunpack.c.l.b16 %v514
        %v739 = vunpack.c.l.b16 %v515
        %v740 = vunpack.c.l.b16 %v516
        %v741 = vunpack.c.l.b16 %v517
        %v742 = vunpack.c.l.b16 %v518
        %v743 = vunpack.c.l.b16 %v519
        %v744 = vunpack.c.l.b16 %v520
        %v745 = vunpack.c.l.b16 %v521
        %v746 = vunpack.c.l.b16 %v522
        %v747 = vunpack.c.l.b16 %v523
        %v748 = vunpack.c.l.b16 %v524
        %v749 = vunpack.c.l.b16 %v525
        %v750 = vunpack.c.l.b16 %v526
        %v751 = vunpack.c.l.b16 %v527
        %v752 = vunpack.c.l.b16 %v528
        %v753 = vunpack.c.l.b16 %v529
        %v754 = vunpack.c.l.b16 %v530
        %v755 = vunpack.c.l.b16 %v531
        %v756 = vunpack.c.l.b16 %v532
        %v757 = vunpack.c.l.b16 %v533
        %v758 = vunpack.c.l.b16 %v534
        %v759 = vunpack.c.l.b16 %v535
        %v760 = vunpack.c.l.b16 %v536
        %v761 = vpack.c.b16 %v730, %v729
        %v762 = vpack.c.b16 %v732, %v731
        %v763 = vpack.c.b16 %v734, %v733
        %v764 = vpack.c.b16 %v736, %v735
        %v765 = vpack.c.b16 %v738, %v737
        %v766 = vpack.c.b16 %v740, %v739
        %v767 = vpack.c.b16 %v742, %v741
        %v768 = vpack.c.b16 %v744, %v743
        %v769 = vpack.c.b16 %v746, %v745
        %v770 = vpack.c.b16 %v748, %v747
        %v771 = vpack.c.b16 %v750, %v749
        %v772 = vpack.c.b16 %v752, %v751
        %v773 = vpack.c.b16 %v754, %v753
        %v774 = vpack.c.b16 %v756, %v755
        %v775 = vpack.c.b16 %v758, %v757
        %v776 = vpack.c.b16 %v760, %v759
        %793 = vmatprep.subr.bf16.mxu0 0
        %794 = vmatpush1.bf16.msra.mxu0 %v761
        %795 = vmatprep.subr.bf16.mxu0 0
        %796 = vmatpush1.bf16.msra.mxu0 %v762
        %797 = vmatprep.subr.bf16.mxu0 0
        %798 = vmatpush1.bf16.msra.mxu0 %v763
        %799 = vmatprep.subr.bf16.mxu0 0
        %800 = vmatpush1.bf16.msra.mxu0 %v764
        %801 = vmatprep.subr.bf16.mxu0 0
        %802 = vmatpush1.bf16.msra.mxu0 %v765
        %803 = vmatprep.subr.bf16.mxu0 0
        %804 = vmatpush1.bf16.msra.mxu0 %v766
        %805 = vmatprep.subr.bf16.mxu0 0
        %806 = vmatpush1.bf16.msra.mxu0 %v767
        %807 = vmatprep.subr.bf16.mxu0 0
        %808 = vmatpush1.bf16.msra.mxu0 %v768
        %809 = vmatprep.subr.bf16.mxu0 0
        %810 = vmatpush1.bf16.msra.mxu0 %v769
        %811 = vmatprep.subr.bf16.mxu0 0
        %812 = vmatpush1.bf16.msra.mxu0 %v770
        %813 = vmatprep.subr.bf16.mxu0 0
        %814 = vmatpush1.bf16.msra.mxu0 %v771
        %815 = vmatprep.subr.bf16.mxu0 0
        %816 = vmatpush1.bf16.msra.mxu0 %v772
        %817 = vmatprep.subr.bf16.mxu0 0
        %818 = vmatpush1.bf16.msra.mxu0 %v773
        %819 = vmatprep.subr.bf16.mxu0 0
        %820 = vmatpush1.bf16.msra.mxu0 %v774
        %821 = vmatprep.subr.bf16.mxu0 0
        %822 = vmatpush1.bf16.msra.mxu0 %v775
        %823 = vmatprep.subr.bf16.mxu0 0
        %824 = vmatpush1.bf16.msra.mxu0 %v776
        %825 = vmatprep.mubr.bf16.mxu0 %v634
        %826 = vmatmul.mubr.bf16.gmra.mrb[0].mxu0 %v633
        %v827 = vpop.f32.mrb[0].mxu0
        %v828 = vadd.f32 0.0, %v827
        %v829 = vpop.f32.mrb[0].mxu0
        %v830 = vpop.f32.mrb[0].mxu0
        %v831 = vadd.f32 0.0, %v830
        %v832 = vpop.f32.mrb[0].mxu0
        %833 = vmatprep.mubr.bf16.mxu0 %v636
        %834 = vmatmul.mubr.bf16.gmra.mrb[0].mxu0 %v635
        %v835 = vpop.f32.mrb[0].mxu0
        %v836 = vadd.f32 0.0, %v835
        %v837 = vpop.f32.mrb[0].mxu0
        %v838 = vpop.f32.mrb[0].mxu0
        %v839 = vadd.f32 0.0, %v838
        %v840 = vpop.f32.mrb[0].mxu0
        %841 = vmatprep.mubr.bf16.mxu0 %v638
        %842 = vmatmul.mubr.bf16.gmra.mrb[0].mxu0 %v637
        %v843 = vpop.f32.mrb[0].mxu0
        %v844 = vadd.f32 0.0, %v843
        %v845 = vpop.f32.mrb[0].mxu0
        %v846 = vpop.f32.mrb[0].mxu0
        %v847 = vadd.f32 0.0, %v846
        %v848 = vpop.f32.mrb[0].mxu0
        %849 = vmatprep.mubr.bf16.mxu0 %v640
        %850 = vmatmul.mubr.bf16.gmra.mrb[0].mxu0 %v639
        %v851 = vpop.f32.mrb[0].mxu0
        %v852 = vadd.f32 0.0, %v851
        %v853 = vpop.f32.mrb[0].mxu0
        %v854 = vpop.f32.mrb[0].mxu0
        %v855 = vadd.f32 0.0, %v854
        %v856 = vpop.f32.mrb[0].mxu0
        %857 = vmatprep.mubr.bf16.mxu0 %v642
        %858 = vmatmul.mubr.bf16.gmra.mrb[0].mxu0 %v641
        %v859 = vpop.f32.mrb[0].mxu0
        %v860 = vadd.f32 0.0, %v859
        %v861 = vpop.f32.mrb[0].mxu0
        %v862 = vpop.f32.mrb[0].mxu0
        %v863 = vadd.f32 0.0, %v862
        %v864 = vpop.f32.mrb[0].mxu0
        %865 = vmatprep.mubr.bf16.mxu0 %v644
        %866 = vmatmul.mubr.bf16.gmra.mrb[0].mxu0 %v643
        %v867 = vpop.f32.mrb[0].mxu0
        %v868 = vadd.f32 0.0, %v867
        %v869 = vpop.f32.mrb[0].mxu0
        %v870 = vpop.f32.mrb[0].mxu0
        %v871 = vadd.f32 0.0, %v870
        %v872 = vpop.f32.mrb[0].mxu0
        %873 = vmatprep.mubr.bf16.mxu0 %v646
        %874 = vmatmul.mubr.bf16.gmra.mrb[0].mxu0 %v645
        %v875 = vpop.f32.mrb[0].mxu0
        %v876 = vadd.f32 0.0, %v875
        %v877 = vpop.f32.mrb[0].mxu0
        %v878 = vpop.f32.mrb[0].mxu0
        %v879 = vadd.f32 0.0, %v878
        %v880 = vpop.f32.mrb[0].mxu0
        %881 = vmatprep.mubr.bf16.mxu0 %v648
        %882 = vmatmul.mubr.bf16.gmra.mrb[0].mxu0 %v647
        %v883 = vpop.f32.mrb[0].mxu0
        %v884 = vadd.f32 0.0, %v883
        %v885 = vpop.f32.mrb[0].mxu0
        %v886 = vpop.f32.mrb[0].mxu0
        %v887 = vadd.f32 0.0, %v886
        %v888 = vpop.f32.mrb[0].mxu0
        %889 = vmatprep.mubr.bf16.mxu0 %v650
        %890 = vmatmul.mubr.bf16.gmra.mrb[0].mxu0 %v649
        %v891 = vpop.f32.mrb[0].mxu0
        %v892 = vadd.f32 0.0, %v891
        %v893 = vpop.f32.mrb[0].mxu0
        %v894 = vpop.f32.mrb[0].mxu0
        %v895 = vadd.f32 0.0, %v894
        %v896 = vpop.f32.mrb[0].mxu0
        %897 = vmatprep.mubr.bf16.mxu0 %v652
        %898 = vmatmul.mubr.bf16.gmra.mrb[0].mxu0 %v651
        %v899 = vpop.f32.mrb[0].mxu0
        %v900 = vadd.f32 0.0, %v899
        %v901 = vpop.f32.mrb[0].mxu0
        %v902 = vpop.f32.mrb[0].mxu0
        %v903 = vadd.f32 0.0, %v902
        %v904 = vpop.f32.mrb[0].mxu0
        %905 = vmatprep.mubr.bf16.mxu0 %v654
        %906 = vmatmul.mubr.bf16.gmra.mrb[0].mxu0 %v653
        %v907 = vpop.f32.mrb[0].mxu0
        %v908 = vadd.f32 0.0, %v907
        %v909 = vpop.f32.mrb[0].mxu0
        %v910 = vpop.f32.mrb[0].mxu0
        %v911 = vadd.f32 0.0, %v910
        %v912 = vpop.f32.mrb[0].mxu0
        %913 = vmatprep.mubr.bf16.mxu0 %v656
        %914 = vmatmul.mubr.bf16.gmra.mrb[0].mxu0 %v655
        %v915 = vpop.f32.mrb[0].mxu0
        %v916 = vadd.f32 0.0, %v915
        %v917 = vpop.f32.mrb[0].mxu0
        %v918 = vpop.f32.mrb[0].mxu0
        %v919 = vadd.f32 0.0, %v918
        %v920 = vpop.f32.mrb[0].mxu0
        %921 = vmatprep.mubr.bf16.mxu0 %v658
        %922 = vmatmul.mubr.bf16.gmra.mrb[0].mxu0 %v657
        %v923 = vpop.f32.mrb[0].mxu0
        %v924 = vadd.f32 0.0, %v923
        %v925 = vpop.f32.mrb[0].mxu0
        %v926 = vpop.f32.mrb[0].mxu0
        %v927 = vadd.f32 0.0, %v926
        %v928 = vpop.f32.mrb[0].mxu0
        %929 = vmatprep.mubr.bf16.mxu0 %v660
        %930 = vmatmul.mubr.bf16.gmra.mrb[0].mxu0 %v659
        %v931 = vpop.f32.mrb[0].mxu0
        %v932 = vadd.f32 0.0, %v931
        %v933 = vpop.f32.mrb[0].mxu0
        %v934 = vpop.f32.mrb[0].mxu0
        %v935 = vadd.f32 0.0, %v934
        %v936 = vpop.f32.mrb[0].mxu0
        %937 = vmatprep.mubr.bf16.mxu0 %v662
        %938 = vmatmul.mubr.bf16.gmra.mrb[0].mxu0 %v661
        %v939 = vpop.f32.mrb[0].mxu0
        %v940 = vadd.f32 0.0, %v939
        %v941 = vpop.f32.mrb[0].mxu0
        %v942 = vpop.f32.mrb[0].mxu0
        %v943 = vadd.f32 0.0, %v942
        %v944 = vpop.f32.mrb[0].mxu0
        %945 = vmatprep.mubr.bf16.mxu0 %v664
        %946 = vmatmul.mubr.bf16.gmra.mrb[0].mxu0 %v663
        %v947 = vpop.f32.mrb[0].mxu0
        %v948 = vadd.f32 0.0, %v947
        %v949 = vpop.f32.mrb[0].mxu0
        %v950 = vpop.f32.mrb[0].mxu0
        %v951 = vadd.f32 0.0, %v950
        %v952 = vpop.f32.mrb[0].mxu0
        %953 = vdwg.mxu0
        %v954 = vadd.f32 %v441, %v828
        %v955 = vadd.f32 %v442, %v831
        %v956 = vadd.f32 %v443, %v836
        %v957 = vadd.f32 %v444, %v839
        %v958 = vadd.f32 %v445, %v844
        %v959 = vadd.f32 %v446, %v847
        %v960 = vadd.f32 %v447, %v852
        %v961 = vadd.f32 %v448, %v855
        %v962 = vadd.f32 %v449, %v860
        %v963 = vadd.f32 %v450, %v863
        %v964 = vadd.f32 %v451, %v868
        %v965 = vadd.f32 %v452, %v871
        %v966 = vadd.f32 %v453, %v876
        %v967 = vadd.f32 %v454, %v879
        %v968 = vadd.f32 %v455, %v884
        %v969 = vadd.f32 %v456, %v887
        %v970 = vadd.f32 %v457, %v892
        %v971 = vadd.f32 %v458, %v895
        %v972 = vadd.f32 %v459, %v900
        %v973 = vadd.f32 %v460, %v903
        %v974 = vadd.f32 %v461, %v908
        %v975 = vadd.f32 %v462, %v911
        %v976 = vadd.f32 %v463, %v916
        %v977 = vadd.f32 %v464, %v919
        %v978 = vadd.f32 %v465, %v924
        %v979 = vadd.f32 %v466, %v927
        %v980 = vadd.f32 %v467, %v932
        %v981 = vadd.f32 %v468, %v935
        %v982 = vadd.f32 %v469, %v940
        %v983 = vadd.f32 %v470, %v943
        %v984 = vadd.f32 %v471, %v948
        %v985 = vadd.f32 %v472, %v951
        %986 = vst [vmem:[#allocation2] sm:$0xff] %v954
        %987 = vst [vmem:[#allocation2 + $0x8] sm:$0xff] %v955
        %988 = vst [vmem:[#allocation2 + $0x10] sm:$0xff] %v956
        %989 = vst [vmem:[#allocation2 + $0x18] sm:$0xff] %v957
        %990 = vst [vmem:[#allocation2 + $0x20] sm:$0xff] %v958
        %991 = vst [vmem:[#allocation2 + $0x28] sm:$0xff] %v959
        %992 = vst [vmem:[#allocation2 + $0x30] sm:$0xff] %v960
        %993 = vst [vmem:[#allocation2 + $0x38] sm:$0xff] %v961
        %994 = vst [vmem:[#allocation2 + $0x40] sm:$0xff] %v962
        %995 = vst [vmem:[#allocation2 + $0x48] sm:$0xff] %v963
        %996 = vst [vmem:[#allocation2 + $0x50] sm:$0xff] %v964
        %997 = vst [vmem:[#allocation2 + $0x58] sm:$0xff] %v965
        %998 = vst [vmem:[#allocation2 + $0x60] sm:$0xff] %v966
        %999 = vst [vmem:[#allocation2 + $0x68] sm:$0xff] %v967
        %1000 = vst [vmem:[#allocation2 + $0x70] sm:$0xff] %v968
        %1001 = vst [vmem:[#allocation2 + $0x78] sm:$0xff] %v969
        %1002 = vst [vmem:[#allocation2 + $0x80] sm:$0xff] %v970
        %1003 = vst [vmem:[#allocation2 + $0x88] sm:$0xff] %v971
        %1004 = vst [vmem:[#allocation2 + $0x90] sm:$0xff] %v972
        %1005 = vst [vmem:[#allocation2 + $0x98] sm:$0xff] %v973
        %1006 = vst [vmem:[#allocation2 + $0xa0] sm:$0xff] %v974
        %1007 = vst [vmem:[#allocation2 + $0xa8] sm:$0xff] %v975
        %1008 = vst [vmem:[#allocation2 + $0xb0] sm:$0xff] %v976
        %1009 = vst [vmem:[#allocation2 + $0xb8] sm:$0xff] %v977
        %1010 = vst [vmem:[#allocation2 + $0xc0] sm:$0xff] %v978
        %1011 = vst [vmem:[#allocation2 + $0xc8] sm:$0xff] %v979
        %1012 = vst [vmem:[#allocation2 + $0xd0] sm:$0xff] %v980
        %1013 = vst [vmem:[#allocation2 + $0xd8] sm:$0xff] %v981
        %1014 = vst [vmem:[#allocation2 + $0xe0] sm:$0xff] %v982
        %1015 = vst [vmem:[#allocation2 + $0xe8] sm:$0xff] %v983
        %1016 = vst [vmem:[#allocation2 + $0xf0] sm:$0xff] %v984
        %1017 = vst [vmem:[#allocation2 + $0xf8] sm:$0xff] %v985
        %p1018 = scmp.eq.s32.totalorder %s24, 1
        // Predicated region
        $region75: #{_gconv_forward.7} parent=65 // pred_check
          %p1019 = pneg %p1018
        $region76: #{_gconv_forward.7} parent=65 // pred_check_branch
          %1021 = sbr.rel (%p1019) target = $region78
        $region77: #{_gconv_forward.7} parent=65 // pred_region
          %v1022 = vld [vmem:[#allocation2] sm:$0xff]
          %v1023 = vld [vmem:[#allocation2 + $0x8] sm:$0xff]
          %v1024 = vld [vmem:[#allocation2 + $0x10] sm:$0xff]
          %v1025 = vld [vmem:[#allocation2 + $0x18] sm:$0xff]
          %v1026 = vld [vmem:[#allocation2 + $0x20] sm:$0xff]
          %v1027 = vld [vmem:[#allocation2 + $0x28] sm:$0xff]
          %v1028 = vld [vmem:[#allocation2 + $0x30] sm:$0xff]
          %v1029 = vld [vmem:[#allocation2 + $0x38] sm:$0xff]
          %v1030 = vld [vmem:[#allocation2 + $0x40] sm:$0xff]
          %v1031 = vld [vmem:[#allocation2 + $0x48] sm:$0xff]
          %v1032 = vld [vmem:[#allocation2 + $0x50] sm:$0xff]
          %v1033 = vld [vmem:[#allocation2 + $0x58] sm:$0xff]
          %v1034 = vld [vmem:[#allocation2 + $0x60] sm:$0xff]
          %v1035 = vld [vmem:[#allocation2 + $0x68] sm:$0xff]
          %v1036 = vld [vmem:[#allocation2 + $0x70] sm:$0xff]
          %v1037 = vld [vmem:[#allocation2 + $0x78] sm:$0xff]
          %v1038 = vld [vmem:[#allocation2 + $0x80] sm:$0xff]
          %v1039 = vld [vmem:[#allocation2 + $0x88] sm:$0xff]
          %v1040 = vld [vmem:[#allocation2 + $0x90] sm:$0xff]
          %v1041 = vld [vmem:[#allocation2 + $0x98] sm:$0xff]
          %v1042 = vld [vmem:[#allocation2 + $0xa0] sm:$0xff]
          %v1043 = vld [vmem:[#allocation2 + $0xa8] sm:$0xff]
          %v1044 = vld [vmem:[#allocation2 + $0xb0] sm:$0xff]
          %v1045 = vld [vmem:[#allocation2 + $0xb8] sm:$0xff]
          %v1046 = vld [vmem:[#allocation2 + $0xc0] sm:$0xff]
          %v1047 = vld [vmem:[#allocation2 + $0xc8] sm:$0xff]
          %v1048 = vld [vmem:[#allocation2 + $0xd0] sm:$0xff]
          %v1049 = vld [vmem:[#allocation2 + $0xd8] sm:$0xff]
          %v1050 = vld [vmem:[#allocation2 + $0xe0] sm:$0xff]
          %v1051 = vld [vmem:[#allocation2 + $0xe8] sm:$0xff]
          %v1052 = vld [vmem:[#allocation2 + $0xf0] sm:$0xff]
          %v1053 = vld [vmem:[#allocation2 + $0xf8] sm:$0xff]
          %v1054 = vld [vmem:[%s402] sm:$0x1]
          %v1056 = vlaneseq
          %v1057 = vshrl.u32 %v1056, 7
          %v1058 = vsub.s32 0, %v1057
          %v1059 = vrot.slane %v1054, %v1058
          %v1061 = vadd.f32 %v1022, %v1059
          %v1062 = vadd.f32 %v1023, %v1059
          %v1063 = vadd.f32 %v1024, %v1059
          %v1064 = vadd.f32 %v1025, %v1059
          %v1065 = vadd.f32 %v1026, %v1059
          %v1066 = vadd.f32 %v1027, %v1059
          %v1067 = vadd.f32 %v1028, %v1059
          %v1068 = vadd.f32 %v1029, %v1059
          %v1069 = vadd.f32 %v1030, %v1059
          %v1070 = vadd.f32 %v1031, %v1059
          %v1071 = vadd.f32 %v1032, %v1059
          %v1072 = vadd.f32 %v1033, %v1059
          %v1073 = vadd.f32 %v1034, %v1059
          %v1074 = vadd.f32 %v1035, %v1059
          %v1075 = vadd.f32 %v1036, %v1059
          %v1076 = vadd.f32 %v1037, %v1059
          %v1077 = vadd.f32 %v1038, %v1059
          %v1078 = vadd.f32 %v1039, %v1059
          %v1079 = vadd.f32 %v1040, %v1059
          %v1080 = vadd.f32 %v1041, %v1059
          %v1081 = vadd.f32 %v1042, %v1059
          %v1082 = vadd.f32 %v1043, %v1059
          %v1083 = vadd.f32 %v1044, %v1059
          %v1084 = vadd.f32 %v1045, %v1059
          %v1085 = vadd.f32 %v1046, %v1059
          %v1086 = vadd.f32 %v1047, %v1059
          %v1087 = vadd.f32 %v1048, %v1059
          %v1088 = vadd.f32 %v1049, %v1059
          %v1089 = vadd.f32 %v1050, %v1059
          %v1090 = vadd.f32 %v1051, %v1059
          %v1091 = vadd.f32 %v1052, %v1059
          %v1092 = vadd.f32 %v1053, %v1059
          %1093 = vst [vmem:[%s388] sm:$0xff] %v1061
          %1094 = vst [vmem:[%s388 + $0x8] sm:$0xff] %v1062
          %1095 = vst [vmem:[%s388 + $0x10] sm:$0xff] %v1063
          %1096 = vst [vmem:[%s388 + $0x18] sm:$0xff] %v1064
          %1097 = vst [vmem:[%s388 + $0x20] sm:$0xff] %v1065
          %1098 = vst [vmem:[%s388 + $0x28] sm:$0xff] %v1066
          %1099 = vst [vmem:[%s388 + $0x30] sm:$0xff] %v1067
          %1100 = vst [vmem:[%s388 + $0x38] sm:$0xff] %v1068
          %1101 = vst [vmem:[%s388 + $0x40] sm:$0xff] %v1069
          %1102 = vst [vmem:[%s388 + $0x48] sm:$0xff] %v1070
          %1103 = vst [vmem:[%s388 + $0x50] sm:$0xff] %v1071
          %1104 = vst [vmem:[%s388 + $0x58] sm:$0xff] %v1072
          %1105 = vst [vmem:[%s388 + $0x60] sm:$0xff] %v1073
          %1106 = vst [vmem:[%s388 + $0x68] sm:$0xff] %v1074
          %1107 = vst [vmem:[%s388 + $0x70] sm:$0xff] %v1075
          %1108 = vst [vmem:[%s388 + $0x78] sm:$0xff] %v1076
          %1109 = vst [vmem:[%s388 + $0x80] sm:$0xff] %v1077
          %1110 = vst [vmem:[%s388 + $0x88] sm:$0xff] %v1078
          %1111 = vst [vmem:[%s388 + $0x90] sm:$0xff] %v1079
          %1112 = vst [vmem:[%s388 + $0x98] sm:$0xff] %v1080
          %1113 = vst [vmem:[%s388 + $0xa0] sm:$0xff] %v1081
          %1114 = vst [vmem:[%s388 + $0xa8] sm:$0xff] %v1082
          %1115 = vst [vmem:[%s388 + $0xb0] sm:$0xff] %v1083
          %1116 = vst [vmem:[%s388 + $0xb8] sm:$0xff] %v1084
          %1117 = vst [vmem:[%s388 + $0xc0] sm:$0xff] %v1085
          %1118 = vst [vmem:[%s388 + $0xc8] sm:$0xff] %v1086
          %1119 = vst [vmem:[%s388 + $0xd0] sm:$0xff] %v1087
          %1120 = vst [vmem:[%s388 + $0xd8] sm:$0xff] %v1088
          %1121 = vst [vmem:[%s388 + $0xe0] sm:$0xff] %v1089
          %1122 = vst [vmem:[%s388 + $0xe8] sm:$0xff] %v1090
          %1123 = vst [vmem:[%s388 + $0xf0] sm:$0xff] %v1091
          %1124 = vst [vmem:[%s388 + $0xf8] sm:$0xff] %v1092
        $region78: #{_gconv_forward.7} parent=65 // pred_fallthru
          _
        %s1125 = sand.u32 %s128, 1
        %s1126 = scalar_lea.sflag [#allocation5], %s1125
        %s1127 = sand.u32 %s128, 1
        %s1128 = smul.addr %s1127, 256
        %s1129 = scalar_lea.vmem [#allocation4], %s1128
        // Predicated region
        $region79: #{_gconv_forward.7} parent=65 // pred_check
          %p1130 = pneg %p138
        $region80: #{_gconv_forward.7} parent=65 // pred_check_branch
          %1132 = sbr.rel (%p1130) target = $region82
        $region81: #{_gconv_forward.7} parent=65 // pred_region
          %s1133 = smul.u32 32, %s22
          %s1135 = ssub.s32 4096, 4096
          %1136 = vsyncadd %s1126, %s1135
          %s1137 = sadd.s32 %s23, %s1133
          %s1138 = smul.addr %s1137, 128
          %s1139 = scalar_lea.hbm %s3, %s1138
          %s1140 = sshll.u32 %s1129, 4
          %s1141 = int_to_ptr.vmem [resolvable:$true] %s1140
          %1146 = dma.vmem_to_hbm [thread:$0]  %s1141, 4096, %s1139, %s1126, 128, 128, 8
        $region82: #{_gconv_forward.7} parent=65 // pred_fallthru
          _
      $region66: #{_gconv_forward.7} parent=5 // pred_fallthru
        _
      %p1147 = scmp.le.s32.totalorder 2, %s12
      // Predicated region
      $region83: #{_gconv_forward.7} parent=5 // pred_check
        %p1148 = pneg %p1147
      $region84: #{_gconv_forward.7} parent=5 // pred_check_branch
        %1150 = sbr.rel (%p1148) target = $region86
      $region85: #{_gconv_forward.7} parent=5 // pred_region
        %s1151 = ssub.s32 %s12, 2
        // Predicated region
        $region87: #{_gconv_forward.7} parent=85 // pred_check
          %p1152 = pneg %p144
        $region88: #{_gconv_forward.7} parent=85 // pred_check_branch
          %1154 = sbr.rel (%p1152) target = $region90
        $region89: #{_gconv_forward.7} parent=85 // pred_region
          %s1155 = sand.u32 %s129, 1
          %s1156 = scalar_lea.sflag [#allocation5], %s1155
          %s1157 = sand.u32 %s129, 1
          %s1158 = smul.addr %s1157, 256
          %s1159 = scalar_lea.vmem [#allocation4], %s1158
          %1160 = dma.done %s1156, 4096
        $region90: #{_gconv_forward.7} parent=85 // pred_fallthru
          _
      $region86: #{_gconv_forward.7} parent=5 // pred_fallthru
        _
    $region6: #{_gconv_forward.7} parent=1 // loop_footer
      %s16 = sadd.s32 1, %s12
    $region7: #{_gconv_forward.7} parent=1 // loop_footer_branch
      %11 = sbr.rel target = $region3
    $region8: #{_gconv_forward.7} parent=1 // loop_exit
      _
    %1161 = vsyncpa [#allocation5], 1
    %s1162 = scalar_lea.sflag [#allocation5], 1
    %1163 = vsyncpa %s1162, 1

// kernel: _gconv_forward.6
$region0: #{_gconv_forward.6}
  #allocation0 [shape = 'u32[]', space=smem, size = 0x4, offset = 0x4, fixed_abs, tag = 'smem constant byte address 0x4 - core index']
  #allocation1 [shape = 'u32[144,128]{1,0:T(1,128)}', space=vmem, size = 0x12000, scoped, tag = 'internal scratch']
  #allocation2 [shape = 'f32[1]{0:T(128)S(6)}', space=smem, size = 0x200, scoped, tag = 'scoped memory for _gconv_forward.6']
  %s0 = inlined_call_operand.vmem [shape: f32[512,128], index: 0, kind: input, shape index: {}]
  %s1 = inlined_call_operand.vmem [shape: f32[1,128], index: 1, kind: input, shape index: {}]
  %s2 = inlined_call_operand.vmem [shape: f32[1,128], index: 2, kind: input, shape index: {}]
  %s3 = inlined_call_operand.vmem [shape: f32[1,128], index: 3, kind: input, shape index: {}]
  %s4 = inlined_call_operand.vmem [shape: f32[1,128], index: 4, kind: input, shape index: {}]
  %s5 = inlined_call_operand.<no memory space> [shape: f32[1], index: 5, kind: input, shape index: {}]
  %s6 = inlined_call_operand.vmem [shape: bf16[128,128], index: 6, kind: input, shape index: {}]
  %s7 = inlined_call_operand.vmem [shape: bf16[512,128], index: 7, kind: output, shape index: {}]
  %s8 = sld [smem:[#allocation0]]
  $region61: #{_gconv_forward.6} parent=0
    _
  %s10 = ssub.s32 1, %s8
  %s11 = scalar_select 0, %s10, %s8
  %12 = sst [smem:[#allocation2]] %s5
  loop: start=0, step=1, limit=4
  $region2: #{_gconv_forward.6} parent=0 // loop_pre_header
    _
  $region3: #{_gconv_forward.6} parent=0 // loop_header
    %s14 = sphi 0, %s18
    %p15 = scmp.ge.s32.totalorder %s14, 4
    %s24 = sphi 0, %s26
    %s27 = sphi 0, %s24
    %s28 = sphi 0, %s27
    %s44 = sphi 0, %s28
    %s48 = sphi 0, %s48
    %s50 = sphi 0, %s48
    %s51 = sphi 0, %s50
    %s65 = sphi 0, %s51
    %s69 = sphi 0, %s69
    %s71 = sphi 0, %s69
    %s72 = sphi 0, %s71
    %s86 = sphi 0, %s72
    %s90 = sphi 0, %s90
    %s92 = sphi 0, %s90
    %s93 = sphi 0, %s92
    %s107 = sphi 0, %s93
    %s111 = sphi 0, %s111
    %s113 = sphi 0, %s111
    %s114 = sphi 0, %s113
    %s128 = sphi 0, %s114
    %s132 = sphi 0, %s132
    %s134 = sphi 0, %s132
    %s135 = sphi 0, %s134
    %s149 = sphi 0, %s135
    %s153 = sphi 0, %s153
    %s155 = sphi 0, %s153
    %s156 = sphi 0, %s155
    %s170 = sphi 0, %s156
    %s176 = sphi 0, %s178
    %s179 = sphi 0, %s176
    %s180 = sphi 0, %s179
    %s196 = sphi 0, %s180
  $region4: #{_gconv_forward.6} parent=0 // loop_header_branch
    %17 = sbr.rel (%p15) target = $region8
  $region5: #{_gconv_forward.6} parent=0 // loop_body
    %s19 = ssub.s32 %s14, 1
    %s20 = ssub.s32 %s14, 2
    %s21 = sadd.s32 %s14, 1
    %s22 = ssub.s32 %s14, %s21
    %p23 = scmp.eq.s32.totalorder %s22, 0
    %s25 = sadd.s32 %s24, 1
    %s26 = scalar_select %p23, %s24, %s25
    %p29 = pneg %p23
    %p30 = scmp.eq.s32.totalorder %s14, 1
    %p31 = por %p29, %p30
    %p32 = scmp.ne.s32.totalorder %s24, %s27
    %p33 = scmp.eq.s32.totalorder %s14, 0
    %p34 = por %p32, %p33
    %p35 = scmp.ne.s32.totalorder %s24, %s27
    %p36 = scmp.eq.s32.totalorder %s19, 1
    %p37 = por %p35, %p36
    %p38 = scmp.ne.s32.totalorder %s27, %s28
    %p39 = scmp.eq.s32.totalorder %s19, 0
    %p40 = por %p38, %p39
    %p41 = scmp.ne.s32.totalorder %s27, %s28
    %p42 = scmp.eq.s32.totalorder %s20, 1
    %p43 = por %p41, %p42
    %p45 = scmp.ne.s32.totalorder %s28, %s44
    %p46 = scmp.eq.s32.totalorder %s20, 0
    %p47 = por %p45, %p46
    %s49 = sadd.s32 %s48, 1
    %p52 = scmp.eq.s32.totalorder %s14, 1
    %p53 = scmp.ne.s32.totalorder %s48, %s50
    %p54 = scmp.eq.s32.totalorder %s14, 0
    %p55 = por %p53, %p54
    %p56 = scmp.ne.s32.totalorder %s48, %s50
    %p57 = scmp.eq.s32.totalorder %s19, 1
    %p58 = por %p56, %p57
    %p59 = scmp.ne.s32.totalorder %s50, %s51
    %p60 = scmp.eq.s32.totalorder %s19, 0
    %p61 = por %p59, %p60
    %p62 = scmp.ne.s32.totalorder %s50, %s51
    %p63 = scmp.eq.s32.totalorder %s20, 1
    %p64 = por %p62, %p63
    %p66 = scmp.ne.s32.totalorder %s51, %s65
    %p67 = scmp.eq.s32.totalorder %s20, 0
    %p68 = por %p66, %p67
    %s70 = sadd.s32 %s69, 1
    %p73 = scmp.eq.s32.totalorder %s14, 1
    %p74 = scmp.ne.s32.totalorder %s69, %s71
    %p75 = scmp.eq.s32.totalorder %s14, 0
    %p76 = por %p74, %p75
    %p77 = scmp.ne.s32.totalorder %s69, %s71
    %p78 = scmp.eq.s32.totalorder %s19, 1
    %p79 = por %p77, %p78
    %p80 = scmp.ne.s32.totalorder %s71, %s72
    %p81 = scmp.eq.s32.totalorder %s19, 0
    %p82 = por %p80, %p81
    %p83 = scmp.ne.s32.totalorder %s71, %s72
    %p84 = scmp.eq.s32.totalorder %s20, 1
    %p85 = por %p83, %p84
    %p87 = scmp.ne.s32.totalorder %s72, %s86
    %p88 = scmp.eq.s32.totalorder %s20, 0
    %p89 = por %p87, %p88
    %s91 = sadd.s32 %s90, 1
    %p94 = scmp.eq.s32.totalorder %s14, 1
    %p95 = scmp.ne.s32.totalorder %s90, %s92
    %p96 = scmp.eq.s32.totalorder %s14, 0
    %p97 = por %p95, %p96
    %p98 = scmp.ne.s32.totalorder %s90, %s92
    %p99 = scmp.eq.s32.totalorder %s19, 1
    %p100 = por %p98, %p99
    %p101 = scmp.ne.s32.totalorder %s92, %s93
    %p102 = scmp.eq.s32.totalorder %s19, 0
    %p103 = por %p101, %p102
    %p104 = scmp.ne.s32.totalorder %s92, %s93
    %p105 = scmp.eq.s32.totalorder %s20, 1
    %p106 = por %p104, %p105
    %p108 = scmp.ne.s32.totalorder %s93, %s107
    %p109 = scmp.eq.s32.totalorder %s20, 0
    %p110 = por %p108, %p109
    %s112 = sadd.s32 %s111, 1
    %p115 = scmp.eq.s32.totalorder %s14, 1
    %p116 = scmp.ne.s32.totalorder %s111, %s113
    %p117 = scmp.eq.s32.totalorder %s14, 0
    %p118 = por %p116, %p117
    %p119 = scmp.ne.s32.totalorder %s111, %s113
    %p120 = scmp.eq.s32.totalorder %s19, 1
    %p121 = por %p119, %p120
    %p122 = scmp.ne.s32.totalorder %s113, %s114
    %p123 = scmp.eq.s32.totalorder %s19, 0
    %p124 = por %p122, %p123
    %p125 = scmp.ne.s32.totalorder %s113, %s114
    %p126 = scmp.eq.s32.totalorder %s20, 1
    %p127 = por %p125, %p126
    %p129 = scmp.ne.s32.totalorder %s114, %s128
    %p130 = scmp.eq.s32.totalorder %s20, 0
    %p131 = por %p129, %p130
    %s133 = sadd.s32 %s132, 1
    %p136 = scmp.eq.s32.totalorder %s14, 1
    %p137 = scmp.ne.s32.totalorder %s132, %s134
    %p138 = scmp.eq.s32.totalorder %s14, 0
    %p139 = por %p137, %p138
    %p140 = scmp.ne.s32.totalorder %s132, %s134
    %p141 = scmp.eq.s32.totalorder %s19, 1
    %p142 = por %p140, %p141
    %p143 = scmp.ne.s32.totalorder %s134, %s135
    %p144 = scmp.eq.s32.totalorder %s19, 0
    %p145 = por %p143, %p144
    %p146 = scmp.ne.s32.totalorder %s134, %s135
    %p147 = scmp.eq.s32.totalorder %s20, 1
    %p148 = por %p146, %p147
    %p150 = scmp.ne.s32.totalorder %s135, %s149
    %p151 = scmp.eq.s32.totalorder %s20, 0
    %p152 = por %p150, %p151
    %s154 = sadd.s32 %s153, 1
    %p157 = scmp.eq.s32.totalorder %s14, 1
    %p158 = scmp.ne.s32.totalorder %s153, %s155
    %p159 = scmp.eq.s32.totalorder %s14, 0
    %p160 = por %p158, %p159
    %p161 = scmp.ne.s32.totalorder %s153, %s155
    %p162 = scmp.eq.s32.totalorder %s19, 1
    %p163 = por %p161, %p162
    %p164 = scmp.ne.s32.totalorder %s155, %s156
    %p165 = scmp.eq.s32.totalorder %s19, 0
    %p166 = por %p164, %p165
    %p167 = scmp.ne.s32.totalorder %s155, %s156
    %p168 = scmp.eq.s32.totalorder %s20, 1
    %p169 = por %p167, %p168
    %p171 = scmp.ne.s32.totalorder %s156, %s170
    %p172 = scmp.eq.s32.totalorder %s20, 0
    %p173 = por %p171, %p172
    %s174 = ssub.s32 %s14, %s21
    %p175 = scmp.eq.s32.totalorder %s174, 0
    %s177 = sadd.s32 %s176, 1
    %s178 = scalar_select %p175, %s176, %s177
    %p181 = pneg %p175
    %p182 = scmp.eq.s32.totalorder %s14, 1
    %p183 = por %p181, %p182
    %p184 = scmp.ne.s32.totalorder %s176, %s179
    %p185 = scmp.eq.s32.totalorder %s14, 0
    %p186 = por %p184, %p185
    %p187 = scmp.ne.s32.totalorder %s176, %s179
    %p188 = scmp.eq.s32.totalorder %s19, 1
    %p189 = por %p187, %p188
    %p190 = scmp.ne.s32.totalorder %s179, %s180
    %p191 = scmp.eq.s32.totalorder %s19, 0
    %p192 = por %p190, %p191
    %p193 = scmp.ne.s32.totalorder %s179, %s180
    %p194 = scmp.eq.s32.totalorder %s20, 1
    %p195 = por %p193, %p194
    %p197 = scmp.ne.s32.totalorder %s180, %s196
    %p198 = scmp.eq.s32.totalorder %s20, 0
    %p199 = por %p197, %p198
    %p200 = scmp.le.s32.totalorder 1, %s14
    %p201 = scmp.lt.s32.totalorder %s14, 3
    %p202 = pnand %p200, %p201
    %p203 = pneg %p202
    // Predicated region
    $region9: #{_gconv_forward.6} parent=5 // pred_check
      _
    $region10: #{_gconv_forward.6} parent=5 // pred_check_branch
      %205 = sbr.rel (%p202) target = $region12
    $region11: #{_gconv_forward.6} parent=5 // pred_region
      %s206 = ssub.s32 %s14, 1
      // Predicated region
      $region13: #{_gconv_forward.6} parent=11 // pred_check
        %p207 = pneg %p61
      $region14: #{_gconv_forward.6} parent=11 // pred_check_branch
        %209 = sbr.rel (%p207) target = $region16
      $region15: #{_gconv_forward.6} parent=11 // pred_region
        _
      $region16: #{_gconv_forward.6} parent=11 // pred_fallthru
        _
      // Predicated region
      $region17: #{_gconv_forward.6} parent=11 // pred_check
        %p210 = pneg %p82
      $region18: #{_gconv_forward.6} parent=11 // pred_check_branch
        %212 = sbr.rel (%p210) target = $region20
      $region19: #{_gconv_forward.6} parent=11 // pred_region
        _
      $region20: #{_gconv_forward.6} parent=11 // pred_fallthru
        _
      // Predicated region
      $region21: #{_gconv_forward.6} parent=11 // pred_check
        %p213 = pneg %p103
      $region22: #{_gconv_forward.6} parent=11 // pred_check_branch
        %215 = sbr.rel (%p213) target = $region24
      $region23: #{_gconv_forward.6} parent=11 // pred_region
        _
      $region24: #{_gconv_forward.6} parent=11 // pred_fallthru
        _
      // Predicated region
      $region25: #{_gconv_forward.6} parent=11 // pred_check
        %p216 = pneg %p124
      $region26: #{_gconv_forward.6} parent=11 // pred_check_branch
        %218 = sbr.rel (%p216) target = $region28
      $region27: #{_gconv_forward.6} parent=11 // pred_region
        _
      $region28: #{_gconv_forward.6} parent=11 // pred_fallthru
        _
      // Predicated region
      $region29: #{_gconv_forward.6} parent=11 // pred_check
        %p219 = pneg %p145
      $region30: #{_gconv_forward.6} parent=11 // pred_check_branch
        %221 = sbr.rel (%p219) target = $region32
      $region31: #{_gconv_forward.6} parent=11 // pred_region
        _
      $region32: #{_gconv_forward.6} parent=11 // pred_fallthru
        _
      // Predicated region
      $region33: #{_gconv_forward.6} parent=11 // pred_check
        %p222 = pneg %p166
      $region34: #{_gconv_forward.6} parent=11 // pred_check_branch
        %224 = sbr.rel (%p222) target = $region36
      $region35: #{_gconv_forward.6} parent=11 // pred_region
        _
      $region36: #{_gconv_forward.6} parent=11 // pred_fallthru
        _
    $region12: #{_gconv_forward.6} parent=5 // pred_fallthru
      _
    %p225 = scmp.lt.s32.totalorder %s14, 2
    // Predicated region
    $region37: #{_gconv_forward.6} parent=5 // pred_check
      %p226 = pneg %p225
    $region38: #{_gconv_forward.6} parent=5 // pred_check_branch
      %228 = sbr.rel (%p226) target = $region40
    $region39: #{_gconv_forward.6} parent=5 // pred_region
      // Predicated region
      $region41: #{_gconv_forward.6} parent=39 // pred_check
        %p229 = pneg %p34
      $region42: #{_gconv_forward.6} parent=39 // pred_check_branch
        %231 = sbr.rel (%p229) target = $region44
      $region43: #{_gconv_forward.6} parent=39 // pred_region
        %s232 = smul.u32 32, %s14
        %p233 = scmp.lt.s32.totalorder %s232, 63
        %s234 = scalar_select %p233, %s232, 63
        %s235 = smul.addr %s234, 8
        %s236 = scalar_lea.vmem %s0, %s235
        %s237 = smul.u32 32, %s14
      $region44: #{_gconv_forward.6} parent=39 // pred_fallthru
        _
    $region40: #{_gconv_forward.6} parent=5 // pred_fallthru
      _
    %p238 = scmp.le.s32.totalorder 1, %s14
    %p239 = scmp.lt.s32.totalorder %s14, 3
    %p240 = pnand %p238, %p239
    %p241 = pneg %p240
    // Predicated region
    $region45: #{_gconv_forward.6} parent=5 // pred_check
      _
    $region46: #{_gconv_forward.6} parent=5 // pred_check_branch
      %243 = sbr.rel (%p240) target = $region48
    $region47: #{_gconv_forward.6} parent=5 // pred_region
      %s244 = ssub.s32 %s14, 1
      %s245 = smul.u32 32, %s19
      %p246 = scmp.lt.s32.totalorder %s245, 63
      %s247 = scalar_select %p246, %s245, 63
      %s248 = smul.addr %s247, 8
      %s249 = scalar_lea.vmem %s0, %s248
      %p250 = pneg %p40
      %p251 = pneg %p37
      %p252 = pneg %p61
      %p253 = pneg %p58
      %p254 = pneg %p82
      %p255 = pneg %p79
      %p256 = pneg %p103
      %p257 = pneg %p100
      %p258 = pneg %p124
      %p259 = pneg %p121
      %p260 = pneg %p145
      %p261 = pneg %p142
      %p262 = pneg %p166
      %p263 = pneg %p163
      %p264 = pneg %p192
      %p265 = pneg %p189
      %s266 = smul.u32 32, %s19
      %p267 = scmp.lt.s32.totalorder %s266, 63
      %s268 = scalar_select %p267, %s266, 63
      %s269 = smul.addr %s268, 4
      %s270 = scalar_lea.vmem %s7, %s269
      %s271 = smul.u32 32, %s19
      %p272 = scmp.lt.s32.totalorder %s271, 63
      %s273 = scalar_select %p272, %s271, 63
      %s274 = smul.addr %s273, 8
      %s275 = scalar_lea.vmem %s0, %s274
      %s276 = smul.u32 32, %s19
      %s277 = smul.u32 32, %s19
      %p278 = scmp.lt.s32.totalorder %s277, 63
      %s279 = scalar_select %p278, %s277, 63
      %s280 = smul.addr %s279, 4
      %s281 = scalar_lea.vmem %s7, %s280
      %s282 = smul.u32 32, %s19
      %v284 = vld [vmem:[%s275] sm:$0xff]
      %v285 = vld [vmem:[%s275 + $0x8] sm:$0xff]
      %v286 = vld [vmem:[%s275 + $0x10] sm:$0xff]
      %v287 = vld [vmem:[%s275 + $0x18] sm:$0xff]
      %v288 = vld [vmem:[%s275 + $0x20] sm:$0xff]
      %v289 = vld [vmem:[%s275 + $0x28] sm:$0xff]
      %v290 = vld [vmem:[%s275 + $0x30] sm:$0xff]
      %v291 = vld [vmem:[%s275 + $0x38] sm:$0xff]
      %v292 = vld [vmem:[%s275 + $0x40] sm:$0xff]
      %v293 = vld [vmem:[%s275 + $0x48] sm:$0xff]
      %v294 = vld [vmem:[%s275 + $0x50] sm:$0xff]
      %v295 = vld [vmem:[%s275 + $0x58] sm:$0xff]
      %v296 = vld [vmem:[%s275 + $0x60] sm:$0xff]
      %v297 = vld [vmem:[%s275 + $0x68] sm:$0xff]
      %v298 = vld [vmem:[%s275 + $0x70] sm:$0xff]
      %v299 = vld [vmem:[%s275 + $0x78] sm:$0xff]
      %v300 = vld [vmem:[%s275 + $0x80] sm:$0xff]
      %v301 = vld [vmem:[%s275 + $0x88] sm:$0xff]
      %v302 = vld [vmem:[%s275 + $0x90] sm:$0xff]
      %v303 = vld [vmem:[%s275 + $0x98] sm:$0xff]
      %v304 = vld [vmem:[%s275 + $0xa0] sm:$0xff]
      %v305 = vld [vmem:[%s275 + $0xa8] sm:$0xff]
      %v306 = vld [vmem:[%s275 + $0xb0] sm:$0xff]
      %v307 = vld [vmem:[%s275 + $0xb8] sm:$0xff]
      %v308 = vld [vmem:[%s275 + $0xc0] sm:$0xff]
      %v309 = vld [vmem:[%s275 + $0xc8] sm:$0xff]
      %v310 = vld [vmem:[%s275 + $0xd0] sm:$0xff]
      %v311 = vld [vmem:[%s275 + $0xd8] sm:$0xff]
      %v312 = vld [vmem:[%s275 + $0xe0] sm:$0xff]
      %v313 = vld [vmem:[%s275 + $0xe8] sm:$0xff]
      %v314 = vld [vmem:[%s275 + $0xf0] sm:$0xff]
      %v315 = vld [vmem:[%s275 + $0xf8] sm:$0xff]
      %v316 = vld [vmem:[%s1] sm:$0x1]
      %v318 = vlaneseq
      %v319 = vshrl.u32 %v318, 7
      %v320 = vsub.s32 0, %v319
      %v321 = vrot.slane %v316, %v320
      %v323 = vsub.f32 %v284, %v321
      %v324 = vsub.f32 %v285, %v321
      %v325 = vsub.f32 %v286, %v321
      %v326 = vsub.f32 %v287, %v321
      %v327 = vsub.f32 %v288, %v321
      %v328 = vsub.f32 %v289, %v321
      %v329 = vsub.f32 %v290, %v321
      %v330 = vsub.f32 %v291, %v321
      %v331 = vsub.f32 %v292, %v321
      %v332 = vsub.f32 %v293, %v321
      %v333 = vsub.f32 %v294, %v321
      %v334 = vsub.f32 %v295, %v321
      %v335 = vsub.f32 %v296, %v321
      %v336 = vsub.f32 %v297, %v321
      %v337 = vsub.f32 %v298, %v321
      %v338 = vsub.f32 %v299, %v321
      %v339 = vsub.f32 %v300, %v321
      %v340 = vsub.f32 %v301, %v321
      %v341 = vsub.f32 %v302, %v321
      %v342 = vsub.f32 %v303, %v321
      %v343 = vsub.f32 %v304, %v321
      %v344 = vsub.f32 %v305, %v321
      %v345 = vsub.f32 %v306, %v321
      %v346 = vsub.f32 %v307, %v321
      %v347 = vsub.f32 %v308, %v321
      %v348 = vsub.f32 %v309, %v321
      %v349 = vsub.f32 %v310, %v321
      %v350 = vsub.f32 %v311, %v321
      %v351 = vsub.f32 %v312, %v321
      %v352 = vsub.f32 %v313, %v321
      %v353 = vsub.f32 %v314, %v321
      %v354 = vsub.f32 %v315, %v321
      %v355 = vld [vmem:[%s2] sm:$0x1]
      %v357 = vlaneseq
      %v358 = vshrl.u32 %v357, 7
      %v359 = vsub.s32 0, %v358
      %v360 = vrot.slane %v355, %v359
      %v362 = vmul.f32 %v323, %v360
      %v363 = vmul.f32 %v324, %v360
      %v364 = vmul.f32 %v325, %v360
      %v365 = vmul.f32 %v326, %v360
      %v366 = vmul.f32 %v327, %v360
      %v367 = vmul.f32 %v328, %v360
      %v368 = vmul.f32 %v329, %v360
      %v369 = vmul.f32 %v330, %v360
      %v370 = vmul.f32 %v331, %v360
      %v371 = vmul.f32 %v332, %v360
      %v372 = vmul.f32 %v333, %v360
      %v373 = vmul.f32 %v334, %v360
      %v374 = vmul.f32 %v335, %v360
      %v375 = vmul.f32 %v336, %v360
      %v376 = vmul.f32 %v337, %v360
      %v377 = vmul.f32 %v338, %v360
      %v378 = vmul.f32 %v339, %v360
      %v379 = vmul.f32 %v340, %v360
      %v380 = vmul.f32 %v341, %v360
      %v381 = vmul.f32 %v342, %v360
      %v382 = vmul.f32 %v343, %v360
      %v383 = vmul.f32 %v344, %v360
      %v384 = vmul.f32 %v345, %v360
      %v385 = vmul.f32 %v346, %v360
      %v386 = vmul.f32 %v347, %v360
      %v387 = vmul.f32 %v348, %v360
      %v388 = vmul.f32 %v349, %v360
      %v389 = vmul.f32 %v350, %v360
      %v390 = vmul.f32 %v351, %v360
      %v391 = vmul.f32 %v352, %v360
      %v392 = vmul.f32 %v353, %v360
      %v393 = vmul.f32 %v354, %v360
      %v394 = vld [vmem:[%s3] sm:$0x1]
      %v396 = vlaneseq
      %v397 = vshrl.u32 %v396, 7
      %v398 = vsub.s32 0, %v397
      %v399 = vrot.slane %v394, %v398
      %v401 = vmul.f32 %v362, %v399
      %v402 = vmul.f32 %v363, %v399
      %v403 = vmul.f32 %v364, %v399
      %v404 = vmul.f32 %v365, %v399
      %v405 = vmul.f32 %v366, %v399
      %v406 = vmul.f32 %v367, %v399
      %v407 = vmul.f32 %v368, %v399
      %v408 = vmul.f32 %v369, %v399
      %v409 = vmul.f32 %v370, %v399
      %v410 = vmul.f32 %v371, %v399
      %v411 = vmul.f32 %v372, %v399
      %v412 = vmul.f32 %v373, %v399
      %v413 = vmul.f32 %v374, %v399
      %v414 = vmul.f32 %v375, %v399
      %v415 = vmul.f32 %v376, %v399
      %v416 = vmul.f32 %v377, %v399
      %v417 = vmul.f32 %v378, %v399
      %v418 = vmul.f32 %v379, %v399
      %v419 = vmul.f32 %v380, %v399
      %v420 = vmul.f32 %v381, %v399
      %v421 = vmul.f32 %v382, %v399
      %v422 = vmul.f32 %v383, %v399
      %v423 = vmul.f32 %v384, %v399
      %v424 = vmul.f32 %v385, %v399
      %v425 = vmul.f32 %v386, %v399
      %v426 = vmul.f32 %v387, %v399
      %v427 = vmul.f32 %v388, %v399
      %v428 = vmul.f32 %v389, %v399
      %v429 = vmul.f32 %v390, %v399
      %v430 = vmul.f32 %v391, %v399
      %v431 = vmul.f32 %v392, %v399
      %v432 = vmul.f32 %v393, %v399
      %v433 = vld [vmem:[%s4] sm:$0x1]
      %v435 = vlaneseq
      %v436 = vshrl.u32 %v435, 7
      %v437 = vsub.s32 0, %v436
      %v438 = vrot.slane %v433, %v437
      %v440 = vadd.f32 %v401, %v438
      %v441 = vadd.f32 %v402, %v438
      %v442 = vadd.f32 %v403, %v438
      %v443 = vadd.f32 %v404, %v438
      %v444 = vadd.f32 %v405, %v438
      %v445 = vadd.f32 %v406, %v438
      %v446 = vadd.f32 %v407, %v438
      %v447 = vadd.f32 %v408, %v438
      %v448 = vadd.f32 %v409, %v438
      %v449 = vadd.f32 %v410, %v438
      %v450 = vadd.f32 %v411, %v438
      %v451 = vadd.f32 %v412, %v438
      %v452 = vadd.f32 %v413, %v438
      %v453 = vadd.f32 %v414, %v438
      %v454 = vadd.f32 %v415, %v438
      %v455 = vadd.f32 %v416, %v438
      %v456 = vadd.f32 %v417, %v438
      %v457 = vadd.f32 %v418, %v438
      %v458 = vadd.f32 %v419, %v438
      %v459 = vadd.f32 %v420, %v438
      %v460 = vadd.f32 %v421, %v438
      %v461 = vadd.f32 %v422, %v438
      %v462 = vadd.f32 %v423, %v438
      %v463 = vadd.f32 %v424, %v438
      %v464 = vadd.f32 %v425, %v438
      %v465 = vadd.f32 %v426, %v438
      %v466 = vadd.f32 %v427, %v438
      %v467 = vadd.f32 %v428, %v438
      %v468 = vadd.f32 %v429, %v438
      %v469 = vadd.f32 %v430, %v438
      %v470 = vadd.f32 %v431, %v438
      %v471 = vadd.f32 %v432, %v438
      %s472 = sld [smem:[#allocation2]]
      %vm473 = vcmp.gt.f32.partialorder %v440, 0.0
      %vm474 = vcmp.gt.f32.partialorder %v441, 0.0
      %vm475 = vcmp.gt.f32.partialorder %v442, 0.0
      %vm476 = vcmp.gt.f32.partialorder %v443, 0.0
      %vm477 = vcmp.gt.f32.partialorder %v444, 0.0
      %vm478 = vcmp.gt.f32.partialorder %v445, 0.0
      %vm479 = vcmp.gt.f32.partialorder %v446, 0.0
      %vm480 = vcmp.gt.f32.partialorder %v447, 0.0
      %vm481 = vcmp.gt.f32.partialorder %v448, 0.0
      %vm482 = vcmp.gt.f32.partialorder %v449, 0.0
      %vm483 = vcmp.gt.f32.partialorder %v450, 0.0
      %vm484 = vcmp.gt.f32.partialorder %v451, 0.0
      %vm485 = vcmp.gt.f32.partialorder %v452, 0.0
      %vm486 = vcmp.gt.f32.partialorder %v453, 0.0
      %vm487 = vcmp.gt.f32.partialorder %v454, 0.0
      %vm488 = vcmp.gt.f32.partialorder %v455, 0.0
      %vm489 = vcmp.gt.f32.partialorder %v456, 0.0
      %vm490 = vcmp.gt.f32.partialorder %v457, 0.0
      %vm491 = vcmp.gt.f32.partialorder %v458, 0.0
      %vm492 = vcmp.gt.f32.partialorder %v459, 0.0
      %vm493 = vcmp.gt.f32.partialorder %v460, 0.0
      %vm494 = vcmp.gt.f32.partialorder %v461, 0.0
      %vm495 = vcmp.gt.f32.partialorder %v462, 0.0
      %vm496 = vcmp.gt.f32.partialorder %v463, 0.0
      %vm497 = vcmp.gt.f32.partialorder %v464, 0.0
      %vm498 = vcmp.gt.f32.partialorder %v465, 0.0
      %vm499 = vcmp.gt.f32.partialorder %v466, 0.0
      %vm500 = vcmp.gt.f32.partialorder %v467, 0.0
      %vm501 = vcmp.gt.f32.partialorder %v468, 0.0
      %vm502 = vcmp.gt.f32.partialorder %v469, 0.0
      %vm503 = vcmp.gt.f32.partialorder %v470, 0.0
      %vm504 = vcmp.gt.f32.partialorder %v471, 0.0
      %v505 = vstv %s472
      %v506 = vmul.f32 %v505, %v440
      %v507 = vmul.f32 %v505, %v441
      %v508 = vmul.f32 %v505, %v442
      %v509 = vmul.f32 %v505, %v443
      %v510 = vmul.f32 %v505, %v444
      %v511 = vmul.f32 %v505, %v445
      %v512 = vmul.f32 %v505, %v446
      %v513 = vmul.f32 %v505, %v447
      %v514 = vmul.f32 %v505, %v448
      %v515 = vmul.f32 %v505, %v449
      %v516 = vmul.f32 %v505, %v450
      %v517 = vmul.f32 %v505, %v451
      %v518 = vmul.f32 %v505, %v452
      %v519 = vmul.f32 %v505, %v453
      %v520 = vmul.f32 %v505, %v454
      %v521 = vmul.f32 %v505, %v455
      %v522 = vmul.f32 %v505, %v456
      %v523 = vmul.f32 %v505, %v457
      %v524 = vmul.f32 %v505, %v458
      %v525 = vmul.f32 %v505, %v459
      %v526 = vmul.f32 %v505, %v460
      %v527 = vmul.f32 %v505, %v461
      %v528 = vmul.f32 %v505, %v462
      %v529 = vmul.f32 %v505, %v463
      %v530 = vmul.f32 %v505, %v464
      %v531 = vmul.f32 %v505, %v465
      %v532 = vmul.f32 %v505, %v466
      %v533 = vmul.f32 %v505, %v467
      %v534 = vmul.f32 %v505, %v468
      %v535 = vmul.f32 %v505, %v469
      %v536 = vmul.f32 %v505, %v470
      %v537 = vmul.f32 %v505, %v471
      %v538 = vsel %vm473, %v440, %v506
      %v539 = vsel %vm474, %v441, %v507
      %v540 = vsel %vm475, %v442, %v508
      %v541 = vsel %vm476, %v443, %v509
      %v542 = vsel %vm477, %v444, %v510
      %v543 = vsel %vm478, %v445, %v511
      %v544 = vsel %vm479, %v446, %v512
      %v545 = vsel %vm480, %v447, %v513
      %v546 = vsel %vm481, %v448, %v514
      %v547 = vsel %vm482, %v449, %v515
      %v548 = vsel %vm483, %v450, %v516
      %v549 = vsel %vm484, %v451, %v517
      %v550 = vsel %vm485, %v452, %v518
      %v551 = vsel %vm486, %v453, %v519
      %v552 = vsel %vm487, %v454, %v520
      %v553 = vsel %vm488, %v455, %v521
      %v554 = vsel %vm489, %v456, %v522
      %v555 = vsel %vm490, %v457, %v523
      %v556 = vsel %vm491, %v458, %v524
      %v557 = vsel %vm492, %v459, %v525
      %v558 = vsel %vm493, %v460, %v526
      %v559 = vsel %vm494, %v461, %v527
      %v560 = vsel %vm495, %v462, %v528
      %v561 = vsel %vm496, %v463, %v529
      %v562 = vsel %vm497, %v464, %v530
      %v563 = vsel %vm498, %v465, %v531
      %v564 = vsel %vm499, %v466, %v532
      %v565 = vsel %vm500, %v467, %v533
      %v566 = vsel %vm501, %v468, %v534
      %v567 = vsel %vm502, %v469, %v535
      %v568 = vsel %vm503, %v470, %v536
      %v569 = vsel %vm504, %v471, %v537
      %v570 = vpack.c.bf16 %v539, %v538
      %v571 = vpack.c.bf16 %v541, %v540
      %v572 = vpack.c.bf16 %v543, %v542
      %v573 = vpack.c.bf16 %v545, %v544
      %v574 = vpack.c.bf16 %v547, %v546
      %v575 = vpack.c.bf16 %v549, %v548
      %v576 = vpack.c.bf16 %v551, %v550
      %v577 = vpack.c.bf16 %v553, %v552
      %v578 = vpack.c.bf16 %v555, %v554
      %v579 = vpack.c.bf16 %v557, %v556
      %v580 = vpack.c.bf16 %v559, %v558
      %v581 = vpack.c.bf16 %v561, %v560
      %v582 = vpack.c.bf16 %v563, %v562
      %v583 = vpack.c.bf16 %v565, %v564
      %v584 = vpack.c.bf16 %v567, %v566
      %v585 = vpack.c.bf16 %v569, %v568
      %v586 = vld [vmem:[%s6] sm:$0xf]
      %v587 = vld [vmem:[%s6 + $0x4] sm:$0xf]
      %v588 = vld [vmem:[%s6 + $0x8] sm:$0xf]
      %v589 = vld [vmem:[%s6 + $0xc] sm:$0xf]
      %v590 = vld [vmem:[%s6 + $0x10] sm:$0xf]
      %v591 = vld [vmem:[%s6 + $0x14] sm:$0xf]
      %v592 = vld [vmem:[%s6 + $0x18] sm:$0xf]
      %v593 = vld [vmem:[%s6 + $0x1c] sm:$0xf]
      %v594 = vld [vmem:[%s6 + $0x20] sm:$0xf]
      %v595 = vld [vmem:[%s6 + $0x24] sm:$0xf]
      %v596 = vld [vmem:[%s6 + $0x28] sm:$0xf]
      %v597 = vld [vmem:[%s6 + $0x2c] sm:$0xf]
      %v598 = vld [vmem:[%s6 + $0x30] sm:$0xf]
      %v599 = vld [vmem:[%s6 + $0x34] sm:$0xf]
      %v600 = vld [vmem:[%s6 + $0x38] sm:$0xf]
      %v601 = vld [vmem:[%s6 + $0x3c] sm:$0xf]
      %v618 = vunpack.c.l.b16 %v586
      %v619 = vunpack.c.l.b16 %v587
      %v620 = vunpack.c.l.b16 %v588
      %v621 = vunpack.c.l.b16 %v589
      %v622 = vunpack.c.l.b16 %v590
      %v623 = vunpack.c.l.b16 %v591
      %v624 = vunpack.c.l.b16 %v592
      %v625 = vunpack.c.l.b16 %v593
      %v626 = vunpack.c.l.b16 %v594
      %v627 = vunpack.c.l.b16 %v595
      %v628 = vunpack.c.l.b16 %v596
      %v629 = vunpack.c.l.b16 %v597
      %v630 = vunpack.c.l.b16 %v598
      %v631 = vunpack.c.l.b16 %v599
      %v632 = vunpack.c.l.b16 %v600
      %v633 = vunpack.c.l.b16 %v601
      %v634 = vpack.c.b16 %v619, %v618
      %v635 = vpack.c.b16 %v621, %v620
      %v636 = vpack.c.b16 %v623, %v622
      %v637 = vpack.c.b16 %v625, %v624
      %v638 = vpack.c.b16 %v627, %v626
      %v639 = vpack.c.b16 %v629, %v628
      %v640 = vpack.c.b16 %v631, %v630
      %v641 = vpack.c.b16 %v633, %v632
      %650 = vmatprep.subr.bf16.mxu0 0
      %651 = vmatpush1.bf16.msra.mxu0 %v634
      %652 = vmatprep.subr.bf16.mxu0 0
      %653 = vmatpush1.bf16.msra.mxu0 %v635
      %654 = vmatprep.subr.bf16.mxu0 0
      %655 = vmatpush1.bf16.msra.mxu0 %v636
      %656 = vmatprep.subr.bf16.mxu0 0
      %657 = vmatpush1.bf16.msra.mxu0 %v637
      %658 = vmatprep.subr.bf16.mxu0 0
      %659 = vmatpush1.bf16.msra.mxu0 %v638
      %660 = vmatprep.subr.bf16.mxu0 0
      %661 = vmatpush1.bf16.msra.mxu0 %v639
      %662 = vmatprep.subr.bf16.mxu0 0
      %663 = vmatpush1.bf16.msra.mxu0 %v640
      %664 = vmatprep.subr.bf16.mxu0 0
      %665 = vmatpush1.bf16.msra.mxu0 %v641
      %666 = vmatprep.subr.bf16.mxu0 0
      %667 = vmatpush1.bf16.msra.mxu0 0
      %668 = vmatprep.subr.bf16.mxu0 0
      %669 = vmatpush1.bf16.msra.mxu0 0
      %670 = vmatprep.subr.bf16.mxu0 0
      %671 = vmatpush1.bf16.msra.mxu0 0
      %672 = vmatprep.subr.bf16.mxu0 0
      %673 = vmatpush1.bf16.msra.mxu0 0
      %674 = vmatprep.subr.bf16.mxu0 0
      %675 = vmatpush1.bf16.msra.mxu0 0
      %676 = vmatprep.subr.bf16.mxu0 0
      %677 = vmatpush1.bf16.msra.mxu0 0
      %678 = vmatprep.subr.bf16.mxu0 0
      %679 = vmatpush1.bf16.msra.mxu0 0
      %680 = vmatprep.subr.bf16.mxu0 0
      %681 = vmatpush1.bf16.msra.mxu0 0
      %682 = vmatprep.mubr.bf16.mxu0 0
      %683 = vmatmul.mubr.bf16.gmra.mrb[0].mxu0 %v570
      %v684 = vpop.f32.mrb[0].mxu0
      %v685 = vadd.f32 0.0, %v684
      %v686 = vpop.f32.mrb[0].mxu0
      %v687 = vpop.f32.mrb[0].mxu0
      %v688 = vadd.f32 0.0, %v687
      %v689 = vpop.f32.mrb[0].mxu0
      %690 = vmatprep.mubr.bf16.mxu0 0
      %691 = vmatmul.mubr.bf16.gmra.mrb[0].mxu0 %v571
      %v692 = vpop.f32.mrb[0].mxu0
      %v693 = vadd.f32 0.0, %v692
      %v694 = vpop.f32.mrb[0].mxu0
      %v695 = vpop.f32.mrb[0].mxu0
      %v696 = vadd.f32 0.0, %v695
      %v697 = vpop.f32.mrb[0].mxu0
      %698 = vmatprep.mubr.bf16.mxu0 0
      %699 = vmatmul.mubr.bf16.gmra.mrb[0].mxu0 %v572
      %v700 = vpop.f32.mrb[0].mxu0
      %v701 = vadd.f32 0.0, %v700
      %v702 = vpop.f32.mrb[0].mxu0
      %v703 = vpop.f32.mrb[0].mxu0
      %v704 = vadd.f32 0.0, %v703
      %v705 = vpop.f32.mrb[0].mxu0
      %706 = vmatprep.mubr.bf16.mxu0 0
      %707 = vmatmul.mubr.bf16.gmra.mrb[0].mxu0 %v573
      %v708 = vpop.f32.mrb[0].mxu0
      %v709 = vadd.f32 0.0, %v708
      %v710 = vpop.f32.mrb[0].mxu0
      %v711 = vpop.f32.mrb[0].mxu0
      %v712 = vadd.f32 0.0, %v711
      %v713 = vpop.f32.mrb[0].mxu0
      %714 = vmatprep.mubr.bf16.mxu0 0
      %715 = vmatmul.mubr.bf16.gmra.mrb[0].mxu0 %v574
      %v716 = vpop.f32.mrb[0].mxu0
      %v717 = vadd.f32 0.0, %v716
      %v718 = vpop.f32.mrb[0].mxu0
      %v719 = vpop.f32.mrb[0].mxu0
      %v720 = vadd.f32 0.0, %v719
      %v721 = vpop.f32.mrb[0].mxu0
      %722 = vmatprep.mubr.bf16.mxu0 0
      %723 = vmatmul.mubr.bf16.gmra.mrb[0].mxu0 %v575
      %v724 = vpop.f32.mrb[0].mxu0
      %v725 = vadd.f32 0.0, %v724
      %v726 = vpop.f32.mrb[0].mxu0
      %v727 = vpop.f32.mrb[0].mxu0
      %v728 = vadd.f32 0.0, %v727
      %v729 = vpop.f32.mrb[0].mxu0
      %730 = vmatprep.mubr.bf16.mxu0 0
      %731 = vmatmul.mubr.bf16.gmra.mrb[0].mxu0 %v576
      %v732 = vpop.f32.mrb[0].mxu0
      %v733 = vadd.f32 0.0, %v732
      %v734 = vpop.f32.mrb[0].mxu0
      %v735 = vpop.f32.mrb[0].mxu0
      %v736 = vadd.f32 0.0, %v735
      %v737 = vpop.f32.mrb[0].mxu0
      %738 = vmatprep.mubr.bf16.mxu0 0
      %739 = vmatmul.mubr.bf16.gmra.mrb[0].mxu0 %v577
      %v740 = vpop.f32.mrb[0].mxu0
      %v741 = vadd.f32 0.0, %v740
      %v742 = vpop.f32.mrb[0].mxu0
      %v743 = vpop.f32.mrb[0].mxu0
      %v744 = vadd.f32 0.0, %v743
      %v745 = vpop.f32.mrb[0].mxu0
      %746 = vmatprep.mubr.bf16.mxu0 0
      %747 = vmatmul.mubr.bf16.gmra.mrb[0].mxu0 %v578
      %v748 = vpop.f32.mrb[0].mxu0
      %v749 = vadd.f32 0.0, %v748
      %v750 = vpop.f32.mrb[0].mxu0
      %v751 = vpop.f32.mrb[0].mxu0
      %v752 = vadd.f32 0.0, %v751
      %v753 = vpop.f32.mrb[0].mxu0
      %754 = vmatprep.mubr.bf16.mxu0 0
      %755 = vmatmul.mubr.bf16.gmra.mrb[0].mxu0 %v579
      %v756 = vpop.f32.mrb[0].mxu0
      %v757 = vadd.f32 0.0, %v756
      %v758 = vpop.f32.mrb[0].mxu0
      %v759 = vpop.f32.mrb[0].mxu0
      %v760 = vadd.f32 0.0, %v759
      %v761 = vpop.f32.mrb[0].mxu0
      %762 = vmatprep.mubr.bf16.mxu0 0
      %763 = vmatmul.mubr.bf16.gmra.mrb[0].mxu0 %v580
      %v764 = vpop.f32.mrb[0].mxu0
      %v765 = vadd.f32 0.0, %v764
      %v766 = vpop.f32.mrb[0].mxu0
      %v767 = vpop.f32.mrb[0].mxu0
      %v768 = vadd.f32 0.0, %v767
      %v769 = vpop.f32.mrb[0].mxu0
      %770 = vmatprep.mubr.bf16.mxu0 0
      %771 = vmatmul.mubr.bf16.gmra.mrb[0].mxu0 %v581
      %v772 = vpop.f32.mrb[0].mxu0
      %v773 = vadd.f32 0.0, %v772
      %v774 = vpop.f32.mrb[0].mxu0
      %v775 = vpop.f32.mrb[0].mxu0
      %v776 = vadd.f32 0.0, %v775
      %v777 = vpop.f32.mrb[0].mxu0
      %778 = vmatprep.mubr.bf16.mxu0 0
      %779 = vmatmul.mubr.bf16.gmra.mrb[0].mxu0 %v582
      %v780 = vpop.f32.mrb[0].mxu0
      %v781 = vadd.f32 0.0, %v780
      %v782 = vpop.f32.mrb[0].mxu0
      %v783 = vpop.f32.mrb[0].mxu0
      %v784 = vadd.f32 0.0, %v783
      %v785 = vpop.f32.mrb[0].mxu0
      %786 = vmatprep.mubr.bf16.mxu0 0
      %787 = vmatmul.mubr.bf16.gmra.mrb[0].mxu0 %v583
      %v788 = vpop.f32.mrb[0].mxu0
      %v789 = vadd.f32 0.0, %v788
      %v790 = vpop.f32.mrb[0].mxu0
      %v791 = vpop.f32.mrb[0].mxu0
      %v792 = vadd.f32 0.0, %v791
      %v793 = vpop.f32.mrb[0].mxu0
      %794 = vmatprep.mubr.bf16.mxu0 0
      %795 = vmatmul.mubr.bf16.gmra.mrb[0].mxu0 %v584
      %v796 = vpop.f32.mrb[0].mxu0
      %v797 = vadd.f32 0.0, %v796
      %v798 = vpop.f32.mrb[0].mxu0
      %v799 = vpop.f32.mrb[0].mxu0
      %v800 = vadd.f32 0.0, %v799
      %v801 = vpop.f32.mrb[0].mxu0
      %802 = vmatprep.mubr.bf16.mxu0 0
      %803 = vmatmul.mubr.bf16.gmra.mrb[0].mxu0 %v585
      %v804 = vpop.f32.mrb[0].mxu0
      %v805 = vadd.f32 0.0, %v804
      %v806 = vpop.f32.mrb[0].mxu0
      %v807 = vpop.f32.mrb[0].mxu0
      %v808 = vadd.f32 0.0, %v807
      %v809 = vpop.f32.mrb[0].mxu0
      %810 = vdwg.mxu0
      %v811 = vpack.c.bf16 %v688, %v685
      %v812 = vpack.c.bf16 %v696, %v693
      %v813 = vpack.c.bf16 %v704, %v701
      %v814 = vpack.c.bf16 %v712, %v709
      %v815 = vpack.c.bf16 %v720, %v717
      %v816 = vpack.c.bf16 %v728, %v725
      %v817 = vpack.c.bf16 %v736, %v733
      %v818 = vpack.c.bf16 %v744, %v741
      %v819 = vpack.c.bf16 %v752, %v749
      %v820 = vpack.c.bf16 %v760, %v757
      %v821 = vpack.c.bf16 %v768, %v765
      %v822 = vpack.c.bf16 %v776, %v773
      %v823 = vpack.c.bf16 %v784, %v781
      %v824 = vpack.c.bf16 %v792, %v789
      %v825 = vpack.c.bf16 %v800, %v797
      %v826 = vpack.c.bf16 %v808, %v805
      %v843 = vunpack.c.l.b16 %v811
      %v844 = vunpack.c.h.b16 %v811
      %v845 = vunpack.c.l.b16 %v812
      %v846 = vunpack.c.h.b16 %v812
      %v847 = vunpack.c.l.b16 %v813
      %v848 = vunpack.c.h.b16 %v813
      %v849 = vunpack.c.l.b16 %v814
      %v850 = vunpack.c.h.b16 %v814
      %v851 = vunpack.c.l.b16 %v815
      %v852 = vunpack.c.h.b16 %v815
      %v853 = vunpack.c.l.b16 %v816
      %v854 = vunpack.c.h.b16 %v816
      %v855 = vunpack.c.l.b16 %v817
      %v856 = vunpack.c.h.b16 %v817
      %v857 = vunpack.c.l.b16 %v818
      %v858 = vunpack.c.h.b16 %v818
      %v859 = vunpack.c.l.b16 %v819
      %v860 = vunpack.c.h.b16 %v819
      %v861 = vunpack.c.l.b16 %v820
      %v862 = vunpack.c.h.b16 %v820
      %v863 = vunpack.c.l.b16 %v821
      %v864 = vunpack.c.h.b16 %v821
      %v865 = vunpack.c.l.b16 %v822
      %v866 = vunpack.c.h.b16 %v822
      %v867 = vunpack.c.l.b16 %v823
      %v868 = vunpack.c.h.b16 %v823
      %v869 = vunpack.c.l.b16 %v824
      %v870 = vunpack.c.h.b16 %v824
      %v871 = vunpack.c.l.b16 %v825
      %v872 = vunpack.c.h.b16 %v825
      %v873 = vunpack.c.l.b16 %v826
      %v874 = vunpack.c.h.b16 %v826
      %v875 = vpack.c.b16 %v843, %v843
      %v876 = vpack.c.b16 %v844, %v844
      %v877 = vpack.c.b16 %v845, %v845
      %v878 = vpack.c.b16 %v846, %v846
      %v879 = vpack.c.b16 %v847, %v847
      %v880 = vpack.c.b16 %v848, %v848
      %v881 = vpack.c.b16 %v849, %v849
      %v882 = vpack.c.b16 %v850, %v850
      %v883 = vpack.c.b16 %v851, %v851
      %v884 = vpack.c.b16 %v852, %v852
      %v885 = vpack.c.b16 %v853, %v853
      %v886 = vpack.c.b16 %v854, %v854
      %v887 = vpack.c.b16 %v855, %v855
      %v888 = vpack.c.b16 %v856, %v856
      %v889 = vpack.c.b16 %v857, %v857
      %v890 = vpack.c.b16 %v858, %v858
      %v891 = vpack.c.b16 %v859, %v859
      %v892 = vpack.c.b16 %v860, %v860
      %v893 = vpack.c.b16 %v861, %v861
      %v894 = vpack.c.b16 %v862, %v862
      %v895 = vpack.c.b16 %v863, %v863
      %v896 = vpack.c.b16 %v864, %v864
      %v897 = vpack.c.b16 %v865, %v865
      %v898 = vpack.c.b16 %v866, %v866
      %v899 = vpack.c.b16 %v867, %v867
      %v900 = vpack.c.b16 %v868, %v868
      %v901 = vpack.c.b16 %v869, %v869
      %v902 = vpack.c.b16 %v870, %v870
      %v903 = vpack.c.b16 %v871, %v871
      %v904 = vpack.c.b16 %v872, %v872
      %v905 = vpack.c.b16 %v873, %v873
      %v906 = vpack.c.b16 %v874, %v874
      %939 = vst [vmem:[%s281] sm:$0xf] %v875
      %940 = vst [vmem:[%s281 + $0x4] sm:$0xf] %v876
      %941 = vst [vmem:[%s281 + $0x8] sm:$0xf] %v877
      %942 = vst [vmem:[%s281 + $0xc] sm:$0xf] %v878
      %943 = vst [vmem:[%s281 + $0x10] sm:$0xf] %v879
      %944 = vst [vmem:[%s281 + $0x14] sm:$0xf] %v880
      %945 = vst [vmem:[%s281 + $0x18] sm:$0xf] %v881
      %946 = vst [vmem:[%s281 + $0x1c] sm:$0xf] %v882
      %947 = vst [vmem:[%s281 + $0x20] sm:$0xf] %v883
      %948 = vst [vmem:[%s281 + $0x24] sm:$0xf] %v884
      %949 = vst [vmem:[%s281 + $0x28] sm:$0xf] %v885
      %950 = vst [vmem:[%s281 + $0x2c] sm:$0xf] %v886
      %951 = vst [vmem:[%s281 + $0x30] sm:$0xf] %v887
      %952 = vst [vmem:[%s281 + $0x34] sm:$0xf] %v888
      %953 = vst [vmem:[%s281 + $0x38] sm:$0xf] %v889
      %954 = vst [vmem:[%s281 + $0x3c] sm:$0xf] %v890
      %955 = vst [vmem:[%s281 + $0x40] sm:$0xf] %v891
      %956 = vst [vmem:[%s281 + $0x44] sm:$0xf] %v892
      %957 = vst [vmem:[%s281 + $0x48] sm:$0xf] %v893
      %958 = vst [vmem:[%s281 + $0x4c] sm:$0xf] %v894
      %959 = vst [vmem:[%s281 + $0x50] sm:$0xf] %v895
      %960 = vst [vmem:[%s281 + $0x54] sm:$0xf] %v896
      %961 = vst [vmem:[%s281 + $0x58] sm:$0xf] %v897
      %962 = vst [vmem:[%s281 + $0x5c] sm:$0xf] %v898
      %963 = vst [vmem:[%s281 + $0x60] sm:$0xf] %v899
      %964 = vst [vmem:[%s281 + $0x64] sm:$0xf] %v900
      %965 = vst [vmem:[%s281 + $0x68] sm:$0xf] %v901
      %966 = vst [vmem:[%s281 + $0x6c] sm:$0xf] %v902
      %967 = vst [vmem:[%s281 + $0x70] sm:$0xf] %v903
      %968 = vst [vmem:[%s281 + $0x74] sm:$0xf] %v904
      %969 = vst [vmem:[%s281 + $0x78] sm:$0xf] %v905
      %970 = vst [vmem:[%s281 + $0x7c] sm:$0xf] %v906
      %s971 = smul.u32 32, %s19
      %p972 = scmp.lt.s32.totalorder %s971, 63
      %s973 = scalar_select %p972, %s971, 63
      %s974 = smul.addr %s973, 4
      %s975 = scalar_lea.vmem %s7, %s974
      // Predicated region
      $region49: #{_gconv_forward.6} parent=47 // pred_check
        %p976 = pneg %p189
      $region50: #{_gconv_forward.6} parent=47 // pred_check_branch
        %978 = sbr.rel (%p976) target = $region52
      $region51: #{_gconv_forward.6} parent=47 // pred_region
        %s979 = smul.u32 32, %s19
      $region52: #{_gconv_forward.6} parent=47 // pred_fallthru
        _
    $region48: #{_gconv_forward.6} parent=5 // pred_fallthru
      _
    %p980 = scmp.le.s32.totalorder 2, %s14
    // Predicated region
    $region53: #{_gconv_forward.6} parent=5 // pred_check
      %p981 = pneg %p980
    $region54: #{_gconv_forward.6} parent=5 // pred_check_branch
      %983 = sbr.rel (%p981) target = $region56
    $region55: #{_gconv_forward.6} parent=5 // pred_region
      %s984 = ssub.s32 %s14, 2
      // Predicated region
      $region57: #{_gconv_forward.6} parent=55 // pred_check
        %p985 = pneg %p195
      $region58: #{_gconv_forward.6} parent=55 // pred_check_branch
        %987 = sbr.rel (%p985) target = $region60
      $region59: #{_gconv_forward.6} parent=55 // pred_region
        %s988 = smul.u32 32, %s20
        %p989 = scmp.lt.s32.totalorder %s988, 63
        %s990 = scalar_select %p989, %s988, 63
        %s991 = smul.addr %s990, 4
        %s992 = scalar_lea.vmem %s7, %s991
      $region60: #{_gconv_forward.6} parent=55 // pred_fallthru
        _
    $region56: #{_gconv_forward.6} parent=5 // pred_fallthru
      _
  $region6: #{_gconv_forward.6} parent=0 // loop_footer
    %s18 = sadd.s32 1, %s14
  $region7: #{_gconv_forward.6} parent=0 // loop_footer_branch
    %13 = sbr.rel target = $region3
  $region8: #{_gconv_forward.6} parent=0 // loop_exit
    _

</llo_original>
